<compile_context>
chip_gen: v7x
topology: tpu7x:2x2x1
jax: 0.10.0
libtpu: 0.0.40
codegen_flags: <defaults>
</compile_context>

<pallas_src>
import numpy as np
import jax
import jax.numpy as jnp
from jax.experimental import pallas as pl
from jax.experimental.pallas import tpu as pltpu


def _round_up(x, m):
    return (x + m - 1) // m * m


class _SlabPacker:
    """Packs many small 2-D tensors into one (rows, 128) slab with aligned rows."""

    def __init__(self, align):
        self.align = align
        self._items = []
        self.offsets = {}
        self._rows = 0

    def add(self, name, arr):
        arr = np.asarray(arr, dtype=np.float32)
        if arr.ndim == 1:
            arr = arr.reshape(1, -1)
        r, c = arr.shape
        assert c <= 128, name
        self.offsets[name] = (self._rows, r, c)
        self._items.append((self._rows, arr))
        self._rows = _round_up(self._rows + r, self.align)

    def finalize(self, dtype, lanes=128):
        total = max(_round_up(self._rows, 8), 8)
        slab = np.zeros((total, lanes), np.float32)
        for off, arr in self._items:
            r, c = arr.shape
            slab[off:off + r, :c] = arr
        return jnp.asarray(slab).astype(dtype), dict(self.offsets)


def _edge_masks(bh, bw):
    """(HW, 9) validity mask of the 9 conv taps under zero padding (tap = 3*kh+kw)."""
    idx = np.arange(bh * bw)
    i = idx // bw
    j = idx % bw
    cols = []
    for dh in (-1, 0, 1):
        for dw in (-1, 0, 1):
            ok = (i + dh >= 0) & (i + dh < bh) & (j + dw >= 0) & (j + dw < bw)
            cols.append(ok.astype(np.float32))
    return jnp.asarray(np.stack(cols, axis=1)).astype(jnp.bfloat16)


# ------------------------------ fused kernel ------------------------------- #

def _make_kernel(*, hw, width, policy_size, num_blocks, woff, foff):
    pad = _round_up(width + 1, 8)          # sublane-aligned zero-pad region
    deltas = tuple(dh * width + dw for dh in (-1, 0, 1) for dw in (-1, 0, 1))
    out_lanes = 128

    def kernel(x_ref, mask_ref, wslab_ref, fslab_ref, out_ref):
        masks = mask_ref[...]                                   # (HW, 9) bf16

        def wsl(name):
            off, r, c = woff[name]
            return wslab_ref[off:off + r, :c]                   # static slice (bf16)

        def fsl(name):
            off, r, c = foff[name]
            return fslab_ref[off:off + r, :c]                   # static slice (f32)

        def conv3x3(h, wname, sname, bname):
            # h: (HW, C) f32.  im2col via zero-padded row shifts -> one K=9C MXU dot.
            hb = h.astype(jnp.bfloat16)                         # cast BEFORE the shifts
            zp = jnp.zeros((pad, hb.shape[1]), jnp.bfloat16)
            hp = jnp.concatenate([zp, hb, zp], axis=0)
            taps = []
            for t, d in enumerate(deltas):
                sl = hp[pad + d: pad + d + hw]                  # row-shifted view
                if d != 0:
                    sl = sl * masks[:, t:t + 1]                 # zero out-of-board taps
                taps.append(sl)
            patches = jnp.concatenate(taps, axis=1)             # (HW, 9C) bf16
            acc = jnp.dot(patches, wsl(wname),
                          preferred_element_type=jnp.float32)
            return acc * fsl(sname) + fsl(bname)                # folded BatchNorm (f32)

        # ---- init conv + bn + relu -------------------------------------------
        x = x_ref[0]                                            # (HW, Cin) f32
        h = jnp.maximum(conv3x3(x, "w_init", "s_init", "b_init"), 0.0)

        # ---- residual tower (statically unrolled) ----------------------------
        for k in range(num_blocks):
            t = jnp.maximum(conv3x3(h, f"w1_{k}", f"s1_{k}", f"b1_{k}"), 0.0)
            t = conv3x3(t, f"w2_{k}", f"s2_{k}", f"b2_{k}")
            # Dropout(0.1) is identity in eval mode.
            h = jnp.maximum(t + h, 0.0)

        # ---- merged policy/value 1x1 conv + folded BN(+conv bias) + relu ------
        y = jnp.dot(h.astype(jnp.bfloat16), wsl("w_pv"),
                    preferred_element_type=jnp.float32)         # (HW, 3)
        y = jnp.maximum(y * fsl("s_pv") + fsl("b_pv"), 0.0)

        # ---- policy head: NCHW channel-major flatten folded into per-ch FC ----
        g = y[:, 0:1] * fsl("wfc_p0") + y[:, 1:2] * fsl("wfc_p1")      # (HW, P) f32
        logits = jnp.sum(g, axis=0, keepdims=True) + fsl("bfc_p")      # (1, P)

        # ---- value head: fc1 + relu (+ eval dropout) + fc2 + tanh --------------
        g1 = y[:, 2:3] * fsl("w1v")                                     # (HW, 128)
        h1 = jnp.maximum(jnp.sum(g1, axis=0, keepdims=True) + fsl("b1v"), 0.0)
        v = jnp.tanh(jnp.sum(h1 * fsl("w2vT"), axis=1, keepdims=True) + fsl("b2v"))

        # ---- lane-dense packed output: lanes [0,P)=logits, lane 127=value -----
        row = jnp.concatenate(
            [logits, jnp.zeros((1, out_lanes - policy_size - 1), jnp.float32), v],
            axis=1)
        out_ref[0] = row

    return kernel


# --------------------------------- params ---------------------------------- #

def init_params(key, *, in_ch=2, filters=32, num_res_blocks=2,
                board=(5, 5), policy_size=25, eps=1e-5):
    ks = iter(jax.random.split(key, 256))
    bh, bw = board
    hw = bh * bw

    def conv_w(taps, cin, cout):
        # rows ordered [tap, cin] to match the in-kernel patch columns
        w = 0.1 * jax.random.normal(next(ks), (taps, cin, cout), jnp.float32)
        return w.reshape(taps * cin, cout)

    def bn_folded(c, conv_bias=None):
        gamma = 1.0 + 0.1 * jax.random.normal(next(ks), (c,))
        beta = 0.1 * jax.random.normal(next(ks), (c,))
        mean = 0.1 * jax.random.normal(next(ks), (c,))
        var = 1.0 + 0.1 * jax.random.uniform(next(ks), (c,))
        scale = gamma / jnp.sqrt(var + eps)
        bias = beta - mean * scale
        if conv_bias is not None:
            bias = bias + conv_bias * scale           # fold conv bias through BN
        return scale.reshape(1, c), bias.reshape(1, c)

    p = {"config": dict(in_ch=in_ch, filters=filters, board=board,
                        policy_size=policy_size)}
    p["w_init"] = conv_w(9, in_ch, filters)
    p["s_init"], p["b_init"] = bn_folded(filters)

    p["blocks"] = []
    for _ in range(num_res_blocks):
        blk = {"w1": conv_w(9, filters, filters)}
        blk["s1"], blk["b1"] = bn_folded(filters)
        blk["w2"] = conv_w(9, filters, filters)
        blk["s2"], blk["b2"] = bn_folded(filters)
        p["blocks"].append(blk)

    # policy_conv (1x1, Cout=2, bias) and value_conv (1x1, Cout=1, bias) merged into
    # a single (F, 3) matmul; the conv biases are folded into the folded-BN bias.
    wp = 0.1 * jax.random.normal(next(ks), (filters, 2))
    pb = 0.1 * jax.random.normal(next(ks), (2,))
    wv = 0.1 * jax.random.normal(next(ks), (filters, 1))
    vb = 0.1 * jax.random.normal(next(ks), (1,))
    sp, bp = bn_folded(2, conv_bias=pb)
    sv, bv = bn_folded(1, conv_bias=vb)
    p["w_pv"] = jnp.concatenate([wp, wv], axis=1)       # (F, 3)
    p["s_pv"] = jnp.concatenate([sp, sv], axis=1)       # (1, 3)
    p["b_pv"] = jnp.concatenate([bp, bv], axis=1)       # (1, 3)

    # policy_fc consumes torch's NCHW flatten: rows [0,HW)=channel 0, [HW,2HW)=ch 1.
    wfc = 0.1 * jax.random.normal(next(ks), (2 * hw, policy_size))
    p["wfc_p0"], p["wfc_p1"] = wfc[:hw], wfc[hw:]
    p["bfc_p"] = 0.1 * jax.random.normal(next(ks), (1, policy_size))

    p["w1v"] = 0.1 * jax.random.normal(next(ks), (hw, 128))
    p["b1v"] = 0.1 * jax.random.normal(next(ks), (1, 128))
    p["w2vT"] = 0.1 * jax.random.normal(next(ks), (1, 128))   # value_fc2 weight (transposed)
    p["b2v"] = 0.1 * jax.random.normal(next(ks), (1, 1))
    return p


# -------------------------------- builder ----------------------------------- #

def build_alphazero_forward(params):
    cfg = params["config"]
    in_ch, policy_size = cfg["in_ch"], cfg["policy_size"]
    bh, bw = cfg["board"]
    hw = bh * bw
    num_blocks = len(params["blocks"])
    assert policy_size <= 126

    # bf16 matmul-weight slab (16-row aligned sections; bf16 packs 16 sublanes/vreg).
    wpk = _SlabPacker(align=16)
    wpk.add("w_init", params["w_init"])
    for k, blk in enumerate(params["blocks"]):
        wpk.add(f"w1_{k}", blk["w1"])
        wpk.add(f"w2_{k}", blk["w2"])
    wpk.add("w_pv", params["w_pv"])
    wslab, woff = wpk.finalize(jnp.bfloat16)

    # f32 scale/bias + FC-head slab (8-row aligned sections).
    fpk = _SlabPacker(align=8)
    fpk.add("s_init", params["s_init"])
    fpk.add("b_init", params["b_init"])
    for k, blk in enumerate(params["blocks"]):
        for nm in ("s1", "b1", "s2", "b2"):
            fpk.add(f"{nm}_{k}", blk[nm])
    for nm in ("s_pv", "b_pv", "bfc_p", "b1v", "b2v",
               "wfc_p0", "wfc_p1", "w1v", "w2vT"):
        fpk.add(nm, params[nm])
    fslab, foff = fpk.finalize(jnp.float32)

    masks = _edge_masks(bh, bw)                 # (HW, 9) bf16, built once

    kernel = _make_kernel(hw=hw, width=bw, policy_size=policy_size,
                          num_blocks=num_blocks, woff=woff, foff=foff)

    def forward(x_nchw, wslab, fslab, masks):
        n = x_nchw.shape[0]
        # only input-layout glue on the host: NCHW -> (N, HW, Cin)
        x3 = jnp.transpose(x_nchw, (0, 2, 3, 1)).reshape(n, hw, in_ch)
        x3 = x3.astype(jnp.float32)

        out = pl.pallas_call(
            kernel,
            out_shape=jax.ShapeDtypeStruct((n, 1, 128), jnp.float32),
            grid_spec=pltpu.PrefetchScalarGridSpec(
                num_scalar_prefetch=0,
                grid=(n,),                                       # one board per step
                in_specs=[
                    pl.BlockSpec((1, hw, in_ch), lambda b: (b, 0, 0)),
                    pl.BlockSpec(masks.shape, lambda b: (0, 0)),  # broadcast to steps
                    pl.BlockSpec(wslab.shape, lambda b: (0, 0)),  # broadcast to steps
                    pl.BlockSpec(fslab.shape, lambda b: (0, 0)),  # broadcast to steps
                ],
                out_specs=pl.BlockSpec((1, 1, 128), lambda b: (b, 0, 0)),
            ),
            compiler_params=pltpu.CompilerParams(
                dimension_semantics=("parallel",),   # shard batch across v7x TCs
                vmem_limit_bytes=32 * 1024 * 1024,
            ),
        )(x3, masks, wslab, fslab)

        out = out.reshape(n, 128)
        return out[:, :policy_size], out[:, 127:128]

    return forward, (wslab, fslab, masks)


# ------------------------------ f32 reference ------------------------------- #

def reference_forward(x_nchw, params):
    cfg = params["config"]
    in_ch, filters = cfg["in_ch"], cfg["filters"]
    bh, bw = cfg["board"]
    hw = bh * bw
    n = x_nchw.shape[0]

    def conv3(x, w9, cin, cout):
        w = w9.reshape(3, 3, cin, cout)                          # HWIO
        return jax.lax.conv_general_dilated(
            x, w, window_strides=(1, 1), padding="SAME",
            dimension_numbers=("NCHW", "HWIO", "NCHW"))

    def bn(x, s, b):
        c = s.shape[1]
        return x * s.reshape(1, c, 1, 1) + b.reshape(1, c, 1, 1)

    h = jax.nn.relu(bn(conv3(x_nchw, params["w_init"], in_ch, filters),
                       params["s_init"], params["b_init"]))
    for blk in params["blocks"]:
        t = jax.nn.relu(bn(conv3(h, blk["w1"], filters, filters), blk["s1"], blk["b1"]))
        t = bn(conv3(t, blk["w2"], filters, filters), blk["s2"], blk["b2"])
        h = jax.nn.relu(t + h)

    pv = jnp.einsum("nchw,cd->ndhw", h, params["w_pv"])
    pv = jax.nn.relu(bn(pv, params["s_pv"], params["b_pv"]))

    p = pv[:, 0:2].reshape(n, 2 * hw)
    wfc = jnp.concatenate([params["wfc_p0"], params["wfc_p1"]], axis=0)
    logits = p @ wfc + params["bfc_p"]

    v = pv[:, 2:3].reshape(n, hw)
    v = jax.nn.relu(v @ params["w1v"] + params["b1v"])
    v = jnp.tanh(v @ params["w2vT"].T + params["b2v"])
    return logits, v


if __name__ == "__main__":
    key = jax.random.PRNGKey(0)
    kx, kp = jax.random.split(key)
    # Small config consistent with the module: 5x5 board, 2 input planes,
    # 32 filters, 2 residual blocks, 25 policy outputs, batch 2.
    params = init_params(kp, in_ch=2, filters=32, num_res_blocks=2,
                         board=(5, 5), policy_size=25)
    x = jax.random.normal(kx, (2, 2, 5, 5), jnp.float32)     # NCHW like PyTorch

    forward, consts = build_alphazero_forward(params)
    fwd = jax.jit(forward)
    logits, value = fwd(x, *consts)
    jax.block_until_ready((logits, value))
    assert logits.shape == (2, 25) and value.shape == (2, 1)

    # Pure-JAX f32 reference (same folded-BN params; dropout = identity in eval).
    ref_logits, ref_value = reference_forward(x, params)
    np.testing.assert_allclose(np.asarray(logits), np.asarray(ref_logits),
                               atol=0.1, rtol=0.1)
    np.testing.assert_allclose(np.asarray(value), np.asarray(ref_value),
                               atol=0.1, rtol=0.1)
    print("KERNEL_OK")
</pallas_src>

<mosaic_0001>
module attributes {stable_mosaic.version = 11 : i64} {
  func.func @kernel(%arg0: i32, %arg1: memref<1x25x2xf32, #tpu.memory_space<vmem>>, %arg2: memref<25x9xbf16, #tpu.memory_space<vmem>>, %arg3: memref<1216x128xbf16, #tpu.memory_space<vmem>>, %arg4: memref<224x128xf32, #tpu.memory_space<vmem>>, %arg5: memref<1x1x128xf32, #tpu.memory_space<vmem>>) attributes {dimension_semantics = [#tpu.dimension_semantics<parallel>], iteration_bounds = array<i64: 2>, scalar_prefetch = 0 : i64, scratch_operands = 0 : i64, tpu.core_type = #tpu.core_type<tc>, window_params = [{transform_indices = @transform_0, window_bounds = array<i64: 1, 25, 2>}, {pipeline_mode = #tpu.pipeline_mode<synchronous>, transform_indices = @transform_1, window_bounds = array<i64: 25, 9>}, {pipeline_mode = #tpu.pipeline_mode<synchronous>, transform_indices = @transform_2, window_bounds = array<i64: 1216, 128>}, {pipeline_mode = #tpu.pipeline_mode<synchronous>, transform_indices = @transform_3, window_bounds = array<i64: 224, 128>}, {transform_indices = @transform_4, window_bounds = array<i64: 1, 1, 128>}]} {
    %c0 = arith.constant 0 : index
    %c0_0 = arith.constant 0 : index
    %0 = vector.load %arg2[%c0, %c0_0] : memref<25x9xbf16, #tpu.memory_space<vmem>>, vector<25x9xbf16>
    %c0_1 = arith.constant 0 : index
    %c0_2 = arith.constant 0 : index
    %c0_3 = arith.constant 0 : index
    %1 = vector.load %arg1[%c0_1, %c0_2, %c0_3] : memref<1x25x2xf32, #tpu.memory_space<vmem>>, vector<1x25x2xf32>
    %2 = vector.shape_cast %1 : vector<1x25x2xf32> to vector<25x2xf32>
    %3 = arith.truncf %2 : vector<25x2xf32> to vector<25x2xbf16>
    %cst = arith.constant 0.000000e+00 : bf16
    %4 = vector.broadcast %cst : bf16 to vector<8x2xbf16>
    %5 = tpu.concatenate %4, %3, %4 in 0 : vector<8x2xbf16>, vector<25x2xbf16>, vector<8x2xbf16> -> vector<41x2xbf16>
    %6 = vector.extract_strided_slice %5 {offsets = [2, 0], sizes = [25, 2], strides = [1, 1]} : vector<41x2xbf16> to vector<25x2xbf16>
    %7 = vector.extract_strided_slice %0 {offsets = [0, 0], sizes = [25, 1], strides = [1, 1]} : vector<25x9xbf16> to vector<25x1xbf16>
    %8 = vector.broadcast %7 : vector<25x1xbf16> to vector<25x2xbf16>
    %9 = arith.mulf %6, %8 : vector<25x2xbf16>
    %10 = vector.extract_strided_slice %5 {offsets = [3, 0], sizes = [25, 2], strides = [1, 1]} : vector<41x2xbf16> to vector<25x2xbf16>
    %11 = vector.extract_strided_slice %0 {offsets = [0, 1], sizes = [25, 1], strides = [1, 1]} : vector<25x9xbf16> to vector<25x1xbf16>
    %12 = vector.broadcast %11 : vector<25x1xbf16> to vector<25x2xbf16>
    %13 = arith.mulf %10, %12 : vector<25x2xbf16>
    %14 = vector.extract_strided_slice %5 {offsets = [4, 0], sizes = [25, 2], strides = [1, 1]} : vector<41x2xbf16> to vector<25x2xbf16>
    %15 = vector.extract_strided_slice %0 {offsets = [0, 2], sizes = [25, 1], strides = [1, 1]} : vector<25x9xbf16> to vector<25x1xbf16>
    %16 = vector.broadcast %15 : vector<25x1xbf16> to vector<25x2xbf16>
    %17 = arith.mulf %14, %16 : vector<25x2xbf16>
    %18 = vector.extract_strided_slice %5 {offsets = [7, 0], sizes = [25, 2], strides = [1, 1]} : vector<41x2xbf16> to vector<25x2xbf16>
    %19 = vector.extract_strided_slice %0 {offsets = [0, 3], sizes = [25, 1], strides = [1, 1]} : vector<25x9xbf16> to vector<25x1xbf16>
    %20 = vector.broadcast %19 : vector<25x1xbf16> to vector<25x2xbf16>
    %21 = arith.mulf %18, %20 : vector<25x2xbf16>
    %22 = vector.extract_strided_slice %5 {offsets = [8, 0], sizes = [25, 2], strides = [1, 1]} : vector<41x2xbf16> to vector<25x2xbf16>
    %23 = vector.extract_strided_slice %5 {offsets = [9, 0], sizes = [25, 2], strides = [1, 1]} : vector<41x2xbf16> to vector<25x2xbf16>
    %24 = vector.extract_strided_slice %0 {offsets = [0, 5], sizes = [25, 1], strides = [1, 1]} : vector<25x9xbf16> to vector<25x1xbf16>
    %25 = vector.broadcast %24 : vector<25x1xbf16> to vector<25x2xbf16>
    %26 = arith.mulf %23, %25 : vector<25x2xbf16>
    %27 = vector.extract_strided_slice %5 {offsets = [12, 0], sizes = [25, 2], strides = [1, 1]} : vector<41x2xbf16> to vector<25x2xbf16>
    %28 = vector.extract_strided_slice %0 {offsets = [0, 6], sizes = [25, 1], strides = [1, 1]} : vector<25x9xbf16> to vector<25x1xbf16>
    %29 = vector.broadcast %28 : vector<25x1xbf16> to vector<25x2xbf16>
    %30 = arith.mulf %27, %29 : vector<25x2xbf16>
    %31 = vector.extract_strided_slice %5 {offsets = [13, 0], sizes = [25, 2], strides = [1, 1]} : vector<41x2xbf16> to vector<25x2xbf16>
    %32 = vector.extract_strided_slice %0 {offsets = [0, 7], sizes = [25, 1], strides = [1, 1]} : vector<25x9xbf16> to vector<25x1xbf16>
    %33 = vector.broadcast %32 : vector<25x1xbf16> to vector<25x2xbf16>
    %34 = arith.mulf %31, %33 : vector<25x2xbf16>
    %35 = vector.extract_strided_slice %5 {offsets = [14, 0], sizes = [25, 2], strides = [1, 1]} : vector<41x2xbf16> to vector<25x2xbf16>
    %36 = vector.extract_strided_slice %0 {offsets = [0, 8], sizes = [25, 1], strides = [1, 1]} : vector<25x9xbf16> to vector<25x1xbf16>
    %37 = vector.broadcast %36 : vector<25x1xbf16> to vector<25x2xbf16>
    %38 = arith.mulf %35, %37 : vector<25x2xbf16>
    %39 = tpu.concatenate %9, %13, %17, %21, %22, %26, %30, %34, %38 in 1 : vector<25x2xbf16>, vector<25x2xbf16>, vector<25x2xbf16>, vector<25x2xbf16>, vector<25x2xbf16>, vector<25x2xbf16>, vector<25x2xbf16>, vector<25x2xbf16>, vector<25x2xbf16> -> vector<25x18xbf16>
    %c0_4 = arith.constant 0 : index
    %c0_5 = arith.constant 0 : index
    %40 = vector.load %arg3[%c0_4, %c0_5] : memref<1216x128xbf16, #tpu.memory_space<vmem>>, vector<18x32xbf16>
    %cst_6 = arith.constant dense<0.000000e+00> : vector<25x32xf32>
    %41 = tpu.matmul %39, %40, %cst_6 {dimension_numbers = #tpu.dot_dimension_numbers<[1], [0], [0], [1], [0, 0, 1, 1], [], []>} : vector<25x18xbf16>, vector<18x32xbf16>, vector<25x32xf32> -> vector<25x32xf32>
    %c0_7 = arith.constant 0 : index
    %c0_8 = arith.constant 0 : index
    %42 = vector.load %arg4[%c0_7, %c0_8] : memref<224x128xf32, #tpu.memory_space<vmem>>, vector<1x32xf32>
    %43 = vector.broadcast %42 : vector<1x32xf32> to vector<25x32xf32>
    %44 = arith.mulf %41, %43 : vector<25x32xf32>
    %c8 = arith.constant 8 : index
    %c0_9 = arith.constant 0 : index
    %45 = vector.load %arg4[%c8, %c0_9] : memref<224x128xf32, #tpu.memory_space<vmem>>, vector<1x32xf32>
    %46 = vector.broadcast %45 : vector<1x32xf32> to vector<25x32xf32>
    %47 = arith.addf %44, %46 : vector<25x32xf32>
    %cst_10 = arith.constant 0.000000e+00 : f32
    %48 = vector.broadcast %cst_10 : f32 to vector<25x32xf32>
    %49 = arith.maximumf %47, %48 : vector<25x32xf32>
    %50 = arith.truncf %49 : vector<25x32xf32> to vector<25x32xbf16>
    %cst_11 = arith.constant 0.000000e+00 : bf16
    %51 = vector.broadcast %cst_11 : bf16 to vector<8x32xbf16>
    %52 = tpu.concatenate %51, %50, %51 in 0 : vector<8x32xbf16>, vector<25x32xbf16>, vector<8x32xbf16> -> vector<41x32xbf16>
    %53 = vector.extract_strided_slice %52 {offsets = [2, 0], sizes = [25, 32], strides = [1, 1]} : vector<41x32xbf16> to vector<25x32xbf16>
    %54 = vector.extract_strided_slice %0 {offsets = [0, 0], sizes = [25, 1], strides = [1, 1]} : vector<25x9xbf16> to vector<25x1xbf16>
    %55 = vector.broadcast %54 : vector<25x1xbf16> to vector<25x32xbf16>
    %56 = arith.mulf %53, %55 : vector<25x32xbf16>
    %57 = vector.extract_strided_slice %52 {offsets = [3, 0], sizes = [25, 32], strides = [1, 1]} : vector<41x32xbf16> to vector<25x32xbf16>
    %58 = vector.extract_strided_slice %0 {offsets = [0, 1], sizes = [25, 1], strides = [1, 1]} : vector<25x9xbf16> to vector<25x1xbf16>
    %59 = vector.broadcast %58 : vector<25x1xbf16> to vector<25x32xbf16>
    %60 = arith.mulf %57, %59 : vector<25x32xbf16>
    %61 = vector.extract_strided_slice %52 {offsets = [4, 0], sizes = [25, 32], strides = [1, 1]} : vector<41x32xbf16> to vector<25x32xbf16>
    %62 = vector.extract_strided_slice %0 {offsets = [0, 2], sizes = [25, 1], strides = [1, 1]} : vector<25x9xbf16> to vector<25x1xbf16>
    %63 = vector.broadcast %62 : vector<25x1xbf16> to vector<25x32xbf16>
    %64 = arith.mulf %61, %63 : vector<25x32xbf16>
    %65 = vector.extract_strided_slice %52 {offsets = [7, 0], sizes = [25, 32], strides = [1, 1]} : vector<41x32xbf16> to vector<25x32xbf16>
    %66 = vector.extract_strided_slice %0 {offsets = [0, 3], sizes = [25, 1], strides = [1, 1]} : vector<25x9xbf16> to vector<25x1xbf16>
    %67 = vector.broadcast %66 : vector<25x1xbf16> to vector<25x32xbf16>
    %68 = arith.mulf %65, %67 : vector<25x32xbf16>
    %69 = vector.extract_strided_slice %52 {offsets = [8, 0], sizes = [25, 32], strides = [1, 1]} : vector<41x32xbf16> to vector<25x32xbf16>
    %70 = vector.extract_strided_slice %52 {offsets = [9, 0], sizes = [25, 32], strides = [1, 1]} : vector<41x32xbf16> to vector<25x32xbf16>
    %71 = vector.extract_strided_slice %0 {offsets = [0, 5], sizes = [25, 1], strides = [1, 1]} : vector<25x9xbf16> to vector<25x1xbf16>
    %72 = vector.broadcast %71 : vector<25x1xbf16> to vector<25x32xbf16>
    %73 = arith.mulf %70, %72 : vector<25x32xbf16>
    %74 = vector.extract_strided_slice %52 {offsets = [12, 0], sizes = [25, 32], strides = [1, 1]} : vector<41x32xbf16> to vector<25x32xbf16>
    %75 = vector.extract_strided_slice %0 {offsets = [0, 6], sizes = [25, 1], strides = [1, 1]} : vector<25x9xbf16> to vector<25x1xbf16>
    %76 = vector.broadcast %75 : vector<25x1xbf16> to vector<25x32xbf16>
    %77 = arith.mulf %74, %76 : vector<25x32xbf16>
    %78 = vector.extract_strided_slice %52 {offsets = [13, 0], sizes = [25, 32], strides = [1, 1]} : vector<41x32xbf16> to vector<25x32xbf16>
    %79 = vector.extract_strided_slice %0 {offsets = [0, 7], sizes = [25, 1], strides = [1, 1]} : vector<25x9xbf16> to vector<25x1xbf16>
    %80 = vector.broadcast %79 : vector<25x1xbf16> to vector<25x32xbf16>
    %81 = arith.mulf %78, %80 : vector<25x32xbf16>
    %82 = vector.extract_strided_slice %52 {offsets = [14, 0], sizes = [25, 32], strides = [1, 1]} : vector<41x32xbf16> to vector<25x32xbf16>
    %83 = vector.extract_strided_slice %0 {offsets = [0, 8], sizes = [25, 1], strides = [1, 1]} : vector<25x9xbf16> to vector<25x1xbf16>
    %84 = vector.broadcast %83 : vector<25x1xbf16> to vector<25x32xbf16>
    %85 = arith.mulf %82, %84 : vector<25x32xbf16>
    %86 = tpu.concatenate %56, %60, %64, %68, %69, %73, %77, %81, %85 in 1 : vector<25x32xbf16>, vector<25x32xbf16>, vector<25x32xbf16>, vector<25x32xbf16>, vector<25x32xbf16>, vector<25x32xbf16>, vector<25x32xbf16>, vector<25x32xbf16>, vector<25x32xbf16> -> vector<25x288xbf16>
    %c32 = arith.constant 32 : index
    %c0_12 = arith.constant 0 : index
    %87 = vector.load %arg3[%c32, %c0_12] : memref<1216x128xbf16, #tpu.memory_space<vmem>>, vector<288x32xbf16>
    %cst_13 = arith.constant dense<0.000000e+00> : vector<25x32xf32>
    %88 = tpu.matmul %86, %87, %cst_13 {dimension_numbers = #tpu.dot_dimension_numbers<[1], [0], [0], [1], [0, 0, 1, 1], [], []>} : vector<25x288xbf16>, vector<288x32xbf16>, vector<25x32xf32> -> vector<25x32xf32>
    %c16 = arith.constant 16 : index
    %c0_14 = arith.constant 0 : index
    %89 = vector.load %arg4[%c16, %c0_14] : memref<224x128xf32, #tpu.memory_space<vmem>>, vector<1x32xf32>
    %90 = vector.broadcast %89 : vector<1x32xf32> to vector<25x32xf32>
    %91 = arith.mulf %88, %90 : vector<25x32xf32>
    %c24 = arith.constant 24 : index
    %c0_15 = arith.constant 0 : index
    %92 = vector.load %arg4[%c24, %c0_15] : memref<224x128xf32, #tpu.memory_space<vmem>>, vector<1x32xf32>
    %93 = vector.broadcast %92 : vector<1x32xf32> to vector<25x32xf32>
    %94 = arith.addf %91, %93 : vector<25x32xf32>
    %cst_16 = arith.constant 0.000000e+00 : f32
    %95 = vector.broadcast %cst_16 : f32 to vector<25x32xf32>
    %96 = arith.maximumf %94, %95 : vector<25x32xf32>
    %97 = arith.truncf %96 : vector<25x32xf32> to vector<25x32xbf16>
    %cst_17 = arith.constant 0.000000e+00 : bf16
    %98 = vector.broadcast %cst_17 : bf16 to vector<8x32xbf16>
    %99 = tpu.concatenate %98, %97, %98 in 0 : vector<8x32xbf16>, vector<25x32xbf16>, vector<8x32xbf16> -> vector<41x32xbf16>
    %100 = vector.extract_strided_slice %99 {offsets = [2, 0], sizes = [25, 32], strides = [1, 1]} : vector<41x32xbf16> to vector<25x32xbf16>
    %101 = vector.extract_strided_slice %0 {offsets = [0, 0], sizes = [25, 1], strides = [1, 1]} : vector<25x9xbf16> to vector<25x1xbf16>
    %102 = vector.broadcast %101 : vector<25x1xbf16> to vector<25x32xbf16>
    %103 = arith.mulf %100, %102 : vector<25x32xbf16>
    %104 = vector.extract_strided_slice %99 {offsets = [3, 0], sizes = [25, 32], strides = [1, 1]} : vector<41x32xbf16> to vector<25x32xbf16>
    %105 = vector.extract_strided_slice %0 {offsets = [0, 1], sizes = [25, 1], strides = [1, 1]} : vector<25x9xbf16> to vector<25x1xbf16>
    %106 = vector.broadcast %105 : vector<25x1xbf16> to vector<25x32xbf16>
    %107 = arith.mulf %104, %106 : vector<25x32xbf16>
    %108 = vector.extract_strided_slice %99 {offsets = [4, 0], sizes = [25, 32], strides = [1, 1]} : vector<41x32xbf16> to vector<25x32xbf16>
    %109 = vector.extract_strided_slice %0 {offsets = [0, 2], sizes = [25, 1], strides = [1, 1]} : vector<25x9xbf16> to vector<25x1xbf16>
    %110 = vector.broadcast %109 : vector<25x1xbf16> to vector<25x32xbf16>
    %111 = arith.mulf %108, %110 : vector<25x32xbf16>
    %112 = vector.extract_strided_slice %99 {offsets = [7, 0], sizes = [25, 32], strides = [1, 1]} : vector<41x32xbf16> to vector<25x32xbf16>
    %113 = vector.extract_strided_slice %0 {offsets = [0, 3], sizes = [25, 1], strides = [1, 1]} : vector<25x9xbf16> to vector<25x1xbf16>
    %114 = vector.broadcast %113 : vector<25x1xbf16> to vector<25x32xbf16>
    %115 = arith.mulf %112, %114 : vector<25x32xbf16>
    %116 = vector.extract_strided_slice %99 {offsets = [8, 0], sizes = [25, 32], strides = [1, 1]} : vector<41x32xbf16> to vector<25x32xbf16>
    %117 = vector.extract_strided_slice %99 {offsets = [9, 0], sizes = [25, 32], strides = [1, 1]} : vector<41x32xbf16> to vector<25x32xbf16>
    %118 = vector.extract_strided_slice %0 {offsets = [0, 5], sizes = [25, 1], strides = [1, 1]} : vector<25x9xbf16> to vector<25x1xbf16>
    %119 = vector.broadcast %118 : vector<25x1xbf16> to vector<25x32xbf16>
    %120 = arith.mulf %117, %119 : vector<25x32xbf16>
    %121 = vector.extract_strided_slice %99 {offsets = [12, 0], sizes = [25, 32], strides = [1, 1]} : vector<41x32xbf16> to vector<25x32xbf16>
    %122 = vector.extract_strided_slice %0 {offsets = [0, 6], sizes = [25, 1], strides = [1, 1]} : vector<25x9xbf16> to vector<25x1xbf16>
    %123 = vector.broadcast %122 : vector<25x1xbf16> to vector<25x32xbf16>
    %124 = arith.mulf %121, %123 : vector<25x32xbf16>
    %125 = vector.extract_strided_slice %99 {offsets = [13, 0], sizes = [25, 32], strides = [1, 1]} : vector<41x32xbf16> to vector<25x32xbf16>
    %126 = vector.extract_strided_slice %0 {offsets = [0, 7], sizes = [25, 1], strides = [1, 1]} : vector<25x9xbf16> to vector<25x1xbf16>
    %127 = vector.broadcast %126 : vector<25x1xbf16> to vector<25x32xbf16>
    %128 = arith.mulf %125, %127 : vector<25x32xbf16>
    %129 = vector.extract_strided_slice %99 {offsets = [14, 0], sizes = [25, 32], strides = [1, 1]} : vector<41x32xbf16> to vector<25x32xbf16>
    %130 = vector.extract_strided_slice %0 {offsets = [0, 8], sizes = [25, 1], strides = [1, 1]} : vector<25x9xbf16> to vector<25x1xbf16>
    %131 = vector.broadcast %130 : vector<25x1xbf16> to vector<25x32xbf16>
    %132 = arith.mulf %129, %131 : vector<25x32xbf16>
    %133 = tpu.concatenate %103, %107, %111, %115, %116, %120, %124, %128, %132 in 1 : vector<25x32xbf16>, vector<25x32xbf16>, vector<25x32xbf16>, vector<25x32xbf16>, vector<25x32xbf16>, vector<25x32xbf16>, vector<25x32xbf16>, vector<25x32xbf16>, vector<25x32xbf16> -> vector<25x288xbf16>
    %c320 = arith.constant 320 : index
    %c0_18 = arith.constant 0 : index
    %134 = vector.load %arg3[%c320, %c0_18] : memref<1216x128xbf16, #tpu.memory_space<vmem>>, vector<288x32xbf16>
    %cst_19 = arith.constant dense<0.000000e+00> : vector<25x32xf32>
    %135 = tpu.matmul %133, %134, %cst_19 {dimension_numbers = #tpu.dot_dimension_numbers<[1], [0], [0], [1], [0, 0, 1, 1], [], []>} : vector<25x288xbf16>, vector<288x32xbf16>, vector<25x32xf32> -> vector<25x32xf32>
    %c32_20 = arith.constant 32 : index
    %c0_21 = arith.constant 0 : index
    %136 = vector.load %arg4[%c32_20, %c0_21] : memref<224x128xf32, #tpu.memory_space<vmem>>, vector<1x32xf32>
    %137 = vector.broadcast %136 : vector<1x32xf32> to vector<25x32xf32>
    %138 = arith.mulf %135, %137 : vector<25x32xf32>
    %c40 = arith.constant 40 : index
    %c0_22 = arith.constant 0 : index
    %139 = vector.load %arg4[%c40, %c0_22] : memref<224x128xf32, #tpu.memory_space<vmem>>, vector<1x32xf32>
    %140 = vector.broadcast %139 : vector<1x32xf32> to vector<25x32xf32>
    %141 = arith.addf %138, %140 : vector<25x32xf32>
    %142 = arith.addf %141, %49 : vector<25x32xf32>
    %cst_23 = arith.constant 0.000000e+00 : f32
    %143 = vector.broadcast %cst_23 : f32 to vector<25x32xf32>
    %144 = arith.maximumf %142, %143 : vector<25x32xf32>
    %145 = arith.truncf %144 : vector<25x32xf32> to vector<25x32xbf16>
    %cst_24 = arith.constant 0.000000e+00 : bf16
    %146 = vector.broadcast %cst_24 : bf16 to vector<8x32xbf16>
    %147 = tpu.concatenate %146, %145, %146 in 0 : vector<8x32xbf16>, vector<25x32xbf16>, vector<8x32xbf16> -> vector<41x32xbf16>
    %148 = vector.extract_strided_slice %147 {offsets = [2, 0], sizes = [25, 32], strides = [1, 1]} : vector<41x32xbf16> to vector<25x32xbf16>
    %149 = vector.extract_strided_slice %0 {offsets = [0, 0], sizes = [25, 1], strides = [1, 1]} : vector<25x9xbf16> to vector<25x1xbf16>
    %150 = vector.broadcast %149 : vector<25x1xbf16> to vector<25x32xbf16>
    %151 = arith.mulf %148, %150 : vector<25x32xbf16>
    %152 = vector.extract_strided_slice %147 {offsets = [3, 0], sizes = [25, 32], strides = [1, 1]} : vector<41x32xbf16> to vector<25x32xbf16>
    %153 = vector.extract_strided_slice %0 {offsets = [0, 1], sizes = [25, 1], strides = [1, 1]} : vector<25x9xbf16> to vector<25x1xbf16>
    %154 = vector.broadcast %153 : vector<25x1xbf16> to vector<25x32xbf16>
    %155 = arith.mulf %152, %154 : vector<25x32xbf16>
    %156 = vector.extract_strided_slice %147 {offsets = [4, 0], sizes = [25, 32], strides = [1, 1]} : vector<41x32xbf16> to vector<25x32xbf16>
    %157 = vector.extract_strided_slice %0 {offsets = [0, 2], sizes = [25, 1], strides = [1, 1]} : vector<25x9xbf16> to vector<25x1xbf16>
    %158 = vector.broadcast %157 : vector<25x1xbf16> to vector<25x32xbf16>
    %159 = arith.mulf %156, %158 : vector<25x32xbf16>
    %160 = vector.extract_strided_slice %147 {offsets = [7, 0], sizes = [25, 32], strides = [1, 1]} : vector<41x32xbf16> to vector<25x32xbf16>
    %161 = vector.extract_strided_slice %0 {offsets = [0, 3], sizes = [25, 1], strides = [1, 1]} : vector<25x9xbf16> to vector<25x1xbf16>
    %162 = vector.broadcast %161 : vector<25x1xbf16> to vector<25x32xbf16>
    %163 = arith.mulf %160, %162 : vector<25x32xbf16>
    %164 = vector.extract_strided_slice %147 {offsets = [8, 0], sizes = [25, 32], strides = [1, 1]} : vector<41x32xbf16> to vector<25x32xbf16>
    %165 = vector.extract_strided_slice %147 {offsets = [9, 0], sizes = [25, 32], strides = [1, 1]} : vector<41x32xbf16> to vector<25x32xbf16>
    %166 = vector.extract_strided_slice %0 {offsets = [0, 5], sizes = [25, 1], strides = [1, 1]} : vector<25x9xbf16> to vector<25x1xbf16>
    %167 = vector.broadcast %166 : vector<25x1xbf16> to vector<25x32xbf16>
    %168 = arith.mulf %165, %167 : vector<25x32xbf16>
    %169 = vector.extract_strided_slice %147 {offsets = [12, 0], sizes = [25, 32], strides = [1, 1]} : vector<41x32xbf16> to vector<25x32xbf16>
    %170 = vector.extract_strided_slice %0 {offsets = [0, 6], sizes = [25, 1], strides = [1, 1]} : vector<25x9xbf16> to vector<25x1xbf16>
    %171 = vector.broadcast %170 : vector<25x1xbf16> to vector<25x32xbf16>
    %172 = arith.mulf %169, %171 : vector<25x32xbf16>
    %173 = vector.extract_strided_slice %147 {offsets = [13, 0], sizes = [25, 32], strides = [1, 1]} : vector<41x32xbf16> to vector<25x32xbf16>
    %174 = vector.extract_strided_slice %0 {offsets = [0, 7], sizes = [25, 1], strides = [1, 1]} : vector<25x9xbf16> to vector<25x1xbf16>
    %175 = vector.broadcast %174 : vector<25x1xbf16> to vector<25x32xbf16>
    %176 = arith.mulf %173, %175 : vector<25x32xbf16>
    %177 = vector.extract_strided_slice %147 {offsets = [14, 0], sizes = [25, 32], strides = [1, 1]} : vector<41x32xbf16> to vector<25x32xbf16>
    %178 = vector.extract_strided_slice %0 {offsets = [0, 8], sizes = [25, 1], strides = [1, 1]} : vector<25x9xbf16> to vector<25x1xbf16>
    %179 = vector.broadcast %178 : vector<25x1xbf16> to vector<25x32xbf16>
    %180 = arith.mulf %177, %179 : vector<25x32xbf16>
    %181 = tpu.concatenate %151, %155, %159, %163, %164, %168, %172, %176, %180 in 1 : vector<25x32xbf16>, vector<25x32xbf16>, vector<25x32xbf16>, vector<25x32xbf16>, vector<25x32xbf16>, vector<25x32xbf16>, vector<25x32xbf16>, vector<25x32xbf16>, vector<25x32xbf16> -> vector<25x288xbf16>
    %c608 = arith.constant 608 : index
    %c0_25 = arith.constant 0 : index
    %182 = vector.load %arg3[%c608, %c0_25] : memref<1216x128xbf16, #tpu.memory_space<vmem>>, vector<288x32xbf16>
    %cst_26 = arith.constant dense<0.000000e+00> : vector<25x32xf32>
    %183 = tpu.matmul %181, %182, %cst_26 {dimension_numbers = #tpu.dot_dimension_numbers<[1], [0], [0], [1], [0, 0, 1, 1], [], []>} : vector<25x288xbf16>, vector<288x32xbf16>, vector<25x32xf32> -> vector<25x32xf32>
    %c48 = arith.constant 48 : index
    %c0_27 = arith.constant 0 : index
    %184 = vector.load %arg4[%c48, %c0_27] : memref<224x128xf32, #tpu.memory_space<vmem>>, vector<1x32xf32>
    %185 = vector.broadcast %184 : vector<1x32xf32> to vector<25x32xf32>
    %186 = arith.mulf %183, %185 : vector<25x32xf32>
    %c56 = arith.constant 56 : index
    %c0_28 = arith.constant 0 : index
    %187 = vector.load %arg4[%c56, %c0_28] : memref<224x128xf32, #tpu.memory_space<vmem>>, vector<1x32xf32>
    %188 = vector.broadcast %187 : vector<1x32xf32> to vector<25x32xf32>
    %189 = arith.addf %186, %188 : vector<25x32xf32>
    %cst_29 = arith.constant 0.000000e+00 : f32
    %190 = vector.broadcast %cst_29 : f32 to vector<25x32xf32>
    %191 = arith.maximumf %189, %190 : vector<25x32xf32>
    %192 = arith.truncf %191 : vector<25x32xf32> to vector<25x32xbf16>
    %cst_30 = arith.constant 0.000000e+00 : bf16
    %193 = vector.broadcast %cst_30 : bf16 to vector<8x32xbf16>
    %194 = tpu.concatenate %193, %192, %193 in 0 : vector<8x32xbf16>, vector<25x32xbf16>, vector<8x32xbf16> -> vector<41x32xbf16>
    %195 = vector.extract_strided_slice %194 {offsets = [2, 0], sizes = [25, 32], strides = [1, 1]} : vector<41x32xbf16> to vector<25x32xbf16>
    %196 = vector.extract_strided_slice %0 {offsets = [0, 0], sizes = [25, 1], strides = [1, 1]} : vector<25x9xbf16> to vector<25x1xbf16>
    %197 = vector.broadcast %196 : vector<25x1xbf16> to vector<25x32xbf16>
    %198 = arith.mulf %195, %197 : vector<25x32xbf16>
    %199 = vector.extract_strided_slice %194 {offsets = [3, 0], sizes = [25, 32], strides = [1, 1]} : vector<41x32xbf16> to vector<25x32xbf16>
    %200 = vector.extract_strided_slice %0 {offsets = [0, 1], sizes = [25, 1], strides = [1, 1]} : vector<25x9xbf16> to vector<25x1xbf16>
    %201 = vector.broadcast %200 : vector<25x1xbf16> to vector<25x32xbf16>
    %202 = arith.mulf %199, %201 : vector<25x32xbf16>
    %203 = vector.extract_strided_slice %194 {offsets = [4, 0], sizes = [25, 32], strides = [1, 1]} : vector<41x32xbf16> to vector<25x32xbf16>
    %204 = vector.extract_strided_slice %0 {offsets = [0, 2], sizes = [25, 1], strides = [1, 1]} : vector<25x9xbf16> to vector<25x1xbf16>
    %205 = vector.broadcast %204 : vector<25x1xbf16> to vector<25x32xbf16>
    %206 = arith.mulf %203, %205 : vector<25x32xbf16>
    %207 = vector.extract_strided_slice %194 {offsets = [7, 0], sizes = [25, 32], strides = [1, 1]} : vector<41x32xbf16> to vector<25x32xbf16>
    %208 = vector.extract_strided_slice %0 {offsets = [0, 3], sizes = [25, 1], strides = [1, 1]} : vector<25x9xbf16> to vector<25x1xbf16>
    %209 = vector.broadcast %208 : vector<25x1xbf16> to vector<25x32xbf16>
    %210 = arith.mulf %207, %209 : vector<25x32xbf16>
    %211 = vector.extract_strided_slice %194 {offsets = [8, 0], sizes = [25, 32], strides = [1, 1]} : vector<41x32xbf16> to vector<25x32xbf16>
    %212 = vector.extract_strided_slice %194 {offsets = [9, 0], sizes = [25, 32], strides = [1, 1]} : vector<41x32xbf16> to vector<25x32xbf16>
    %213 = vector.extract_strided_slice %0 {offsets = [0, 5], sizes = [25, 1], strides = [1, 1]} : vector<25x9xbf16> to vector<25x1xbf16>
    %214 = vector.broadcast %213 : vector<25x1xbf16> to vector<25x32xbf16>
    %215 = arith.mulf %212, %214 : vector<25x32xbf16>
    %216 = vector.extract_strided_slice %194 {offsets = [12, 0], sizes = [25, 32], strides = [1, 1]} : vector<41x32xbf16> to vector<25x32xbf16>
    %217 = vector.extract_strided_slice %0 {offsets = [0, 6], sizes = [25, 1], strides = [1, 1]} : vector<25x9xbf16> to vector<25x1xbf16>
    %218 = vector.broadcast %217 : vector<25x1xbf16> to vector<25x32xbf16>
    %219 = arith.mulf %216, %218 : vector<25x32xbf16>
    %220 = vector.extract_strided_slice %194 {offsets = [13, 0], sizes = [25, 32], strides = [1, 1]} : vector<41x32xbf16> to vector<25x32xbf16>
    %221 = vector.extract_strided_slice %0 {offsets = [0, 7], sizes = [25, 1], strides = [1, 1]} : vector<25x9xbf16> to vector<25x1xbf16>
    %222 = vector.broadcast %221 : vector<25x1xbf16> to vector<25x32xbf16>
    %223 = arith.mulf %220, %222 : vector<25x32xbf16>
    %224 = vector.extract_strided_slice %194 {offsets = [14, 0], sizes = [25, 32], strides = [1, 1]} : vector<41x32xbf16> to vector<25x32xbf16>
    %225 = vector.extract_strided_slice %0 {offsets = [0, 8], sizes = [25, 1], strides = [1, 1]} : vector<25x9xbf16> to vector<25x1xbf16>
    %226 = vector.broadcast %225 : vector<25x1xbf16> to vector<25x32xbf16>
    %227 = arith.mulf %224, %226 : vector<25x32xbf16>
    %228 = tpu.concatenate %198, %202, %206, %210, %211, %215, %219, %223, %227 in 1 : vector<25x32xbf16>, vector<25x32xbf16>, vector<25x32xbf16>, vector<25x32xbf16>, vector<25x32xbf16>, vector<25x32xbf16>, vector<25x32xbf16>, vector<25x32xbf16>, vector<25x32xbf16> -> vector<25x288xbf16>
    %c896 = arith.constant 896 : index
    %c0_31 = arith.constant 0 : index
    %229 = vector.load %arg3[%c896, %c0_31] : memref<1216x128xbf16, #tpu.memory_space<vmem>>, vector<288x32xbf16>
    %cst_32 = arith.constant dense<0.000000e+00> : vector<25x32xf32>
    %230 = tpu.matmul %228, %229, %cst_32 {dimension_numbers = #tpu.dot_dimension_numbers<[1], [0], [0], [1], [0, 0, 1, 1], [], []>} : vector<25x288xbf16>, vector<288x32xbf16>, vector<25x32xf32> -> vector<25x32xf32>
    %c64 = arith.constant 64 : index
    %c0_33 = arith.constant 0 : index
    %231 = vector.load %arg4[%c64, %c0_33] : memref<224x128xf32, #tpu.memory_space<vmem>>, vector<1x32xf32>
    %232 = vector.broadcast %231 : vector<1x32xf32> to vector<25x32xf32>
    %233 = arith.mulf %230, %232 : vector<25x32xf32>
    %c72 = arith.constant 72 : index
    %c0_34 = arith.constant 0 : index
    %234 = vector.load %arg4[%c72, %c0_34] : memref<224x128xf32, #tpu.memory_space<vmem>>, vector<1x32xf32>
    %235 = vector.broadcast %234 : vector<1x32xf32> to vector<25x32xf32>
    %236 = arith.addf %233, %235 : vector<25x32xf32>
    %237 = arith.addf %236, %144 : vector<25x32xf32>
    %cst_35 = arith.constant 0.000000e+00 : f32
    %238 = vector.broadcast %cst_35 : f32 to vector<25x32xf32>
    %239 = arith.maximumf %237, %238 : vector<25x32xf32>
    %240 = arith.truncf %239 : vector<25x32xf32> to vector<25x32xbf16>
    %c1184 = arith.constant 1184 : index
    %c0_36 = arith.constant 0 : index
    %241 = vector.load %arg3[%c1184, %c0_36] : memref<1216x128xbf16, #tpu.memory_space<vmem>>, vector<32x3xbf16>
    %cst_37 = arith.constant dense<0.000000e+00> : vector<25x3xf32>
    %242 = tpu.matmul %240, %241, %cst_37 {dimension_numbers = #tpu.dot_dimension_numbers<[1], [0], [0], [1], [0, 0, 1, 1], [], []>} : vector<25x32xbf16>, vector<32x3xbf16>, vector<25x3xf32> -> vector<25x3xf32>
    %c80 = arith.constant 80 : index
    %c0_38 = arith.constant 0 : index
    %243 = vector.load %arg4[%c80, %c0_38] : memref<224x128xf32, #tpu.memory_space<vmem>>, vector<1x3xf32>
    %244 = vector.broadcast %243 : vector<1x3xf32> to vector<25x3xf32>
    %245 = arith.mulf %242, %244 : vector<25x3xf32>
    %c88 = arith.constant 88 : index
    %c0_39 = arith.constant 0 : index
    %246 = vector.load %arg4[%c88, %c0_39] : memref<224x128xf32, #tpu.memory_space<vmem>>, vector<1x3xf32>
    %247 = vector.broadcast %246 : vector<1x3xf32> to vector<25x3xf32>
    %248 = arith.addf %245, %247 : vector<25x3xf32>
    %cst_40 = arith.constant 0.000000e+00 : f32
    %249 = vector.broadcast %cst_40 : f32 to vector<25x3xf32>
    %250 = arith.maximumf %248, %249 : vector<25x3xf32>
    %251 = vector.extract_strided_slice %250 {offsets = [0, 0], sizes = [25, 1], strides = [1, 1]} : vector<25x3xf32> to vector<25x1xf32>
    %c120 = arith.constant 120 : index
    %c0_41 = arith.constant 0 : index
    %252 = vector.load %arg4[%c120, %c0_41] : memref<224x128xf32, #tpu.memory_space<vmem>>, vector<25x25xf32>
    %253 = vector.broadcast %251 : vector<25x1xf32> to vector<25x25xf32>
    %254 = arith.mulf %253, %252 : vector<25x25xf32>
    %255 = vector.extract_strided_slice %250 {offsets = [0, 1], sizes = [25, 1], strides = [1, 1]} : vector<25x3xf32> to vector<25x1xf32>
    %c152 = arith.constant 152 : index
    %c0_42 = arith.constant 0 : index
    %256 = vector.load %arg4[%c152, %c0_42] : memref<224x128xf32, #tpu.memory_space<vmem>>, vector<25x25xf32>
    %257 = vector.broadcast %255 : vector<25x1xf32> to vector<25x25xf32>
    %258 = arith.mulf %257, %256 : vector<25x25xf32>
    %259 = arith.addf %254, %258 : vector<25x25xf32>
    %cst_43 = arith.constant dense<0.000000e+00> : vector<25xf32>
    %260 = vector.multi_reduction <add>, %259, %cst_43 [0] : vector<25x25xf32> to vector<25xf32>
    %261 = vector.shape_cast %260 : vector<25xf32> to vector<1x25xf32>
    %c96 = arith.constant 96 : index
    %c0_44 = arith.constant 0 : index
    %262 = vector.load %arg4[%c96, %c0_44] : memref<224x128xf32, #tpu.memory_space<vmem>>, vector<1x25xf32>
    %263 = arith.addf %261, %262 : vector<1x25xf32>
    %264 = vector.extract_strided_slice %250 {offsets = [0, 2], sizes = [25, 1], strides = [1, 1]} : vector<25x3xf32> to vector<25x1xf32>
    %c184 = arith.constant 184 : index
    %c0_45 = arith.constant 0 : index
    %265 = vector.load %arg4[%c184, %c0_45] : memref<224x128xf32, #tpu.memory_space<vmem>>, vector<25x128xf32>
    %266 = vector.broadcast %264 : vector<25x1xf32> to vector<25x128xf32>
    %267 = arith.mulf %266, %265 : vector<25x128xf32>
    %cst_46 = arith.constant dense<0.000000e+00> : vector<128xf32>
    %268 = vector.multi_reduction <add>, %267, %cst_46 [0] : vector<25x128xf32> to vector<128xf32>
    %269 = vector.shape_cast %268 : vector<128xf32> to vector<1x128xf32>
    %c104 = arith.constant 104 : index
    %c0_47 = arith.constant 0 : index
    %270 = vector.load %arg4[%c104, %c0_47] : memref<224x128xf32, #tpu.memory_space<vmem>>, vector<1x128xf32>
    %271 = arith.addf %269, %270 : vector<1x128xf32>
    %cst_48 = arith.constant 0.000000e+00 : f32
    %272 = vector.broadcast %cst_48 : f32 to vector<1x128xf32>
    %273 = arith.maximumf %271, %272 : vector<1x128xf32>
    %c216 = arith.constant 216 : index
    %c0_49 = arith.constant 0 : index
    %274 = vector.load %arg4[%c216, %c0_49] : memref<224x128xf32, #tpu.memory_space<vmem>>, vector<1x128xf32>
    %275 = arith.mulf %273, %274 : vector<1x128xf32>
    %cst_50 = arith.constant dense<0.000000e+00> : vector<1xf32>
    %276 = vector.multi_reduction <add>, %275, %cst_50 [1] : vector<1x128xf32> to vector<1xf32>
    %277 = vector.shape_cast %276 : vector<1xf32> to vector<1x1xf32>
    %c112 = arith.constant 112 : index
    %c0_51 = arith.constant 0 : index
    %278 = vector.load %arg4[%c112, %c0_51] : memref<224x128xf32, #tpu.memory_space<vmem>>, vector<1x1xf32>
    %279 = arith.addf %277, %278 : vector<1x1xf32>
    %280 = math.tanh %279 : vector<1x1xf32>
    %cst_52 = arith.constant 0.000000e+00 : f32
    %281 = vector.broadcast %cst_52 : f32 to vector<1x102xf32>
    %282 = tpu.concatenate %263, %281, %280 in 1 : vector<1x25xf32>, vector<1x102xf32>, vector<1x1xf32> -> vector<1x128xf32>
    %c0_53 = arith.constant 0 : index
    %c0_54 = arith.constant 0 : index
    %c0_55 = arith.constant 0 : index
    %283 = vector.load %arg5[%c0_53, %c0_54, %c0_55] : memref<1x1x128xf32, #tpu.memory_space<vmem>>, vector<1x1x128xf32>
    %284 = vector.shape_cast %283 : vector<1x1x128xf32> to vector<1x128xf32>
    %285 = vector.shape_cast %282 : vector<1x128xf32> to vector<1x1x128xf32>
    tpu.vector_store %arg5[%c0_53, %c0_54, %c0_55], %285 {strides = array<i32>} : memref<1x1x128xf32, #tpu.memory_space<vmem>>, vector<1x1x128xf32>,
    return
  }
  func.func @transform_0(%arg0: i32) -> (i32, i32, i32) {
    %c0_i32 = arith.constant 0 : i32
    %c0_i32_0 = arith.constant 0 : i32
    %c0_i32_1 = arith.constant 0 : i32
    return %arg0, %c0_i32, %c0_i32_0 : i32, i32, i32
  }
  func.func @transform_1(%arg0: i32) -> (i32, i32) {
    %c0_i32 = arith.constant 0 : i32
    %c0_i32_0 = arith.constant 0 : i32
    %c0_i32_1 = arith.constant 0 : i32
    return %c0_i32, %c0_i32_0 : i32, i32
  }
  func.func @transform_2(%arg0: i32) -> (i32, i32) {
    %c0_i32 = arith.constant 0 : i32
    %c0_i32_0 = arith.constant 0 : i32
    %c0_i32_1 = arith.constant 0 : i32
    return %c0_i32, %c0_i32_0 : i32, i32
  }
  func.func @transform_3(%arg0: i32) -> (i32, i32) {
    %c0_i32 = arith.constant 0 : i32
    %c0_i32_0 = arith.constant 0 : i32
    %c0_i32_1 = arith.constant 0 : i32
    return %c0_i32, %c0_i32_0 : i32, i32
  }
  func.func @transform_4(%arg0: i32) -> (i32, i32, i32) {
    %c0_i32 = arith.constant 0 : i32
    %c0_i32_0 = arith.constant 0 : i32
    %c0_i32_1 = arith.constant 0 : i32
    return %arg0, %c0_i32, %c0_i32_0 : i32, i32, i32
  }
}

</mosaic_0001>

<llo_original>
// kernel: forward.1
$region0: #{forward.1}
  #allocation0 [shape = 'u32[]', space=smem, size = 0x4, offset = 0x4, fixed_abs, tag = 'smem constant byte address 0x4 - core index']
  #allocation1 [shape = 'u32[144,128]{1,0:T(1,128)}', space=vmem, size = 0x12000, scoped, tag = 'internal scratch']
  %s0 = inlined_call_operand.vmem [shape: f32[2,25,2], index: 0, kind: input, shape index: {}]
  %s1 = inlined_call_operand.vmem [shape: bf16[25,9], index: 1, kind: input, shape index: {}]
  %s2 = inlined_call_operand.hbm [shape: bf16[1216,128], index: 2, kind: input, shape index: {}]
  %s3 = inlined_call_operand.hbm [shape: f32[224,128], index: 3, kind: input, shape index: {}]
  %s4 = inlined_call_operand.vmem [shape: f32[2,1,128], index: 4, kind: output, shape index: {}]
  %s5 = sld [smem:[#allocation0]]
  $region57: #{forward.1} parent=0
    _
  %s7 = ssub.s32 1, %s5
  %s8 = scalar_select 0, %s7, %s5
  $region1: #{forward.1} parent=0
    #allocation2 [shape = 'u8[311296]{0}', space=vmem, size = 0x4c000, scoped, tag = 'input window, operand 2, single buffered']
    #allocation3 [shape = 's32[2]{0}', space=sflag, size = 0x8, scoped, tag = 'scoped memory for forward.1']
    #allocation4 [shape = 'u8[114688]{0}', space=vmem, size = 0x1c000, scoped, tag = 'input window, operand 3, single buffered']
    #allocation5 [shape = 's32[1]{0}', space=sflag, size = 0x4, scoped, tag = 'scoped memory for forward.1']
    %9 = vsyncpa [#allocation3], 0
    %10 = vsyncpa [#allocation5], 0
    loop: start=0, step=1, limit=4
    $region2: #{forward.1} parent=1 // loop_pre_header
      _
    $region3: #{forward.1} parent=1 // loop_header
      %s12 = sphi 0, %s16
      %p13 = scmp.ge.s32.totalorder %s12, 4
      %s22 = sphi 0, %s24
      %s25 = sphi 0, %s22
      %s26 = sphi 0, %s25
      %s42 = sphi 0, %s26
      %s46 = sphi 0, %s46
      %s48 = sphi 0, %s46
      %s49 = sphi 0, %s48
      %s63 = sphi 0, %s49
      %s67 = sphi 0, %s67
      %s69 = sphi 0, %s67
      %s70 = sphi 0, %s69
      %s84 = sphi 0, %s70
      %s88 = sphi 0, %s88
      %s90 = sphi 0, %s88
      %s91 = sphi 0, %s90
      %s105 = sphi 0, %s91
      %s111 = sphi 0, %s113
      %s114 = sphi 0, %s111
      %s115 = sphi 0, %s114
      %s131 = sphi 0, %s115
    $region4: #{forward.1} parent=1 // loop_header_branch
      %15 = sbr.rel (%p13) target = $region8
    $region5: #{forward.1} parent=1 // loop_body
      %s17 = ssub.s32 %s12, 1
      %s18 = ssub.s32 %s12, 2
      %s19 = sadd.s32 %s12, 1
      %s20 = ssub.s32 %s12, %s19
      %p21 = scmp.eq.s32.totalorder %s20, 0
      %s23 = sadd.s32 %s22, 1
      %s24 = scalar_select %p21, %s22, %s23
      %p27 = pneg %p21
      %p28 = scmp.eq.s32.totalorder %s12, 1
      %p29 = por %p27, %p28
      %p30 = scmp.ne.s32.totalorder %s22, %s25
      %p31 = scmp.eq.s32.totalorder %s12, 0
      %p32 = por %p30, %p31
      %p33 = scmp.ne.s32.totalorder %s22, %s25
      %p34 = scmp.eq.s32.totalorder %s17, 1
      %p35 = por %p33, %p34
      %p36 = scmp.ne.s32.totalorder %s25, %s26
      %p37 = scmp.eq.s32.totalorder %s17, 0
      %p38 = por %p36, %p37
      %p39 = scmp.ne.s32.totalorder %s25, %s26
      %p40 = scmp.eq.s32.totalorder %s18, 1
      %p41 = por %p39, %p40
      %p43 = scmp.ne.s32.totalorder %s26, %s42
      %p44 = scmp.eq.s32.totalorder %s18, 0
      %p45 = por %p43, %p44
      %s47 = sadd.s32 %s46, 1
      %p50 = scmp.eq.s32.totalorder %s12, 1
      %p51 = scmp.ne.s32.totalorder %s46, %s48
      %p52 = scmp.eq.s32.totalorder %s12, 0
      %p53 = por %p51, %p52
      %p54 = scmp.ne.s32.totalorder %s46, %s48
      %p55 = scmp.eq.s32.totalorder %s17, 1
      %p56 = por %p54, %p55
      %p57 = scmp.ne.s32.totalorder %s48, %s49
      %p58 = scmp.eq.s32.totalorder %s17, 0
      %p59 = por %p57, %p58
      %p60 = scmp.ne.s32.totalorder %s48, %s49
      %p61 = scmp.eq.s32.totalorder %s18, 1
      %p62 = por %p60, %p61
      %p64 = scmp.ne.s32.totalorder %s49, %s63
      %p65 = scmp.eq.s32.totalorder %s18, 0
      %p66 = por %p64, %p65
      %s68 = sadd.s32 %s67, 1
      %p71 = scmp.eq.s32.totalorder %s12, 1
      %p72 = scmp.ne.s32.totalorder %s67, %s69
      %p73 = scmp.eq.s32.totalorder %s12, 0
      %p74 = por %p72, %p73
      %p75 = scmp.ne.s32.totalorder %s67, %s69
      %p76 = scmp.eq.s32.totalorder %s17, 1
      %p77 = por %p75, %p76
      %p78 = scmp.ne.s32.totalorder %s69, %s70
      %p79 = scmp.eq.s32.totalorder %s17, 0
      %p80 = por %p78, %p79
      %p81 = scmp.ne.s32.totalorder %s69, %s70
      %p82 = scmp.eq.s32.totalorder %s18, 1
      %p83 = por %p81, %p82
      %p85 = scmp.ne.s32.totalorder %s70, %s84
      %p86 = scmp.eq.s32.totalorder %s18, 0
      %p87 = por %p85, %p86
      %s89 = sadd.s32 %s88, 1
      %p92 = scmp.eq.s32.totalorder %s12, 1
      %p93 = scmp.ne.s32.totalorder %s88, %s90
      %p94 = scmp.eq.s32.totalorder %s12, 0
      %p95 = por %p93, %p94
      %p96 = scmp.ne.s32.totalorder %s88, %s90
      %p97 = scmp.eq.s32.totalorder %s17, 1
      %p98 = por %p96, %p97
      %p99 = scmp.ne.s32.totalorder %s90, %s91
      %p100 = scmp.eq.s32.totalorder %s17, 0
      %p101 = por %p99, %p100
      %p102 = scmp.ne.s32.totalorder %s90, %s91
      %p103 = scmp.eq.s32.totalorder %s18, 1
      %p104 = por %p102, %p103
      %p106 = scmp.ne.s32.totalorder %s91, %s105
      %p107 = scmp.eq.s32.totalorder %s18, 0
      %p108 = por %p106, %p107
      %s109 = ssub.s32 %s12, %s19
      %p110 = scmp.eq.s32.totalorder %s109, 0
      %s112 = sadd.s32 %s111, 1
      %s113 = scalar_select %p110, %s111, %s112
      %p116 = pneg %p110
      %p117 = scmp.eq.s32.totalorder %s12, 1
      %p118 = por %p116, %p117
      %p119 = scmp.ne.s32.totalorder %s111, %s114
      %p120 = scmp.eq.s32.totalorder %s12, 0
      %p121 = por %p119, %p120
      %p122 = scmp.ne.s32.totalorder %s111, %s114
      %p123 = scmp.eq.s32.totalorder %s17, 1
      %p124 = por %p122, %p123
      %p125 = scmp.ne.s32.totalorder %s114, %s115
      %p126 = scmp.eq.s32.totalorder %s17, 0
      %p127 = por %p125, %p126
      %p128 = scmp.ne.s32.totalorder %s114, %s115
      %p129 = scmp.eq.s32.totalorder %s18, 1
      %p130 = por %p128, %p129
      %p132 = scmp.ne.s32.totalorder %s115, %s131
      %p133 = scmp.eq.s32.totalorder %s18, 0
      %p134 = por %p132, %p133
      %p135 = scmp.le.s32.totalorder 1, %s12
      %p136 = scmp.lt.s32.totalorder %s12, 3
      %p137 = pnand %p135, %p136
      %p138 = pneg %p137
      // Predicated region
      $region9: #{forward.1} parent=5 // pred_check
        _
      $region10: #{forward.1} parent=5 // pred_check_branch
        %140 = sbr.rel (%p137) target = $region12
      $region11: #{forward.1} parent=5 // pred_region
        %s141 = ssub.s32 %s12, 1
        // Predicated region
        $region13: #{forward.1} parent=11 // pred_check
          %p142 = pneg %p59
        $region14: #{forward.1} parent=11 // pred_check_branch
          %144 = sbr.rel (%p142) target = $region16
        $region15: #{forward.1} parent=11 // pred_region
          _
        $region16: #{forward.1} parent=11 // pred_fallthru
          _
        // Predicated region
        $region17: #{forward.1} parent=11 // pred_check
          %p145 = pneg %p80
        $region18: #{forward.1} parent=11 // pred_check_branch
          %147 = sbr.rel (%p145) target = $region20
        $region19: #{forward.1} parent=11 // pred_region
          %s149 = ssub.s32 9728, 9728
          %150 = vsyncadd [#allocation3], %s149
          %s151 = sshll.u32 [#allocation2], 4
          %s152 = int_to_ptr.vmem [resolvable:$true] %s151
          %157 = dma.hbm_to_vmem [thread:$0]  %s2, 9728, %s152, [#allocation3], 64, 64, 4
        $region20: #{forward.1} parent=11 // pred_fallthru
          _
        // Predicated region
        $region21: #{forward.1} parent=11 // pred_check
          %p158 = pneg %p101
        $region22: #{forward.1} parent=11 // pred_check_branch
          %160 = sbr.rel (%p158) target = $region24
        $region23: #{forward.1} parent=11 // pred_region
          %s162 = ssub.s32 3584, 3584
          %163 = vsyncadd [#allocation5], %s162
          %s164 = sshll.u32 [#allocation4], 4
          %s165 = int_to_ptr.vmem [resolvable:$true] %s164
          %170 = dma.hbm_to_vmem [thread:$0]  %s3, 3584, %s165, [#allocation5], 128, 128, 8
        $region24: #{forward.1} parent=11 // pred_fallthru
          _
      $region12: #{forward.1} parent=5 // pred_fallthru
        _
      %p171 = scmp.lt.s32.totalorder %s12, 2
      // Predicated region
      $region25: #{forward.1} parent=5 // pred_check
        %p172 = pneg %p171
      $region26: #{forward.1} parent=5 // pred_check_branch
        %174 = sbr.rel (%p172) target = $region28
      $region27: #{forward.1} parent=5 // pred_region
        // Predicated region
        $region29: #{forward.1} parent=27 // pred_check
          %p175 = pneg %p32
        $region30: #{forward.1} parent=27 // pred_check_branch
          %177 = sbr.rel (%p175) target = $region32
        $region31: #{forward.1} parent=27 // pred_region
          %p178 = scmp.lt.s32.totalorder %s12, 1
          %s179 = scalar_select %p178, %s12, 1
          %s180 = smul.addr %s179, 4
          %s181 = smul.addr %s180, 8
          %s182 = scalar_lea.vmem %s0, %s181
        $region32: #{forward.1} parent=27 // pred_fallthru
          _
      $region28: #{forward.1} parent=5 // pred_fallthru
        _
      %p183 = scmp.le.s32.totalorder 1, %s12
      %p184 = scmp.lt.s32.totalorder %s12, 3
      %p185 = pnand %p183, %p184
      %p186 = pneg %p185
      // Predicated region
      $region33: #{forward.1} parent=5 // pred_check
        _
      $region34: #{forward.1} parent=5 // pred_check_branch
        %188 = sbr.rel (%p185) target = $region36
      $region35: #{forward.1} parent=5 // pred_region
        %s189 = ssub.s32 %s12, 1
        // Predicated region
        $region37: #{forward.1} parent=35 // pred_check
          %p190 = pneg %p80
        $region38: #{forward.1} parent=35 // pred_check_branch
          %192 = sbr.rel (%p190) target = $region40
        $region39: #{forward.1} parent=35 // pred_region
          %193 = dma.done [#allocation3], 9728
        $region40: #{forward.1} parent=35 // pred_fallthru
          _
        // Predicated region
        $region41: #{forward.1} parent=35 // pred_check
          %p194 = pneg %p101
        $region42: #{forward.1} parent=35 // pred_check_branch
          %196 = sbr.rel (%p194) target = $region44
        $region43: #{forward.1} parent=35 // pred_region
          %197 = dma.done [#allocation5], 3584
        $region44: #{forward.1} parent=35 // pred_fallthru
          _
        %p198 = scmp.lt.s32.totalorder %s17, 1
        %s199 = scalar_select %p198, %s17, 1
        %s200 = smul.addr %s199, 4
        %s201 = smul.addr %s200, 8
        %s202 = scalar_lea.vmem %s0, %s201
        %p203 = pneg %p38
        %p204 = pneg %p35
        %p205 = pneg %p59
        %p206 = pneg %p56
        %p207 = pneg %p80
        %p208 = pneg %p77
        %p209 = pneg %p101
        %p210 = pneg %p98
        %p211 = pneg %p127
        %p212 = pneg %p124
        %p213 = scmp.lt.s32.totalorder %s17, 1
        %s214 = scalar_select %p213, %s17, 1
        %s215 = scalar_lea.vmem %s4, %s214
        %p216 = scmp.lt.s32.totalorder %s17, 1
        %s217 = scalar_select %p216, %s17, 1
        %s218 = smul.addr %s217, 4
        %s219 = smul.addr %s218, 8
        %s220 = scalar_lea.vmem %s0, %s219
        %p221 = scmp.lt.s32.totalorder %s17, 1
        %s222 = scalar_select %p221, %s17, 1
        %s223 = scalar_lea.vmem %s4, %s222
        %v225 = vld [vmem:[%s1] sm:$0xf]
        %v226 = vld [vmem:[%s1 + $0x4] sm:$0xf]
        %v227 = vld [vmem:[%s1 + $0x8] sm:$0xf]
        %v228 = vld [vmem:[%s1 + $0xc] sm:$0x1]
        %v229 = vld [vmem:[%s220] sm:$0xff]
        %v230 = vld [vmem:[%s220 + $0x8] sm:$0xff]
        %v231 = vld [vmem:[%s220 + $0x10] sm:$0xff]
        %v232 = vld [vmem:[%s220 + $0x18] sm:$0x1]
        %v233 = vpack.c.bf16 %v230, %v229
        %v234 = vpack.c.bf16 %v232, %v231
        %vm237 = vcmask 1043456
        %v238 = vrot.slane %v233, 4
        %v239 = vrot.slane %v234, 4
        %v240 = vsel %vm237, %v238, %v239
        %vm243 = vcmask 1043456
        %v246 = vsel %vm243, 0, %v238
        %vm248 = vcmask 1040384
        %vm249 = vsmask.f32 256
        %vm250 = vmand %vm248, %vm249
        %v251 = vsel %vm250, %v239, 0
        %253 = vset.pattern.permute.xlu0 0
        %254 = vperm.xlu0 %253, %v225
        %v255 = vpop.permute.xlu0 %254
        %v258 = vunpack.c.l.s4 839922192
        %v259 = vunpack.c.0.s8 %v258
        %v260 = vlaneseq
        %v261 = vshrl.u32 %v260, 7
        %v262 = vsub.s32 %v259, %v261
        %v263 = vrot.slane %v255, %v262
        %265 = vset.pattern.permute.xlu0 0
        %266 = vperm.xlu0 %265, %v226
        %v267 = vpop.permute.xlu0 %266
        %v270 = vunpack.c.l.s4 839922192
        %v271 = vunpack.c.0.s8 %v270
        %v272 = vlaneseq
        %v273 = vshrl.u32 %v272, 7
        %v274 = vsub.s32 %v271, %v273
        %v275 = vrot.slane %v267, %v274
        %277 = vset.pattern.permute.xlu0 0
        %278 = vperm.xlu0 %277, %v227
        %v279 = vpop.permute.xlu0 %278
        %v282 = vunpack.c.l.s4 839922192
        %v283 = vunpack.c.0.s8 %v282
        %v284 = vlaneseq
        %v285 = vshrl.u32 %v284, 7
        %v286 = vsub.s32 %v283, %v285
        %v287 = vrot.slane %v279, %v286
        %289 = vset.pattern.permute.xlu0 0
        %290 = vperm.xlu0 %289, %v228
        %v291 = vpop.permute.xlu0 %290
        %v294 = vunpack.c.l.s4 839922192
        %v295 = vunpack.c.0.s8 %v294
        %v296 = vlaneseq
        %v297 = vshrl.u32 %v296, 7
        %v298 = vsub.s32 %v295, %v297
        %v299 = vrot.slane %v291, %v298
        %v304 = vunpack.c.l.b16 %v263
        %v305 = vunpack.c.l.b16 %v275
        %v306 = vunpack.c.l.b16 %v287
        %v307 = vunpack.c.l.b16 %v299
        %v308 = vpack.c.b16 %v305, %v304
        %v309 = vpack.c.b16 %v307, %v306
        %v310 = vrot.slane %v308, 7
        %v311 = vrot.slane %v309, 7
        %v312 = vsel %vm248, %v310, %v311
        %v315 = vmul.bf16 %v246, %v310
        %v316 = vmul.bf16 %v240, %v312
        %317 = vset.pattern.permute.xlu0 1
        %318 = vperm.xlu0 %317, %v225
        %v319 = vpop.permute.xlu0 %318
        %v322 = vunpack.c.l.s4 839922192
        %v323 = vunpack.c.0.s8 %v322
        %v324 = vlaneseq
        %v325 = vshrl.u32 %v324, 7
        %v326 = vsub.s32 %v323, %v325
        %v327 = vrot.slane %v319, %v326
        %328 = vset.pattern.permute.xlu0 1
        %329 = vperm.xlu0 %328, %v226
        %v330 = vpop.permute.xlu0 %329
        %v333 = vunpack.c.l.s4 839922192
        %v334 = vunpack.c.0.s8 %v333
        %v335 = vlaneseq
        %v336 = vshrl.u32 %v335, 7
        %v337 = vsub.s32 %v334, %v336
        %v338 = vrot.slane %v330, %v337
        %339 = vset.pattern.permute.xlu0 1
        %340 = vperm.xlu0 %339, %v227
        %v341 = vpop.permute.xlu0 %340
        %v344 = vunpack.c.l.s4 839922192
        %v345 = vunpack.c.0.s8 %v344
        %v346 = vlaneseq
        %v347 = vshrl.u32 %v346, 7
        %v348 = vsub.s32 %v345, %v347
        %v349 = vrot.slane %v341, %v348
        %350 = vset.pattern.permute.xlu0 1
        %351 = vperm.xlu0 %350, %v228
        %v352 = vpop.permute.xlu0 %351
        %v355 = vunpack.c.l.s4 839922192
        %v356 = vunpack.c.0.s8 %v355
        %v357 = vlaneseq
        %v358 = vshrl.u32 %v357, 7
        %v359 = vsub.s32 %v356, %v358
        %v360 = vrot.slane %v352, %v359
        %v365 = vunpack.c.l.b16 %v327
        %v366 = vunpack.c.l.b16 %v338
        %v367 = vunpack.c.l.b16 %v349
        %v368 = vunpack.c.l.b16 %v360
        %v369 = vpack.c.b16 %v366, %v365
        %v370 = vpack.c.b16 %v368, %v367
        %vm371 = vsmask.f32 1280
        %v373 = vshrl.u32 %v369, 16
        %v375 = vrot.slane %v373, 6
        %v376 = vshll.u32 %v369, 16
        %v378 = vrot.slane %v376, 7
        %v379 = vor.u32 %v375, %v378
        %v381 = vshrl.u32 %v370, 16
        %v383 = vrot.slane %v381, 6
        %v384 = vshll.u32 %v370, 16
        %v386 = vrot.slane %v384, 7
        %v387 = vor.u32 %v383, %v386
        %v388 = vsel %vm371, %v379, %v387
        %v391 = vmul.bf16 %v246, %v379
        %v392 = vmul.bf16 %v240, %v388
        %393 = vset.pattern.permute.xlu0 2
        %394 = vperm.xlu0 %393, %v225
        %v395 = vpop.permute.xlu0 %394
        %v398 = vunpack.c.l.s4 839922192
        %v399 = vunpack.c.0.s8 %v398
        %v400 = vlaneseq
        %v401 = vshrl.u32 %v400, 7
        %v402 = vsub.s32 %v399, %v401
        %v403 = vrot.slane %v395, %v402
        %404 = vset.pattern.permute.xlu0 2
        %405 = vperm.xlu0 %404, %v226
        %v406 = vpop.permute.xlu0 %405
        %v409 = vunpack.c.l.s4 839922192
        %v410 = vunpack.c.0.s8 %v409
        %v411 = vlaneseq
        %v412 = vshrl.u32 %v411, 7
        %v413 = vsub.s32 %v410, %v412
        %v414 = vrot.slane %v406, %v413
        %415 = vset.pattern.permute.xlu0 2
        %416 = vperm.xlu0 %415, %v227
        %v417 = vpop.permute.xlu0 %416
        %v420 = vunpack.c.l.s4 839922192
        %v421 = vunpack.c.0.s8 %v420
        %v422 = vlaneseq
        %v423 = vshrl.u32 %v422, 7
        %v424 = vsub.s32 %v421, %v423
        %v425 = vrot.slane %v417, %v424
        %426 = vset.pattern.permute.xlu0 2
        %427 = vperm.xlu0 %426, %v228
        %v428 = vpop.permute.xlu0 %427
        %v431 = vunpack.c.l.s4 839922192
        %v432 = vunpack.c.0.s8 %v431
        %v433 = vlaneseq
        %v434 = vshrl.u32 %v433, 7
        %v435 = vsub.s32 %v432, %v434
        %v436 = vrot.slane %v428, %v435
        %v441 = vunpack.c.l.b16 %v403
        %v442 = vunpack.c.l.b16 %v414
        %v443 = vunpack.c.l.b16 %v425
        %v444 = vunpack.c.l.b16 %v436
        %v445 = vpack.c.b16 %v442, %v441
        %v446 = vpack.c.b16 %v444, %v443
        %vm447 = vcmask 1041408
        %v448 = vrot.slane %v445, 6
        %v449 = vrot.slane %v446, 6
        %v450 = vsel %vm447, %v448, %v449
        %v453 = vmul.bf16 %v246, %v448
        %v454 = vmul.bf16 %v240, %v450
        %455 = vset.pattern.permute.xlu0 3
        %456 = vperm.xlu0 %455, %v225
        %v457 = vpop.permute.xlu0 %456
        %v460 = vunpack.c.l.s4 839922192
        %v461 = vunpack.c.0.s8 %v460
        %v462 = vlaneseq
        %v463 = vshrl.u32 %v462, 7
        %v464 = vsub.s32 %v461, %v463
        %v465 = vrot.slane %v457, %v464
        %466 = vset.pattern.permute.xlu0 3
        %467 = vperm.xlu0 %466, %v226
        %v468 = vpop.permute.xlu0 %467
        %v471 = vunpack.c.l.s4 839922192
        %v472 = vunpack.c.0.s8 %v471
        %v473 = vlaneseq
        %v474 = vshrl.u32 %v473, 7
        %v475 = vsub.s32 %v472, %v474
        %v476 = vrot.slane %v468, %v475
        %477 = vset.pattern.permute.xlu0 3
        %478 = vperm.xlu0 %477, %v227
        %v479 = vpop.permute.xlu0 %478
        %v482 = vunpack.c.l.s4 839922192
        %v483 = vunpack.c.0.s8 %v482
        %v484 = vlaneseq
        %v485 = vshrl.u32 %v484, 7
        %v486 = vsub.s32 %v483, %v485
        %v487 = vrot.slane %v479, %v486
        %488 = vset.pattern.permute.xlu0 3
        %489 = vperm.xlu0 %488, %v228
        %v490 = vpop.permute.xlu0 %489
        %v493 = vunpack.c.l.s4 839922192
        %v494 = vunpack.c.0.s8 %v493
        %v495 = vlaneseq
        %v496 = vshrl.u32 %v495, 7
        %v497 = vsub.s32 %v494, %v496
        %v498 = vrot.slane %v490, %v497
        %v503 = vunpack.c.l.b16 %v465
        %v504 = vunpack.c.l.b16 %v476
        %v505 = vunpack.c.l.b16 %v487
        %v506 = vunpack.c.l.b16 %v498
        %v507 = vpack.c.b16 %v504, %v503
        %v508 = vpack.c.b16 %v506, %v505
        %vm509 = vsmask.f32 3328
        %v511 = vshrl.u32 %v507, 16
        %v513 = vrot.slane %v511, 4
        %v514 = vshll.u32 %v507, 16
        %v516 = vrot.slane %v514, 5
        %v517 = vor.u32 %v513, %v516
        %v519 = vshrl.u32 %v508, 16
        %v521 = vrot.slane %v519, 4
        %v522 = vshll.u32 %v508, 16
        %v524 = vrot.slane %v522, 5
        %v525 = vor.u32 %v521, %v524
        %v526 = vsel %vm509, %v517, %v525
        %v529 = vmul.bf16 %v246, %v517
        %v530 = vmul.bf16 %v240, %v526
        %531 = vset.pattern.permute.xlu0 5
        %532 = vperm.xlu0 %531, %v225
        %v533 = vpop.permute.xlu0 %532
        %v536 = vunpack.c.l.s4 839922192
        %v537 = vunpack.c.0.s8 %v536
        %v538 = vlaneseq
        %v539 = vshrl.u32 %v538, 7
        %v540 = vsub.s32 %v537, %v539
        %v541 = vrot.slane %v533, %v540
        %542 = vset.pattern.permute.xlu0 5
        %543 = vperm.xlu0 %542, %v226
        %v544 = vpop.permute.xlu0 %543
        %v547 = vunpack.c.l.s4 839922192
        %v548 = vunpack.c.0.s8 %v547
        %v549 = vlaneseq
        %v550 = vshrl.u32 %v549, 7
        %v551 = vsub.s32 %v548, %v550
        %v552 = vrot.slane %v544, %v551
        %553 = vset.pattern.permute.xlu0 5
        %554 = vperm.xlu0 %553, %v227
        %v555 = vpop.permute.xlu0 %554
        %v558 = vunpack.c.l.s4 839922192
        %v559 = vunpack.c.0.s8 %v558
        %v560 = vlaneseq
        %v561 = vshrl.u32 %v560, 7
        %v562 = vsub.s32 %v559, %v561
        %v563 = vrot.slane %v555, %v562
        %564 = vset.pattern.permute.xlu0 5
        %565 = vperm.xlu0 %564, %v228
        %v566 = vpop.permute.xlu0 %565
        %v569 = vunpack.c.l.s4 839922192
        %v570 = vunpack.c.0.s8 %v569
        %v571 = vlaneseq
        %v572 = vshrl.u32 %v571, 7
        %v573 = vsub.s32 %v570, %v572
        %v574 = vrot.slane %v566, %v573
        %v579 = vunpack.c.l.b16 %v541
        %v580 = vunpack.c.l.b16 %v552
        %v581 = vunpack.c.l.b16 %v563
        %v582 = vunpack.c.l.b16 %v574
        %v583 = vpack.c.b16 %v580, %v579
        %v584 = vpack.c.b16 %v582, %v581
        %vm585 = vsmask.f32 4352
        %v587 = vshrl.u32 %v583, 16
        %v589 = vrot.slane %v587, 3
        %v590 = vshll.u32 %v583, 16
        %v592 = vrot.slane %v590, 4
        %v593 = vor.u32 %v589, %v592
        %v595 = vshrl.u32 %v584, 16
        %v597 = vrot.slane %v595, 3
        %v598 = vshll.u32 %v584, 16
        %v600 = vrot.slane %v598, 4
        %v601 = vor.u32 %v597, %v600
        %v602 = vsel %vm585, %v593, %v601
        %v606 = vmul.bf16 %v246, %v593
        %v607 = vmul.bf16 %v240, %v602
        %v608 = vmul.bf16 %v251, %v601
        %609 = vset.pattern.permute.xlu0 6
        %610 = vperm.xlu0 %609, %v225
        %v611 = vpop.permute.xlu0 %610
        %v614 = vunpack.c.l.s4 839922192
        %v615 = vunpack.c.0.s8 %v614
        %v616 = vlaneseq
        %v617 = vshrl.u32 %v616, 7
        %v618 = vsub.s32 %v615, %v617
        %v619 = vrot.slane %v611, %v618
        %620 = vset.pattern.permute.xlu0 6
        %621 = vperm.xlu0 %620, %v226
        %v622 = vpop.permute.xlu0 %621
        %v625 = vunpack.c.l.s4 839922192
        %v626 = vunpack.c.0.s8 %v625
        %v627 = vlaneseq
        %v628 = vshrl.u32 %v627, 7
        %v629 = vsub.s32 %v626, %v628
        %v630 = vrot.slane %v622, %v629
        %631 = vset.pattern.permute.xlu0 6
        %632 = vperm.xlu0 %631, %v227
        %v633 = vpop.permute.xlu0 %632
        %v636 = vunpack.c.l.s4 839922192
        %v637 = vunpack.c.0.s8 %v636
        %v638 = vlaneseq
        %v639 = vshrl.u32 %v638, 7
        %v640 = vsub.s32 %v637, %v639
        %v641 = vrot.slane %v633, %v640
        %642 = vset.pattern.permute.xlu0 6
        %643 = vperm.xlu0 %642, %v228
        %v644 = vpop.permute.xlu0 %643
        %v647 = vunpack.c.l.s4 839922192
        %v648 = vunpack.c.0.s8 %v647
        %v649 = vlaneseq
        %v650 = vshrl.u32 %v649, 7
        %v651 = vsub.s32 %v648, %v650
        %v652 = vrot.slane %v644, %v651
        %v657 = vunpack.c.l.b16 %v619
        %v658 = vunpack.c.l.b16 %v630
        %v659 = vunpack.c.l.b16 %v641
        %v660 = vunpack.c.l.b16 %v652
        %v661 = vpack.c.b16 %v658, %v657
        %v662 = vpack.c.b16 %v660, %v659
        %vm663 = vcmask 1045504
        %v664 = vrot.slane %v661, 2
        %v665 = vrot.slane %v662, 2
        %v666 = vsel %vm663, %v664, %v665
        %v670 = vmul.bf16 %v246, %v664
        %v671 = vmul.bf16 %v240, %v666
        %v672 = vmul.bf16 %v251, %v665
        %673 = vset.pattern.permute.xlu0 7
        %674 = vperm.xlu0 %673, %v225
        %v675 = vpop.permute.xlu0 %674
        %v678 = vunpack.c.l.s4 839922192
        %v679 = vunpack.c.0.s8 %v678
        %v680 = vlaneseq
        %v681 = vshrl.u32 %v680, 7
        %v682 = vsub.s32 %v679, %v681
        %v683 = vrot.slane %v675, %v682
        %684 = vset.pattern.permute.xlu0 7
        %685 = vperm.xlu0 %684, %v226
        %v686 = vpop.permute.xlu0 %685
        %v689 = vunpack.c.l.s4 839922192
        %v690 = vunpack.c.0.s8 %v689
        %v691 = vlaneseq
        %v692 = vshrl.u32 %v691, 7
        %v693 = vsub.s32 %v690, %v692
        %v694 = vrot.slane %v686, %v693
        %695 = vset.pattern.permute.xlu0 7
        %696 = vperm.xlu0 %695, %v227
        %v697 = vpop.permute.xlu0 %696
        %v700 = vunpack.c.l.s4 839922192
        %v701 = vunpack.c.0.s8 %v700
        %v702 = vlaneseq
        %v703 = vshrl.u32 %v702, 7
        %v704 = vsub.s32 %v701, %v703
        %v705 = vrot.slane %v697, %v704
        %706 = vset.pattern.permute.xlu0 7
        %707 = vperm.xlu0 %706, %v228
        %v708 = vpop.permute.xlu0 %707
        %v711 = vunpack.c.l.s4 839922192
        %v712 = vunpack.c.0.s8 %v711
        %v713 = vlaneseq
        %v714 = vshrl.u32 %v713, 7
        %v715 = vsub.s32 %v712, %v714
        %v716 = vrot.slane %v708, %v715
        %v721 = vunpack.c.l.b16 %v683
        %v722 = vunpack.c.l.b16 %v694
        %v723 = vunpack.c.l.b16 %v705
        %v724 = vunpack.c.l.b16 %v716
        %v725 = vpack.c.b16 %v722, %v721
        %v726 = vpack.c.b16 %v724, %v723
        %vm727 = vsmask.f32 6400
        %v729 = vshrl.u32 %v725, 16
        %v731 = vrot.slane %v729, 1
        %v732 = vshll.u32 %v725, 16
        %v734 = vrot.slane %v732, 2
        %v735 = vor.u32 %v731, %v734
        %v737 = vshrl.u32 %v726, 16
        %v739 = vrot.slane %v737, 1
        %v740 = vshll.u32 %v726, 16
        %v742 = vrot.slane %v740, 2
        %v743 = vor.u32 %v739, %v742
        %v744 = vsel %vm727, %v735, %v743
        %v748 = vmul.bf16 %v246, %v735
        %v749 = vmul.bf16 %v240, %v744
        %v750 = vmul.bf16 %v251, %v743
        %751 = vset.pattern.permute.xlu0 8
        %752 = vperm.xlu0 %751, %v225
        %v753 = vpop.permute.xlu0 %752
        %v756 = vunpack.c.l.s4 839922192
        %v757 = vunpack.c.0.s8 %v756
        %v758 = vlaneseq
        %v759 = vshrl.u32 %v758, 7
        %v760 = vsub.s32 %v757, %v759
        %v761 = vrot.slane %v753, %v760
        %762 = vset.pattern.permute.xlu0 8
        %763 = vperm.xlu0 %762, %v226
        %v764 = vpop.permute.xlu0 %763
        %v767 = vunpack.c.l.s4 839922192
        %v768 = vunpack.c.0.s8 %v767
        %v769 = vlaneseq
        %v770 = vshrl.u32 %v769, 7
        %v771 = vsub.s32 %v768, %v770
        %v772 = vrot.slane %v764, %v771
        %773 = vset.pattern.permute.xlu0 8
        %774 = vperm.xlu0 %773, %v227
        %v775 = vpop.permute.xlu0 %774
        %v778 = vunpack.c.l.s4 839922192
        %v779 = vunpack.c.0.s8 %v778
        %v780 = vlaneseq
        %v781 = vshrl.u32 %v780, 7
        %v782 = vsub.s32 %v779, %v781
        %v783 = vrot.slane %v775, %v782
        %784 = vset.pattern.permute.xlu0 8
        %785 = vperm.xlu0 %784, %v228
        %v786 = vpop.permute.xlu0 %785
        %v789 = vunpack.c.l.s4 839922192
        %v790 = vunpack.c.0.s8 %v789
        %v791 = vlaneseq
        %v792 = vshrl.u32 %v791, 7
        %v793 = vsub.s32 %v790, %v792
        %v794 = vrot.slane %v786, %v793
        %v799 = vunpack.c.l.b16 %v761
        %v800 = vunpack.c.l.b16 %v772
        %v801 = vunpack.c.l.b16 %v783
        %v802 = vunpack.c.l.b16 %v794
        %v803 = vpack.c.b16 %v800, %v799
        %v804 = vpack.c.b16 %v802, %v801
        %vm805 = vcmask 1046528
        %v806 = vrot.slane %v803, 1
        %v807 = vrot.slane %v804, 1
        %v808 = vsel %vm805, %v806, %v807
        %v812 = vmul.bf16 %v246, %v806
        %v813 = vmul.bf16 %v240, %v808
        %v814 = vmul.bf16 %v251, %v807
        %vm815 = vsmask.f32 7424
        %v817 = vshrl.u32 %v391, 16
        %v819 = vshll.u32 %v391, 16
        %v821 = vrot.slane %v819, 1
        %v822 = vor.u32 %v817, %v821
        %v824 = vshll.u32 %v392, 16
        %v826 = vrot.slane %v824, 1
        %v827 = vsel %vm815, %v822, %v826
        %v828 = vshrl.u32 %v392, 16
        %v830 = vor.u32 %v828, %v826
        %831 = vrot.lane.b32.xlu0 %v827, 2
        %v832 = vpop.permute.xlu0 %831
        %833 = vrot.lane.b32.xlu0 %v830, 2
        %v834 = vpop.permute.xlu0 %833
        %v837 = vrot.slane %v453, 1
        %v838 = vrot.slane %v454, 1
        %v839 = vsel %vm805, %v837, %v838
        %840 = vrot.lane.b32.xlu0 %v839, 4
        %v841 = vpop.permute.xlu0 %840
        %842 = vrot.lane.b32.xlu0 %v838, 4
        %v843 = vpop.permute.xlu0 %842
        %vm844 = vsmask.f32 5376
        %v846 = vshrl.u32 %v529, 16
        %v848 = vrot.slane %v846, 2
        %v849 = vshll.u32 %v529, 16
        %v851 = vrot.slane %v849, 3
        %v852 = vor.u32 %v848, %v851
        %v854 = vshrl.u32 %v530, 16
        %v856 = vrot.slane %v854, 2
        %v857 = vshll.u32 %v530, 16
        %v859 = vrot.slane %v857, 3
        %v860 = vor.u32 %v856, %v859
        %v861 = vsel %vm844, %v852, %v860
        %862 = vrot.lane.b32.xlu0 %v861, 6
        %v863 = vpop.permute.xlu0 %862
        %864 = vrot.lane.b32.xlu0 %v860, 6
        %v865 = vpop.permute.xlu0 %864
        %vm868 = vcmask 1044480
        %v869 = vrot.slane %v246, 3
        %v870 = vrot.slane %v240, 3
        %v871 = vsel %vm868, %v869, %v870
        %v872 = vrot.slane %v251, 3
        %v873 = vsel %vm868, %v870, %v872
        %874 = vrot.lane.b32.xlu0 %v871, 8
        %v875 = vpop.permute.xlu0 %874
        %876 = vrot.lane.b32.xlu0 %v873, 8
        %v877 = vpop.permute.xlu0 %876
        %v879 = vshrl.u32 %v606, 16
        %v881 = vrot.slane %v879, 3
        %v882 = vshll.u32 %v606, 16
        %v884 = vrot.slane %v882, 4
        %v885 = vor.u32 %v881, %v884
        %v887 = vshrl.u32 %v607, 16
        %v889 = vrot.slane %v887, 3
        %v890 = vshll.u32 %v607, 16
        %v892 = vrot.slane %v890, 4
        %v893 = vor.u32 %v889, %v892
        %v894 = vsel %vm585, %v885, %v893
        %v896 = vshrl.u32 %v608, 16
        %v898 = vrot.slane %v896, 3
        %v899 = vshll.u32 %v608, 16
        %v901 = vrot.slane %v899, 4
        %v902 = vor.u32 %v898, %v901
        %v903 = vsel %vm585, %v893, %v902
        %904 = vrot.lane.b32.xlu0 %v894, 10
        %v905 = vpop.permute.xlu0 %904
        %906 = vrot.lane.b32.xlu0 %v903, 10
        %v907 = vpop.permute.xlu0 %906
        %vm911 = vcmask 1042432
        %v912 = vrot.slane %v670, 5
        %v913 = vrot.slane %v671, 5
        %v914 = vsel %vm911, %v912, %v913
        %v915 = vrot.slane %v672, 5
        %v916 = vsel %vm911, %v913, %v915
        %917 = vrot.lane.b32.xlu0 %v914, 12
        %v918 = vpop.permute.xlu0 %917
        %919 = vrot.lane.b32.xlu0 %v916, 12
        %v920 = vpop.permute.xlu0 %919
        %vm921 = vsmask.f32 2304
        %v923 = vshrl.u32 %v748, 16
        %v925 = vrot.slane %v923, 5
        %v926 = vshll.u32 %v748, 16
        %v928 = vrot.slane %v926, 6
        %v929 = vor.u32 %v925, %v928
        %v931 = vshrl.u32 %v749, 16
        %v933 = vrot.slane %v931, 5
        %v934 = vshll.u32 %v749, 16
        %v936 = vrot.slane %v934, 6
        %v937 = vor.u32 %v933, %v936
        %v938 = vsel %vm921, %v929, %v937
        %v940 = vshrl.u32 %v750, 16
        %v942 = vrot.slane %v940, 5
        %v943 = vshll.u32 %v750, 16
        %v945 = vrot.slane %v943, 6
        %v946 = vor.u32 %v942, %v945
        %v947 = vsel %vm921, %v937, %v946
        %948 = vrot.lane.b32.xlu0 %v938, 14
        %v949 = vpop.permute.xlu0 %948
        %950 = vrot.lane.b32.xlu0 %v947, 14
        %v951 = vpop.permute.xlu0 %950
        %v955 = vrot.slane %v812, 6
        %v956 = vrot.slane %v813, 6
        %v957 = vsel %vm447, %v955, %v956
        %v958 = vrot.slane %v814, 6
        %v959 = vsel %vm447, %v956, %v958
        %960 = vrot.lane.b32.xlu0 %v957, 16
        %v961 = vpop.permute.xlu0 %960
        %962 = vrot.lane.b32.xlu0 %v959, 16
        %v963 = vpop.permute.xlu0 %962
        %vm964 = vcmask 15360
        %v967 = vsel %vm964, %v315, %v832
        %v970 = vsel %vm964, %v316, %v834
        %vm971 = vcmask 31744
        %v973 = vsel %vm971, %v967, %v841
        %v975 = vsel %vm971, %v970, %v843
        %vm976 = vcmask 48128
        %v978 = vsel %vm976, %v973, %v863
        %v980 = vsel %vm976, %v975, %v865
        %vm981 = vcmask 64512
        %v983 = vsel %vm981, %v978, %v875
        %v985 = vsel %vm981, %v980, %v877
        %vm986 = vcmask 80896
        %v988 = vsel %vm986, %v983, %v905
        %v990 = vsel %vm986, %v985, %v907
        %vm991 = vcmask 97280
        %v993 = vsel %vm991, %v988, %v918
        %v995 = vsel %vm991, %v990, %v920
        %vm996 = vcmask 113664
        %v998 = vsel %vm996, %v993, %v949
        %v1000 = vsel %vm996, %v995, %v951
        %vm1001 = vcmask 130048
        %v1003 = vsel %vm1001, %v998, %v961
        %v1005 = vsel %vm1001, %v1000, %v963
        %v1006 = vld [vmem:[#allocation2] sm:$0xf]
        %v1007 = vld [vmem:[#allocation2 + $0x4] sm:$0xf]
        %v1008 = vld [vmem:[#allocation2 + $0x8] sm:$0x1]
        %v1011 = vrot.slane %v1003, 1
        %v1012 = vrot.slane %v1005, 1
        %v1013 = vsel %vm805, %v1011, %v1012
        %v1017 = vunpack.c.l.b16 %v1006
        %v1018 = vunpack.c.l.b16 %v1007
        %v1019 = vunpack.c.l.b16 %v1008
        %v1020 = vpack.c.b16 %v1018, %v1017
        %v1021 = vpack.c.b16 %v1019, %v1019
        %vm1023 = vcmask 146432
        %v1025 = vsel %vm1023, %v1013, 0
        %v1028 = vsel %vm1023, %v1012, 0
        %vm1030 = vcmask 1040384
        %v1032 = vsel %vm1030, %v1021, 0
        %1034 = vmatprep.subr.bf16.mxu0 0
        %1035 = vmatpush1.bf16.msra.mxu0 %v1020
        %1036 = vmatprep.subr.bf16.mxu0 0
        %1037 = vmatpush1.bf16.msra.mxu0 %v1032
        %1038 = vmatprep.subr.bf16.mxu0 0
        %1039 = vmatpush1.bf16.msra.mxu0 0
        %1040 = vmatprep.subr.bf16.mxu0 0
        %1041 = vmatpush1.bf16.msra.mxu0 0
        %1042 = vmatprep.subr.bf16.mxu0 0
        %1043 = vmatpush1.bf16.msra.mxu0 0
        %1044 = vmatprep.subr.bf16.mxu0 0
        %1045 = vmatpush1.bf16.msra.mxu0 0
        %1046 = vmatprep.subr.bf16.mxu0 0
        %1047 = vmatpush1.bf16.msra.mxu0 0
        %1048 = vmatprep.subr.bf16.mxu0 0
        %1049 = vmatpush1.bf16.msra.mxu0 0
        %1050 = vmatprep.subr.bf16.mxu0 0
        %1051 = vmatpush1.bf16.msra.mxu0 0
        %1052 = vmatprep.subr.bf16.mxu0 0
        %1053 = vmatpush1.bf16.msra.mxu0 0
        %1054 = vmatprep.subr.bf16.mxu0 0
        %1055 = vmatpush1.bf16.msra.mxu0 0
        %1056 = vmatprep.subr.bf16.mxu0 0
        %1057 = vmatpush1.bf16.msra.mxu0 0
        %1058 = vmatprep.subr.bf16.mxu0 0
        %1059 = vmatpush1.bf16.msra.mxu0 0
        %1060 = vmatprep.subr.bf16.mxu0 0
        %1061 = vmatpush1.bf16.msra.mxu0 0
        %1062 = vmatprep.subr.bf16.mxu0 0
        %1063 = vmatpush1.bf16.msra.mxu0 0
        %1064 = vmatprep.subr.bf16.mxu0 0
        %1065 = vmatpush1.bf16.msra.mxu0 0
        %1066 = vmatprep.mubr.bf16.mxu0 0
        %1067 = vmatmul.mubr.bf16.gmra.mrb[0].mxu0 %v1025
        %v1068 = vpop.f32.mrb[0].mxu0
        %v1069 = vadd.f32 0.0, %v1068
        %v1070 = vpop.f32.mrb[0].mxu0
        %v1071 = vpop.f32.mrb[0].mxu0
        %v1072 = vadd.f32 0.0, %v1071
        %v1073 = vpop.f32.mrb[0].mxu0
        %1074 = vmatprep.mubr.bf16.mxu0 0
        %1075 = vmatmul.mubr.bf16.gmra.mrb[0].mxu0 %v1028
        %v1076 = vpop.f32.mrb[0].mxu0
        %v1077 = vadd.f32 0.0, %v1076
        %v1078 = vpop.f32.mrb[0].mxu0
        %v1079 = vpop.f32.mrb[0].mxu0
        %v1080 = vadd.f32 0.0, %v1079
        %v1081 = vpop.f32.mrb[0].mxu0
        %1082 = vdwg.mxu0
        %v1083 = vld [vmem:[#allocation4] sm:$0x1]
        %v1084 = vlaneseq
        %v1085 = vshrl.u32 %v1084, 7
        %v1086 = vsub.s32 0, %v1085
        %v1087 = vrot.slane %v1083, %v1086
        %v1088 = vmul.f32 %v1069, %v1087
        %v1089 = vmul.f32 %v1072, %v1087
        %v1090 = vmul.f32 %v1077, %v1087
        %v1091 = vmul.f32 %v1080, %v1087
        %v1092 = vld [vmem:[#allocation4 + $0x8] sm:$0x1]
        %v1093 = vlaneseq
        %v1094 = vshrl.u32 %v1093, 7
        %v1095 = vsub.s32 0, %v1094
        %v1096 = vrot.slane %v1092, %v1095
        %v1097 = vadd.f32 %v1088, %v1096
        %v1098 = vadd.f32 %v1089, %v1096
        %v1099 = vadd.f32 %v1090, %v1096
        %v1100 = vadd.f32 %v1091, %v1096
        %v1101 = vmax.f32 %v1097, 0.0
        %v1102 = vmax.f32 %v1098, 0.0
        %v1103 = vmax.f32 %v1099, 0.0
        %v1104 = vmax.f32 %v1100, 0.0
        %v1105 = vpack.c.bf16 %v1102, %v1101
        %v1106 = vpack.c.bf16 %v1104, %v1103
        %v1109 = vrot.slane %v1105, 4
        %v1110 = vrot.slane %v1106, 4
        %v1111 = vsel %vm237, %v1109, %v1110
        %v1115 = vsel %vm243, 0, %v1109
        %v1117 = vsel %vm250, %v1110, 0
        %v1118 = vmul.bf16 %v1115, %v310
        %v1119 = vmul.bf16 %v1111, %v312
        %v1120 = vmul.bf16 %v1115, %v379
        %v1121 = vmul.bf16 %v1111, %v388
        %v1122 = vmul.bf16 %v1115, %v448
        %v1123 = vmul.bf16 %v1111, %v450
        %v1124 = vmul.bf16 %v1115, %v517
        %v1125 = vmul.bf16 %v1111, %v526
        %v1126 = vmul.bf16 %v1115, %v593
        %v1127 = vmul.bf16 %v1111, %v602
        %v1128 = vmul.bf16 %v1117, %v601
        %v1129 = vmul.bf16 %v1115, %v664
        %v1130 = vmul.bf16 %v1111, %v666
        %v1131 = vmul.bf16 %v1117, %v665
        %v1132 = vmul.bf16 %v1115, %v735
        %v1133 = vmul.bf16 %v1111, %v744
        %v1134 = vmul.bf16 %v1117, %v743
        %v1135 = vmul.bf16 %v1115, %v806
        %v1136 = vmul.bf16 %v1111, %v808
        %v1137 = vmul.bf16 %v1117, %v807
        %v1139 = vshrl.u32 %v1120, 16
        %v1141 = vshll.u32 %v1120, 16
        %v1143 = vrot.slane %v1141, 1
        %v1144 = vor.u32 %v1139, %v1143
        %v1146 = vshll.u32 %v1121, 16
        %v1148 = vrot.slane %v1146, 1
        %v1149 = vsel %vm815, %v1144, %v1148
        %v1150 = vshrl.u32 %v1121, 16
        %v1152 = vor.u32 %v1150, %v1148
        %1153 = vrot.lane.b32.xlu0 %v1149, 32
        %v1154 = vpop.permute.xlu0 %1153
        %1155 = vrot.lane.b32.xlu0 %v1152, 32
        %v1156 = vpop.permute.xlu0 %1155
        %v1159 = vrot.slane %v1122, 1
        %v1160 = vrot.slane %v1123, 1
        %v1161 = vsel %vm805, %v1159, %v1160
        %1162 = vrot.lane.b32.xlu0 %v1161, 64
        %v1163 = vpop.permute.xlu0 %1162
        %1164 = vrot.lane.b32.xlu0 %v1160, 64
        %v1165 = vpop.permute.xlu0 %1164
        %v1167 = vshrl.u32 %v1124, 16
        %v1169 = vrot.slane %v1167, 2
        %v1170 = vshll.u32 %v1124, 16
        %v1172 = vrot.slane %v1170, 3
        %v1173 = vor.u32 %v1169, %v1172
        %v1175 = vshrl.u32 %v1125, 16
        %v1177 = vrot.slane %v1175, 2
        %v1178 = vshll.u32 %v1125, 16
        %v1180 = vrot.slane %v1178, 3
        %v1181 = vor.u32 %v1177, %v1180
        %v1182 = vsel %vm844, %v1173, %v1181
        %1183 = vrot.lane.b32.xlu0 %v1182, 96
        %v1184 = vpop.permute.xlu0 %1183
        %1185 = vrot.lane.b32.xlu0 %v1181, 96
        %v1186 = vpop.permute.xlu0 %1185
        %v1189 = vrot.slane %v1115, 3
        %v1190 = vrot.slane %v1111, 3
        %v1191 = vsel %vm868, %v1189, %v1190
        %v1192 = vrot.slane %v1117, 3
        %v1193 = vsel %vm868, %v1190, %v1192
        %v1195 = vshrl.u32 %v1126, 16
        %v1197 = vrot.slane %v1195, 3
        %v1198 = vshll.u32 %v1126, 16
        %v1200 = vrot.slane %v1198, 4
        %v1201 = vor.u32 %v1197, %v1200
        %v1203 = vshrl.u32 %v1127, 16
        %v1205 = vrot.slane %v1203, 3
        %v1206 = vshll.u32 %v1127, 16
        %v1208 = vrot.slane %v1206, 4
        %v1209 = vor.u32 %v1205, %v1208
        %v1210 = vsel %vm585, %v1201, %v1209
        %v1212 = vshrl.u32 %v1128, 16
        %v1214 = vrot.slane %v1212, 3
        %v1215 = vshll.u32 %v1128, 16
        %v1217 = vrot.slane %v1215, 4
        %v1218 = vor.u32 %v1214, %v1217
        %v1219 = vsel %vm585, %v1209, %v1218
        %1220 = vrot.lane.b32.xlu0 %v1210, 32
        %v1221 = vpop.permute.xlu0 %1220
        %1222 = vrot.lane.b32.xlu0 %v1219, 32
        %v1223 = vpop.permute.xlu0 %1222
        %v1227 = vrot.slane %v1129, 5
        %v1228 = vrot.slane %v1130, 5
        %v1229 = vsel %vm911, %v1227, %v1228
        %v1230 = vrot.slane %v1131, 5
        %v1231 = vsel %vm911, %v1228, %v1230
        %1232 = vrot.lane.b32.xlu0 %v1229, 64
        %v1233 = vpop.permute.xlu0 %1232
        %1234 = vrot.lane.b32.xlu0 %v1231, 64
        %v1235 = vpop.permute.xlu0 %1234
        %v1237 = vshrl.u32 %v1132, 16
        %v1239 = vrot.slane %v1237, 5
        %v1240 = vshll.u32 %v1132, 16
        %v1242 = vrot.slane %v1240, 6
        %v1243 = vor.u32 %v1239, %v1242
        %v1245 = vshrl.u32 %v1133, 16
        %v1247 = vrot.slane %v1245, 5
        %v1248 = vshll.u32 %v1133, 16
        %v1250 = vrot.slane %v1248, 6
        %v1251 = vor.u32 %v1247, %v1250
        %v1252 = vsel %vm921, %v1243, %v1251
        %v1254 = vshrl.u32 %v1134, 16
        %v1256 = vrot.slane %v1254, 5
        %v1257 = vshll.u32 %v1134, 16
        %v1259 = vrot.slane %v1257, 6
        %v1260 = vor.u32 %v1256, %v1259
        %v1261 = vsel %vm921, %v1251, %v1260
        %1262 = vrot.lane.b32.xlu0 %v1252, 96
        %v1263 = vpop.permute.xlu0 %1262
        %1264 = vrot.lane.b32.xlu0 %v1261, 96
        %v1265 = vpop.permute.xlu0 %1264
        %v1269 = vrot.slane %v1135, 6
        %v1270 = vrot.slane %v1136, 6
        %v1271 = vsel %vm447, %v1269, %v1270
        %v1272 = vrot.slane %v1137, 6
        %v1273 = vsel %vm447, %v1270, %v1272
        %vm1274 = vcmask 261120
        %v1277 = vsel %vm1274, %v1118, %v1154
        %v1280 = vsel %vm1274, %v1119, %v1156
        %vm1281 = vcmask 523264
        %v1283 = vsel %vm1281, %v1277, %v1163
        %v1285 = vsel %vm1281, %v1280, %v1165
        %vm1286 = vcmask 785408
        %v1288 = vsel %vm1286, %v1283, %v1184
        %v1290 = vsel %vm1286, %v1285, %v1186
        %v1293 = vsel %vm1274, %v1191, %v1221
        %v1296 = vsel %vm1274, %v1193, %v1223
        %v1298 = vsel %vm1281, %v1293, %v1233
        %v1300 = vsel %vm1281, %v1296, %v1235
        %v1302 = vsel %vm1286, %v1298, %v1263
        %v1304 = vsel %vm1286, %v1300, %v1265
        %v1305 = vld [vmem:[#allocation2 + $0x10] sm:$0xf]
        %v1306 = vld [vmem:[#allocation2 + $0x14] sm:$0xf]
        %v1307 = vld [vmem:[#allocation2 + $0x18] sm:$0xf]
        %v1308 = vld [vmem:[#allocation2 + $0x1c] sm:$0xf]
        %v1309 = vld [vmem:[#allocation2 + $0x20] sm:$0xf]
        %v1310 = vld [vmem:[#allocation2 + $0x24] sm:$0xf]
        %v1311 = vld [vmem:[#allocation2 + $0x28] sm:$0xf]
        %v1312 = vld [vmem:[#allocation2 + $0x2c] sm:$0xf]
        %v1313 = vld [vmem:[#allocation2 + $0x30] sm:$0xf]
        %v1314 = vld [vmem:[#allocation2 + $0x34] sm:$0xf]
        %v1315 = vld [vmem:[#allocation2 + $0x38] sm:$0xf]
        %v1316 = vld [vmem:[#allocation2 + $0x3c] sm:$0xf]
        %v1317 = vld [vmem:[#allocation2 + $0x40] sm:$0xf]
        %v1318 = vld [vmem:[#allocation2 + $0x44] sm:$0xf]
        %v1319 = vld [vmem:[#allocation2 + $0x48] sm:$0xf]
        %v1320 = vld [vmem:[#allocation2 + $0x4c] sm:$0xf]
        %v1321 = vld [vmem:[#allocation2 + $0x50] sm:$0xf]
        %v1322 = vld [vmem:[#allocation2 + $0x54] sm:$0xf]
        %v1323 = vld [vmem:[#allocation2 + $0x58] sm:$0xf]
        %v1324 = vld [vmem:[#allocation2 + $0x5c] sm:$0xf]
        %v1325 = vld [vmem:[#allocation2 + $0x60] sm:$0xf]
        %v1326 = vld [vmem:[#allocation2 + $0x64] sm:$0xf]
        %v1327 = vld [vmem:[#allocation2 + $0x68] sm:$0xf]
        %v1328 = vld [vmem:[#allocation2 + $0x6c] sm:$0xf]
        %v1329 = vld [vmem:[#allocation2 + $0x70] sm:$0xf]
        %v1330 = vld [vmem:[#allocation2 + $0x74] sm:$0xf]
        %v1331 = vld [vmem:[#allocation2 + $0x78] sm:$0xf]
        %v1332 = vld [vmem:[#allocation2 + $0x7c] sm:$0xf]
        %v1333 = vld [vmem:[#allocation2 + $0x80] sm:$0xf]
        %v1334 = vld [vmem:[#allocation2 + $0x84] sm:$0xf]
        %v1335 = vld [vmem:[#allocation2 + $0x88] sm:$0xf]
        %v1336 = vld [vmem:[#allocation2 + $0x8c] sm:$0xf]
        %v1337 = vld [vmem:[#allocation2 + $0x90] sm:$0xf]
        %v1338 = vld [vmem:[#allocation2 + $0x94] sm:$0xf]
        %v1339 = vld [vmem:[#allocation2 + $0x98] sm:$0xf]
        %v1340 = vld [vmem:[#allocation2 + $0x9c] sm:$0xf]
        %v1345 = vrot.slane %v1288, 1
        %v1346 = vrot.slane %v1290, 1
        %v1347 = vsel %vm805, %v1345, %v1346
        %v1348 = vrot.slane %v1302, 1
        %v1349 = vrot.slane %v1304, 1
        %v1350 = vsel %vm805, %v1348, %v1349
        %v1351 = vrot.slane %v1271, 1
        %v1352 = vrot.slane %v1273, 1
        %v1353 = vsel %vm805, %v1351, %v1352
        %v1394 = vunpack.c.l.b16 %v1305
        %v1395 = vunpack.c.l.b16 %v1306
        %v1396 = vunpack.c.l.b16 %v1307
        %v1397 = vunpack.c.l.b16 %v1308
        %v1398 = vunpack.c.l.b16 %v1309
        %v1399 = vunpack.c.l.b16 %v1310
        %v1400 = vunpack.c.l.b16 %v1311
        %v1401 = vunpack.c.l.b16 %v1312
        %v1402 = vunpack.c.l.b16 %v1313
        %v1403 = vunpack.c.l.b16 %v1314
        %v1404 = vunpack.c.l.b16 %v1315
        %v1405 = vunpack.c.l.b16 %v1316
        %v1406 = vunpack.c.l.b16 %v1317
        %v1407 = vunpack.c.l.b16 %v1318
        %v1408 = vunpack.c.l.b16 %v1319
        %v1409 = vunpack.c.l.b16 %v1320
        %v1410 = vunpack.c.l.b16 %v1321
        %v1411 = vunpack.c.l.b16 %v1322
        %v1412 = vunpack.c.l.b16 %v1323
        %v1413 = vunpack.c.l.b16 %v1324
        %v1414 = vunpack.c.l.b16 %v1325
        %v1415 = vunpack.c.l.b16 %v1326
        %v1416 = vunpack.c.l.b16 %v1327
        %v1417 = vunpack.c.l.b16 %v1328
        %v1418 = vunpack.c.l.b16 %v1329
        %v1419 = vunpack.c.l.b16 %v1330
        %v1420 = vunpack.c.l.b16 %v1331
        %v1421 = vunpack.c.l.b16 %v1332
        %v1422 = vunpack.c.l.b16 %v1333
        %v1423 = vunpack.c.l.b16 %v1334
        %v1424 = vunpack.c.l.b16 %v1335
        %v1425 = vunpack.c.l.b16 %v1336
        %v1426 = vunpack.c.l.b16 %v1337
        %v1427 = vunpack.c.l.b16 %v1338
        %v1428 = vunpack.c.l.b16 %v1339
        %v1429 = vunpack.c.l.b16 %v1340
        %v1430 = vpack.c.b16 %v1395, %v1394
        %v1431 = vpack.c.b16 %v1397, %v1396
        %v1432 = vpack.c.b16 %v1399, %v1398
        %v1433 = vpack.c.b16 %v1401, %v1400
        %v1434 = vpack.c.b16 %v1403, %v1402
        %v1435 = vpack.c.b16 %v1405, %v1404
        %v1436 = vpack.c.b16 %v1407, %v1406
        %v1437 = vpack.c.b16 %v1409, %v1408
        %v1438 = vpack.c.b16 %v1411, %v1410
        %v1439 = vpack.c.b16 %v1413, %v1412
        %v1440 = vpack.c.b16 %v1415, %v1414
        %v1441 = vpack.c.b16 %v1417, %v1416
        %v1442 = vpack.c.b16 %v1419, %v1418
        %v1443 = vpack.c.b16 %v1421, %v1420
        %v1444 = vpack.c.b16 %v1423, %v1422
        %v1445 = vpack.c.b16 %v1425, %v1424
        %v1446 = vpack.c.b16 %v1427, %v1426
        %v1447 = vpack.c.b16 %v1429, %v1428
        %v1467 = vsel %vm1274, %v1353, 0
        %v1470 = vsel %vm1274, %v1352, 0
        %1472 = vmatprep.subr.bf16.mxu0 0
        %1473 = vmatpush1.bf16.msra.mxu0 %v1430
        %1474 = vmatprep.subr.bf16.mxu0 0
        %1475 = vmatpush1.bf16.msra.mxu0 %v1431
        %1476 = vmatprep.subr.bf16.mxu0 0
        %1477 = vmatpush1.bf16.msra.mxu0 %v1432
        %1478 = vmatprep.subr.bf16.mxu0 0
        %1479 = vmatpush1.bf16.msra.mxu0 %v1433
        %1480 = vmatprep.subr.bf16.mxu0 0
        %1481 = vmatpush1.bf16.msra.mxu0 %v1434
        %1482 = vmatprep.subr.bf16.mxu0 0
        %1483 = vmatpush1.bf16.msra.mxu0 %v1435
        %1484 = vmatprep.subr.bf16.mxu0 0
        %1485 = vmatpush1.bf16.msra.mxu0 %v1436
        %1486 = vmatprep.subr.bf16.mxu0 0
        %1487 = vmatpush1.bf16.msra.mxu0 %v1437
        %1488 = vmatprep.subr.bf16.mxu0 0
        %1489 = vmatpush1.bf16.msra.mxu0 %v1438
        %1490 = vmatprep.subr.bf16.mxu0 0
        %1491 = vmatpush1.bf16.msra.mxu0 %v1439
        %1492 = vmatprep.subr.bf16.mxu0 0
        %1493 = vmatpush1.bf16.msra.mxu0 %v1440
        %1494 = vmatprep.subr.bf16.mxu0 0
        %1495 = vmatpush1.bf16.msra.mxu0 %v1441
        %1496 = vmatprep.subr.bf16.mxu0 0
        %1497 = vmatpush1.bf16.msra.mxu0 %v1442
        %1498 = vmatprep.subr.bf16.mxu0 0
        %1499 = vmatpush1.bf16.msra.mxu0 %v1443
        %1500 = vmatprep.subr.bf16.mxu0 0
        %1501 = vmatpush1.bf16.msra.mxu0 %v1444
        %1502 = vmatprep.subr.bf16.mxu0 0
        %1503 = vmatpush1.bf16.msra.mxu0 %v1445
        %1504 = vmatprep.mubr.bf16.mxu0 %v1350
        %1505 = vmatmul.mubr.bf16.gmra.mrb[0].mxu0 %v1347
        %v1506 = vpop.f32.mrb[0].mxu0
        %v1507 = vadd.f32 0.0, %v1506
        %v1508 = vpop.f32.mrb[0].mxu0
        %v1509 = vpop.f32.mrb[0].mxu0
        %v1510 = vadd.f32 0.0, %v1509
        %v1511 = vpop.f32.mrb[0].mxu0
        %1512 = vmatprep.mubr.bf16.mxu0 %v1349
        %1513 = vmatmul.mubr.bf16.gmra.mrb[0].mxu0 %v1346
        %v1514 = vpop.f32.mrb[0].mxu0
        %v1515 = vadd.f32 0.0, %v1514
        %v1516 = vpop.f32.mrb[0].mxu0
        %v1517 = vpop.f32.mrb[0].mxu0
        %v1518 = vadd.f32 0.0, %v1517
        %v1519 = vpop.f32.mrb[0].mxu0
        %1520 = vdwg.mxu0
        %1521 = vmatprep.subr.bf16.mxu0 0
        %1522 = vmatpush1.bf16.msra.mxu0 %v1446
        %1523 = vmatprep.subr.bf16.mxu0 0
        %1524 = vmatpush1.bf16.msra.mxu0 %v1447
        %1525 = vmatprep.subr.bf16.mxu0 0
        %1526 = vmatpush1.bf16.msra.mxu0 0
        %1527 = vmatprep.subr.bf16.mxu0 0
        %1528 = vmatpush1.bf16.msra.mxu0 0
        %1529 = vmatprep.subr.bf16.mxu0 0
        %1530 = vmatpush1.bf16.msra.mxu0 0
        %1531 = vmatprep.subr.bf16.mxu0 0
        %1532 = vmatpush1.bf16.msra.mxu0 0
        %1533 = vmatprep.subr.bf16.mxu0 0
        %1534 = vmatpush1.bf16.msra.mxu0 0
        %1535 = vmatprep.subr.bf16.mxu0 0
        %1536 = vmatpush1.bf16.msra.mxu0 0
        %1537 = vmatprep.subr.bf16.mxu0 0
        %1538 = vmatpush1.bf16.msra.mxu0 0
        %1539 = vmatprep.subr.bf16.mxu0 0
        %1540 = vmatpush1.bf16.msra.mxu0 0
        %1541 = vmatprep.subr.bf16.mxu0 0
        %1542 = vmatpush1.bf16.msra.mxu0 0
        %1543 = vmatprep.subr.bf16.mxu0 0
        %1544 = vmatpush1.bf16.msra.mxu0 0
        %1545 = vmatprep.subr.bf16.mxu0 0
        %1546 = vmatpush1.bf16.msra.mxu0 0
        %1547 = vmatprep.subr.bf16.mxu0 0
        %1548 = vmatpush1.bf16.msra.mxu0 0
        %1549 = vmatprep.subr.bf16.mxu0 0
        %1550 = vmatpush1.bf16.msra.mxu0 0
        %1551 = vmatprep.subr.bf16.mxu0 0
        %1552 = vmatpush1.bf16.msra.mxu0 0
        %1553 = vmatprep.mubr.bf16.mxu0 0
        %1554 = vmatmul.mubr.bf16.gmra.mrb[0].mxu0 %v1467
        %v1555 = vpop.f32.mrb[0].mxu0
        %v1556 = vadd.f32 %v1507, %v1555
        %v1557 = vpop.f32.mrb[0].mxu0
        %v1558 = vpop.f32.mrb[0].mxu0
        %v1559 = vadd.f32 %v1510, %v1558
        %v1560 = vpop.f32.mrb[0].mxu0
        %1561 = vmatprep.mubr.bf16.mxu0 0
        %1562 = vmatmul.mubr.bf16.gmra.mrb[0].mxu0 %v1470
        %v1563 = vpop.f32.mrb[0].mxu0
        %v1564 = vadd.f32 %v1515, %v1563
        %v1565 = vpop.f32.mrb[0].mxu0
        %v1566 = vpop.f32.mrb[0].mxu0
        %v1567 = vadd.f32 %v1518, %v1566
        %v1568 = vpop.f32.mrb[0].mxu0
        %1569 = vdwg.mxu0
        %v1570 = vld [vmem:[#allocation4 + $0x10] sm:$0x1]
        %v1571 = vlaneseq
        %v1572 = vshrl.u32 %v1571, 7
        %v1573 = vsub.s32 0, %v1572
        %v1574 = vrot.slane %v1570, %v1573
        %v1575 = vmul.f32 %v1556, %v1574
        %v1576 = vmul.f32 %v1559, %v1574
        %v1577 = vmul.f32 %v1564, %v1574
        %v1578 = vmul.f32 %v1567, %v1574
        %v1579 = vld [vmem:[#allocation4 + $0x18] sm:$0x1]
        %v1580 = vlaneseq
        %v1581 = vshrl.u32 %v1580, 7
        %v1582 = vsub.s32 0, %v1581
        %v1583 = vrot.slane %v1579, %v1582
        %v1584 = vadd.f32 %v1575, %v1583
        %v1585 = vadd.f32 %v1576, %v1583
        %v1586 = vadd.f32 %v1577, %v1583
        %v1587 = vadd.f32 %v1578, %v1583
        %v1588 = vmax.f32 %v1584, 0.0
        %v1589 = vmax.f32 %v1585, 0.0
        %v1590 = vmax.f32 %v1586, 0.0
        %v1591 = vmax.f32 %v1587, 0.0
        %v1592 = vpack.c.bf16 %v1589, %v1588
        %v1593 = vpack.c.bf16 %v1591, %v1590
        %v1596 = vrot.slane %v1592, 4
        %v1597 = vrot.slane %v1593, 4
        %v1598 = vsel %vm237, %v1596, %v1597
        %v1602 = vsel %vm243, 0, %v1596
        %v1604 = vsel %vm250, %v1597, 0
        %v1605 = vmul.bf16 %v1602, %v310
        %v1606 = vmul.bf16 %v1598, %v312
        %v1607 = vmul.bf16 %v1602, %v379
        %v1608 = vmul.bf16 %v1598, %v388
        %v1609 = vmul.bf16 %v1602, %v448
        %v1610 = vmul.bf16 %v1598, %v450
        %v1611 = vmul.bf16 %v1602, %v517
        %v1612 = vmul.bf16 %v1598, %v526
        %v1613 = vmul.bf16 %v1602, %v593
        %v1614 = vmul.bf16 %v1598, %v602
        %v1615 = vmul.bf16 %v1604, %v601
        %v1616 = vmul.bf16 %v1602, %v664
        %v1617 = vmul.bf16 %v1598, %v666
        %v1618 = vmul.bf16 %v1604, %v665
        %v1619 = vmul.bf16 %v1602, %v735
        %v1620 = vmul.bf16 %v1598, %v744
        %v1621 = vmul.bf16 %v1604, %v743
        %v1622 = vmul.bf16 %v1602, %v806
        %v1623 = vmul.bf16 %v1598, %v808
        %v1624 = vmul.bf16 %v1604, %v807
        %v1626 = vshrl.u32 %v1607, 16
        %v1628 = vshll.u32 %v1607, 16
        %v1630 = vrot.slane %v1628, 1
        %v1631 = vor.u32 %v1626, %v1630
        %v1633 = vshll.u32 %v1608, 16
        %v1635 = vrot.slane %v1633, 1
        %v1636 = vsel %vm815, %v1631, %v1635
        %v1637 = vshrl.u32 %v1608, 16
        %v1639 = vor.u32 %v1637, %v1635
        %1640 = vrot.lane.b32.xlu0 %v1636, 32
        %v1641 = vpop.permute.xlu0 %1640
        %1642 = vrot.lane.b32.xlu0 %v1639, 32
        %v1643 = vpop.permute.xlu0 %1642
        %v1646 = vrot.slane %v1609, 1
        %v1647 = vrot.slane %v1610, 1
        %v1648 = vsel %vm805, %v1646, %v1647
        %1649 = vrot.lane.b32.xlu0 %v1648, 64
        %v1650 = vpop.permute.xlu0 %1649
        %1651 = vrot.lane.b32.xlu0 %v1647, 64
        %v1652 = vpop.permute.xlu0 %1651
        %v1654 = vshrl.u32 %v1611, 16
        %v1656 = vrot.slane %v1654, 2
        %v1657 = vshll.u32 %v1611, 16
        %v1659 = vrot.slane %v1657, 3
        %v1660 = vor.u32 %v1656, %v1659
        %v1662 = vshrl.u32 %v1612, 16
        %v1664 = vrot.slane %v1662, 2
        %v1665 = vshll.u32 %v1612, 16
        %v1667 = vrot.slane %v1665, 3
        %v1668 = vor.u32 %v1664, %v1667
        %v1669 = vsel %vm844, %v1660, %v1668
        %1670 = vrot.lane.b32.xlu0 %v1669, 96
        %v1671 = vpop.permute.xlu0 %1670
        %1672 = vrot.lane.b32.xlu0 %v1668, 96
        %v1673 = vpop.permute.xlu0 %1672
        %v1676 = vrot.slane %v1602, 3
        %v1677 = vrot.slane %v1598, 3
        %v1678 = vsel %vm868, %v1676, %v1677
        %v1679 = vrot.slane %v1604, 3
        %v1680 = vsel %vm868, %v1677, %v1679
        %v1682 = vshrl.u32 %v1613, 16
        %v1684 = vrot.slane %v1682, 3
        %v1685 = vshll.u32 %v1613, 16
        %v1687 = vrot.slane %v1685, 4
        %v1688 = vor.u32 %v1684, %v1687
        %v1690 = vshrl.u32 %v1614, 16
        %v1692 = vrot.slane %v1690, 3
        %v1693 = vshll.u32 %v1614, 16
        %v1695 = vrot.slane %v1693, 4
        %v1696 = vor.u32 %v1692, %v1695
        %v1697 = vsel %vm585, %v1688, %v1696
        %v1699 = vshrl.u32 %v1615, 16
        %v1701 = vrot.slane %v1699, 3
        %v1702 = vshll.u32 %v1615, 16
        %v1704 = vrot.slane %v1702, 4
        %v1705 = vor.u32 %v1701, %v1704
        %v1706 = vsel %vm585, %v1696, %v1705
        %1707 = vrot.lane.b32.xlu0 %v1697, 32
        %v1708 = vpop.permute.xlu0 %1707
        %1709 = vrot.lane.b32.xlu0 %v1706, 32
        %v1710 = vpop.permute.xlu0 %1709
        %v1714 = vrot.slane %v1616, 5
        %v1715 = vrot.slane %v1617, 5
        %v1716 = vsel %vm911, %v1714, %v1715
        %v1717 = vrot.slane %v1618, 5
        %v1718 = vsel %vm911, %v1715, %v1717
        %1719 = vrot.lane.b32.xlu0 %v1716, 64
        %v1720 = vpop.permute.xlu0 %1719
        %1721 = vrot.lane.b32.xlu0 %v1718, 64
        %v1722 = vpop.permute.xlu0 %1721
        %v1724 = vshrl.u32 %v1619, 16
        %v1726 = vrot.slane %v1724, 5
        %v1727 = vshll.u32 %v1619, 16
        %v1729 = vrot.slane %v1727, 6
        %v1730 = vor.u32 %v1726, %v1729
        %v1732 = vshrl.u32 %v1620, 16
        %v1734 = vrot.slane %v1732, 5
        %v1735 = vshll.u32 %v1620, 16
        %v1737 = vrot.slane %v1735, 6
        %v1738 = vor.u32 %v1734, %v1737
        %v1739 = vsel %vm921, %v1730, %v1738
        %v1741 = vshrl.u32 %v1621, 16
        %v1743 = vrot.slane %v1741, 5
        %v1744 = vshll.u32 %v1621, 16
        %v1746 = vrot.slane %v1744, 6
        %v1747 = vor.u32 %v1743, %v1746
        %v1748 = vsel %vm921, %v1738, %v1747
        %1749 = vrot.lane.b32.xlu0 %v1739, 96
        %v1750 = vpop.permute.xlu0 %1749
        %1751 = vrot.lane.b32.xlu0 %v1748, 96
        %v1752 = vpop.permute.xlu0 %1751
        %v1756 = vrot.slane %v1622, 6
        %v1757 = vrot.slane %v1623, 6
        %v1758 = vsel %vm447, %v1756, %v1757
        %v1759 = vrot.slane %v1624, 6
        %v1760 = vsel %vm447, %v1757, %v1759
        %v1763 = vsel %vm1274, %v1605, %v1641
        %v1766 = vsel %vm1274, %v1606, %v1643
        %v1768 = vsel %vm1281, %v1763, %v1650
        %v1770 = vsel %vm1281, %v1766, %v1652
        %v1772 = vsel %vm1286, %v1768, %v1671
        %v1774 = vsel %vm1286, %v1770, %v1673
        %v1777 = vsel %vm1274, %v1678, %v1708
        %v1780 = vsel %vm1274, %v1680, %v1710
        %v1782 = vsel %vm1281, %v1777, %v1720
        %v1784 = vsel %vm1281, %v1780, %v1722
        %v1786 = vsel %vm1286, %v1782, %v1750
        %v1788 = vsel %vm1286, %v1784, %v1752
        %v1789 = vld [vmem:[#allocation2 + $0xa0] sm:$0xf]
        %v1790 = vld [vmem:[#allocation2 + $0xa4] sm:$0xf]
        %v1791 = vld [vmem:[#allocation2 + $0xa8] sm:$0xf]
        %v1792 = vld [vmem:[#allocation2 + $0xac] sm:$0xf]
        %v1793 = vld [vmem:[#allocation2 + $0xb0] sm:$0xf]
        %v1794 = vld [vmem:[#allocation2 + $0xb4] sm:$0xf]
        %v1795 = vld [vmem:[#allocation2 + $0xb8] sm:$0xf]
        %v1796 = vld [vmem:[#allocation2 + $0xbc] sm:$0xf]
        %v1797 = vld [vmem:[#allocation2 + $0xc0] sm:$0xf]
        %v1798 = vld [vmem:[#allocation2 + $0xc4] sm:$0xf]
        %v1799 = vld [vmem:[#allocation2 + $0xc8] sm:$0xf]
        %v1800 = vld [vmem:[#allocation2 + $0xcc] sm:$0xf]
        %v1801 = vld [vmem:[#allocation2 + $0xd0] sm:$0xf]
        %v1802 = vld [vmem:[#allocation2 + $0xd4] sm:$0xf]
        %v1803 = vld [vmem:[#allocation2 + $0xd8] sm:$0xf]
        %v1804 = vld [vmem:[#allocation2 + $0xdc] sm:$0xf]
        %v1805 = vld [vmem:[#allocation2 + $0xe0] sm:$0xf]
        %v1806 = vld [vmem:[#allocation2 + $0xe4] sm:$0xf]
        %v1807 = vld [vmem:[#allocation2 + $0xe8] sm:$0xf]
        %v1808 = vld [vmem:[#allocation2 + $0xec] sm:$0xf]
        %v1809 = vld [vmem:[#allocation2 + $0xf0] sm:$0xf]
        %v1810 = vld [vmem:[#allocation2 + $0xf4] sm:$0xf]
        %v1811 = vld [vmem:[#allocation2 + $0xf8] sm:$0xf]
        %v1812 = vld [vmem:[#allocation2 + $0xfc] sm:$0xf]
        %v1813 = vld [vmem:[#allocation2 + $0x100] sm:$0xf]
        %v1814 = vld [vmem:[#allocation2 + $0x104] sm:$0xf]
        %v1815 = vld [vmem:[#allocation2 + $0x108] sm:$0xf]
        %v1816 = vld [vmem:[#allocation2 + $0x10c] sm:$0xf]
        %v1817 = vld [vmem:[#allocation2 + $0x110] sm:$0xf]
        %v1818 = vld [vmem:[#allocation2 + $0x114] sm:$0xf]
        %v1819 = vld [vmem:[#allocation2 + $0x118] sm:$0xf]
        %v1820 = vld [vmem:[#allocation2 + $0x11c] sm:$0xf]
        %v1821 = vld [vmem:[#allocation2 + $0x120] sm:$0xf]
        %v1822 = vld [vmem:[#allocation2 + $0x124] sm:$0xf]
        %v1823 = vld [vmem:[#allocation2 + $0x128] sm:$0xf]
        %v1824 = vld [vmem:[#allocation2 + $0x12c] sm:$0xf]
        %v1829 = vrot.slane %v1772, 1
        %v1830 = vrot.slane %v1774, 1
        %v1831 = vsel %vm805, %v1829, %v1830
        %v1832 = vrot.slane %v1786, 1
        %v1833 = vrot.slane %v1788, 1
        %v1834 = vsel %vm805, %v1832, %v1833
        %v1835 = vrot.slane %v1758, 1
        %v1836 = vrot.slane %v1760, 1
        %v1837 = vsel %vm805, %v1835, %v1836
        %v1878 = vunpack.c.l.b16 %v1789
        %v1879 = vunpack.c.l.b16 %v1790
        %v1880 = vunpack.c.l.b16 %v1791
        %v1881 = vunpack.c.l.b16 %v1792
        %v1882 = vunpack.c.l.b16 %v1793
        %v1883 = vunpack.c.l.b16 %v1794
        %v1884 = vunpack.c.l.b16 %v1795
        %v1885 = vunpack.c.l.b16 %v1796
        %v1886 = vunpack.c.l.b16 %v1797
        %v1887 = vunpack.c.l.b16 %v1798
        %v1888 = vunpack.c.l.b16 %v1799
        %v1889 = vunpack.c.l.b16 %v1800
        %v1890 = vunpack.c.l.b16 %v1801
        %v1891 = vunpack.c.l.b16 %v1802
        %v1892 = vunpack.c.l.b16 %v1803
        %v1893 = vunpack.c.l.b16 %v1804
        %v1894 = vunpack.c.l.b16 %v1805
        %v1895 = vunpack.c.l.b16 %v1806
        %v1896 = vunpack.c.l.b16 %v1807
        %v1897 = vunpack.c.l.b16 %v1808
        %v1898 = vunpack.c.l.b16 %v1809
        %v1899 = vunpack.c.l.b16 %v1810
        %v1900 = vunpack.c.l.b16 %v1811
        %v1901 = vunpack.c.l.b16 %v1812
        %v1902 = vunpack.c.l.b16 %v1813
        %v1903 = vunpack.c.l.b16 %v1814
        %v1904 = vunpack.c.l.b16 %v1815
        %v1905 = vunpack.c.l.b16 %v1816
        %v1906 = vunpack.c.l.b16 %v1817
        %v1907 = vunpack.c.l.b16 %v1818
        %v1908 = vunpack.c.l.b16 %v1819
        %v1909 = vunpack.c.l.b16 %v1820
        %v1910 = vunpack.c.l.b16 %v1821
        %v1911 = vunpack.c.l.b16 %v1822
        %v1912 = vunpack.c.l.b16 %v1823
        %v1913 = vunpack.c.l.b16 %v1824
        %v1914 = vpack.c.b16 %v1879, %v1878
        %v1915 = vpack.c.b16 %v1881, %v1880
        %v1916 = vpack.c.b16 %v1883, %v1882
        %v1917 = vpack.c.b16 %v1885, %v1884
        %v1918 = vpack.c.b16 %v1887, %v1886
        %v1919 = vpack.c.b16 %v1889, %v1888
        %v1920 = vpack.c.b16 %v1891, %v1890
        %v1921 = vpack.c.b16 %v1893, %v1892
        %v1922 = vpack.c.b16 %v1895, %v1894
        %v1923 = vpack.c.b16 %v1897, %v1896
        %v1924 = vpack.c.b16 %v1899, %v1898
        %v1925 = vpack.c.b16 %v1901, %v1900
        %v1926 = vpack.c.b16 %v1903, %v1902
        %v1927 = vpack.c.b16 %v1905, %v1904
        %v1928 = vpack.c.b16 %v1907, %v1906
        %v1929 = vpack.c.b16 %v1909, %v1908
        %v1930 = vpack.c.b16 %v1911, %v1910
        %v1931 = vpack.c.b16 %v1913, %v1912
        %v1951 = vsel %vm1274, %v1837, 0
        %v1954 = vsel %vm1274, %v1836, 0
        %1956 = vmatprep.subr.bf16.mxu0 0
        %1957 = vmatpush1.bf16.msra.mxu0 %v1914
        %1958 = vmatprep.subr.bf16.mxu0 0
        %1959 = vmatpush1.bf16.msra.mxu0 %v1915
        %1960 = vmatprep.subr.bf16.mxu0 0
        %1961 = vmatpush1.bf16.msra.mxu0 %v1916
        %1962 = vmatprep.subr.bf16.mxu0 0
        %1963 = vmatpush1.bf16.msra.mxu0 %v1917
        %1964 = vmatprep.subr.bf16.mxu0 0
        %1965 = vmatpush1.bf16.msra.mxu0 %v1918
        %1966 = vmatprep.subr.bf16.mxu0 0
        %1967 = vmatpush1.bf16.msra.mxu0 %v1919
        %1968 = vmatprep.subr.bf16.mxu0 0
        %1969 = vmatpush1.bf16.msra.mxu0 %v1920
        %1970 = vmatprep.subr.bf16.mxu0 0
        %1971 = vmatpush1.bf16.msra.mxu0 %v1921
        %1972 = vmatprep.subr.bf16.mxu0 0
        %1973 = vmatpush1.bf16.msra.mxu0 %v1922
        %1974 = vmatprep.subr.bf16.mxu0 0
        %1975 = vmatpush1.bf16.msra.mxu0 %v1923
        %1976 = vmatprep.subr.bf16.mxu0 0
        %1977 = vmatpush1.bf16.msra.mxu0 %v1924
        %1978 = vmatprep.subr.bf16.mxu0 0
        %1979 = vmatpush1.bf16.msra.mxu0 %v1925
        %1980 = vmatprep.subr.bf16.mxu0 0
        %1981 = vmatpush1.bf16.msra.mxu0 %v1926
        %1982 = vmatprep.subr.bf16.mxu0 0
        %1983 = vmatpush1.bf16.msra.mxu0 %v1927
        %1984 = vmatprep.subr.bf16.mxu0 0
        %1985 = vmatpush1.bf16.msra.mxu0 %v1928
        %1986 = vmatprep.subr.bf16.mxu0 0
        %1987 = vmatpush1.bf16.msra.mxu0 %v1929
        %1988 = vmatprep.mubr.bf16.mxu0 %v1834
        %1989 = vmatmul.mubr.bf16.gmra.mrb[0].mxu0 %v1831
        %v1990 = vpop.f32.mrb[0].mxu0
        %v1991 = vadd.f32 0.0, %v1990
        %v1992 = vpop.f32.mrb[0].mxu0
        %v1993 = vpop.f32.mrb[0].mxu0
        %v1994 = vadd.f32 0.0, %v1993
        %v1995 = vpop.f32.mrb[0].mxu0
        %1996 = vmatprep.mubr.bf16.mxu0 %v1833
        %1997 = vmatmul.mubr.bf16.gmra.mrb[0].mxu0 %v1830
        %v1998 = vpop.f32.mrb[0].mxu0
        %v1999 = vadd.f32 0.0, %v1998
        %v2000 = vpop.f32.mrb[0].mxu0
        %v2001 = vpop.f32.mrb[0].mxu0
        %v2002 = vadd.f32 0.0, %v2001
        %v2003 = vpop.f32.mrb[0].mxu0
        %2004 = vdwg.mxu0
        %2005 = vmatprep.subr.bf16.mxu0 0
        %2006 = vmatpush1.bf16.msra.mxu0 %v1930
        %2007 = vmatprep.subr.bf16.mxu0 0
        %2008 = vmatpush1.bf16.msra.mxu0 %v1931
        %2009 = vmatprep.subr.bf16.mxu0 0
        %2010 = vmatpush1.bf16.msra.mxu0 0
        %2011 = vmatprep.subr.bf16.mxu0 0
        %2012 = vmatpush1.bf16.msra.mxu0 0
        %2013 = vmatprep.subr.bf16.mxu0 0
        %2014 = vmatpush1.bf16.msra.mxu0 0
        %2015 = vmatprep.subr.bf16.mxu0 0
        %2016 = vmatpush1.bf16.msra.mxu0 0
        %2017 = vmatprep.subr.bf16.mxu0 0
        %2018 = vmatpush1.bf16.msra.mxu0 0
        %2019 = vmatprep.subr.bf16.mxu0 0
        %2020 = vmatpush1.bf16.msra.mxu0 0
        %2021 = vmatprep.subr.bf16.mxu0 0
        %2022 = vmatpush1.bf16.msra.mxu0 0
        %2023 = vmatprep.subr.bf16.mxu0 0
        %2024 = vmatpush1.bf16.msra.mxu0 0
        %2025 = vmatprep.subr.bf16.mxu0 0
        %2026 = vmatpush1.bf16.msra.mxu0 0
        %2027 = vmatprep.subr.bf16.mxu0 0
        %2028 = vmatpush1.bf16.msra.mxu0 0
        %2029 = vmatprep.subr.bf16.mxu0 0
        %2030 = vmatpush1.bf16.msra.mxu0 0
        %2031 = vmatprep.subr.bf16.mxu0 0
        %2032 = vmatpush1.bf16.msra.mxu0 0
        %2033 = vmatprep.subr.bf16.mxu0 0
        %2034 = vmatpush1.bf16.msra.mxu0 0
        %2035 = vmatprep.subr.bf16.mxu0 0
        %2036 = vmatpush1.bf16.msra.mxu0 0
        %2037 = vmatprep.mubr.bf16.mxu0 0
        %2038 = vmatmul.mubr.bf16.gmra.mrb[0].mxu0 %v1951
        %v2039 = vpop.f32.mrb[0].mxu0
        %v2040 = vadd.f32 %v1991, %v2039
        %v2041 = vpop.f32.mrb[0].mxu0
        %v2042 = vpop.f32.mrb[0].mxu0
        %v2043 = vadd.f32 %v1994, %v2042
        %v2044 = vpop.f32.mrb[0].mxu0
        %2045 = vmatprep.mubr.bf16.mxu0 0
        %2046 = vmatmul.mubr.bf16.gmra.mrb[0].mxu0 %v1954
        %v2047 = vpop.f32.mrb[0].mxu0
        %v2048 = vadd.f32 %v1999, %v2047
        %v2049 = vpop.f32.mrb[0].mxu0
        %v2050 = vpop.f32.mrb[0].mxu0
        %v2051 = vadd.f32 %v2002, %v2050
        %v2052 = vpop.f32.mrb[0].mxu0
        %2053 = vdwg.mxu0
        %v2054 = vld [vmem:[#allocation4 + $0x20] sm:$0x1]
        %v2055 = vlaneseq
        %v2056 = vshrl.u32 %v2055, 7
        %v2057 = vsub.s32 0, %v2056
        %v2058 = vrot.slane %v2054, %v2057
        %v2059 = vmul.f32 %v2040, %v2058
        %v2060 = vmul.f32 %v2043, %v2058
        %v2061 = vmul.f32 %v2048, %v2058
        %v2062 = vmul.f32 %v2051, %v2058
        %v2063 = vld [vmem:[#allocation4 + $0x28] sm:$0x1]
        %v2064 = vlaneseq
        %v2065 = vshrl.u32 %v2064, 7
        %v2066 = vsub.s32 0, %v2065
        %v2067 = vrot.slane %v2063, %v2066
        %v2068 = vadd.f32 %v2059, %v2067
        %v2069 = vadd.f32 %v2060, %v2067
        %v2070 = vadd.f32 %v2061, %v2067
        %v2071 = vadd.f32 %v2062, %v2067
        %v2072 = vadd.f32 %v2068, %v1101
        %v2073 = vadd.f32 %v2069, %v1102
        %v2074 = vadd.f32 %v2070, %v1103
        %v2075 = vadd.f32 %v2071, %v1104
        %v2076 = vmax.f32 %v2072, 0.0
        %v2077 = vmax.f32 %v2073, 0.0
        %v2078 = vmax.f32 %v2074, 0.0
        %v2079 = vmax.f32 %v2075, 0.0
        %v2080 = vpack.c.bf16 %v2077, %v2076
        %v2081 = vpack.c.bf16 %v2079, %v2078
        %v2084 = vrot.slane %v2080, 4
        %v2085 = vrot.slane %v2081, 4
        %v2086 = vsel %vm237, %v2084, %v2085
        %v2090 = vsel %vm243, 0, %v2084
        %v2092 = vsel %vm250, %v2085, 0
        %v2093 = vmul.bf16 %v2090, %v310
        %v2094 = vmul.bf16 %v2086, %v312
        %v2095 = vmul.bf16 %v2090, %v379
        %v2096 = vmul.bf16 %v2086, %v388
        %v2097 = vmul.bf16 %v2090, %v448
        %v2098 = vmul.bf16 %v2086, %v450
        %v2099 = vmul.bf16 %v2090, %v517
        %v2100 = vmul.bf16 %v2086, %v526
        %v2101 = vmul.bf16 %v2090, %v593
        %v2102 = vmul.bf16 %v2086, %v602
        %v2103 = vmul.bf16 %v2092, %v601
        %v2104 = vmul.bf16 %v2090, %v664
        %v2105 = vmul.bf16 %v2086, %v666
        %v2106 = vmul.bf16 %v2092, %v665
        %v2107 = vmul.bf16 %v2090, %v735
        %v2108 = vmul.bf16 %v2086, %v744
        %v2109 = vmul.bf16 %v2092, %v743
        %v2110 = vmul.bf16 %v2090, %v806
        %v2111 = vmul.bf16 %v2086, %v808
        %v2112 = vmul.bf16 %v2092, %v807
        %v2114 = vshrl.u32 %v2095, 16
        %v2116 = vshll.u32 %v2095, 16
        %v2118 = vrot.slane %v2116, 1
        %v2119 = vor.u32 %v2114, %v2118
        %v2121 = vshll.u32 %v2096, 16
        %v2123 = vrot.slane %v2121, 1
        %v2124 = vsel %vm815, %v2119, %v2123
        %v2125 = vshrl.u32 %v2096, 16
        %v2127 = vor.u32 %v2125, %v2123
        %2128 = vrot.lane.b32.xlu0 %v2124, 32
        %v2129 = vpop.permute.xlu0 %2128
        %2130 = vrot.lane.b32.xlu0 %v2127, 32
        %v2131 = vpop.permute.xlu0 %2130
        %v2134 = vrot.slane %v2097, 1
        %v2135 = vrot.slane %v2098, 1
        %v2136 = vsel %vm805, %v2134, %v2135
        %2137 = vrot.lane.b32.xlu0 %v2136, 64
        %v2138 = vpop.permute.xlu0 %2137
        %2139 = vrot.lane.b32.xlu0 %v2135, 64
        %v2140 = vpop.permute.xlu0 %2139
        %v2142 = vshrl.u32 %v2099, 16
        %v2144 = vrot.slane %v2142, 2
        %v2145 = vshll.u32 %v2099, 16
        %v2147 = vrot.slane %v2145, 3
        %v2148 = vor.u32 %v2144, %v2147
        %v2150 = vshrl.u32 %v2100, 16
        %v2152 = vrot.slane %v2150, 2
        %v2153 = vshll.u32 %v2100, 16
        %v2155 = vrot.slane %v2153, 3
        %v2156 = vor.u32 %v2152, %v2155
        %v2157 = vsel %vm844, %v2148, %v2156
        %2158 = vrot.lane.b32.xlu0 %v2157, 96
        %v2159 = vpop.permute.xlu0 %2158
        %2160 = vrot.lane.b32.xlu0 %v2156, 96
        %v2161 = vpop.permute.xlu0 %2160
        %v2164 = vrot.slane %v2090, 3
        %v2165 = vrot.slane %v2086, 3
        %v2166 = vsel %vm868, %v2164, %v2165
        %v2167 = vrot.slane %v2092, 3
        %v2168 = vsel %vm868, %v2165, %v2167
        %v2170 = vshrl.u32 %v2101, 16
        %v2172 = vrot.slane %v2170, 3
        %v2173 = vshll.u32 %v2101, 16
        %v2175 = vrot.slane %v2173, 4
        %v2176 = vor.u32 %v2172, %v2175
        %v2178 = vshrl.u32 %v2102, 16
        %v2180 = vrot.slane %v2178, 3
        %v2181 = vshll.u32 %v2102, 16
        %v2183 = vrot.slane %v2181, 4
        %v2184 = vor.u32 %v2180, %v2183
        %v2185 = vsel %vm585, %v2176, %v2184
        %v2187 = vshrl.u32 %v2103, 16
        %v2189 = vrot.slane %v2187, 3
        %v2190 = vshll.u32 %v2103, 16
        %v2192 = vrot.slane %v2190, 4
        %v2193 = vor.u32 %v2189, %v2192
        %v2194 = vsel %vm585, %v2184, %v2193
        %2195 = vrot.lane.b32.xlu0 %v2185, 32
        %v2196 = vpop.permute.xlu0 %2195
        %2197 = vrot.lane.b32.xlu0 %v2194, 32
        %v2198 = vpop.permute.xlu0 %2197
        %v2202 = vrot.slane %v2104, 5
        %v2203 = vrot.slane %v2105, 5
        %v2204 = vsel %vm911, %v2202, %v2203
        %v2205 = vrot.slane %v2106, 5
        %v2206 = vsel %vm911, %v2203, %v2205
        %2207 = vrot.lane.b32.xlu0 %v2204, 64
        %v2208 = vpop.permute.xlu0 %2207
        %2209 = vrot.lane.b32.xlu0 %v2206, 64
        %v2210 = vpop.permute.xlu0 %2209
        %v2212 = vshrl.u32 %v2107, 16
        %v2214 = vrot.slane %v2212, 5
        %v2215 = vshll.u32 %v2107, 16
        %v2217 = vrot.slane %v2215, 6
        %v2218 = vor.u32 %v2214, %v2217
        %v2220 = vshrl.u32 %v2108, 16
        %v2222 = vrot.slane %v2220, 5
        %v2223 = vshll.u32 %v2108, 16
        %v2225 = vrot.slane %v2223, 6
        %v2226 = vor.u32 %v2222, %v2225
        %v2227 = vsel %vm921, %v2218, %v2226
        %v2229 = vshrl.u32 %v2109, 16
        %v2231 = vrot.slane %v2229, 5
        %v2232 = vshll.u32 %v2109, 16
        %v2234 = vrot.slane %v2232, 6
        %v2235 = vor.u32 %v2231, %v2234
        %v2236 = vsel %vm921, %v2226, %v2235
        %2237 = vrot.lane.b32.xlu0 %v2227, 96
        %v2238 = vpop.permute.xlu0 %2237
        %2239 = vrot.lane.b32.xlu0 %v2236, 96
        %v2240 = vpop.permute.xlu0 %2239
        %v2244 = vrot.slane %v2110, 6
        %v2245 = vrot.slane %v2111, 6
        %v2246 = vsel %vm447, %v2244, %v2245
        %v2247 = vrot.slane %v2112, 6
        %v2248 = vsel %vm447, %v2245, %v2247
        %v2251 = vsel %vm1274, %v2093, %v2129
        %v2254 = vsel %vm1274, %v2094, %v2131
        %v2256 = vsel %vm1281, %v2251, %v2138
        %v2258 = vsel %vm1281, %v2254, %v2140
        %v2260 = vsel %vm1286, %v2256, %v2159
        %v2262 = vsel %vm1286, %v2258, %v2161
        %v2265 = vsel %vm1274, %v2166, %v2196
        %v2268 = vsel %vm1274, %v2168, %v2198
        %v2270 = vsel %vm1281, %v2265, %v2208
        %v2272 = vsel %vm1281, %v2268, %v2210
        %v2274 = vsel %vm1286, %v2270, %v2238
        %v2276 = vsel %vm1286, %v2272, %v2240
        %v2277 = vld [vmem:[#allocation2 + $0x130] sm:$0xf]
        %v2278 = vld [vmem:[#allocation2 + $0x134] sm:$0xf]
        %v2279 = vld [vmem:[#allocation2 + $0x138] sm:$0xf]
        %v2280 = vld [vmem:[#allocation2 + $0x13c] sm:$0xf]
        %v2281 = vld [vmem:[#allocation2 + $0x140] sm:$0xf]
        %v2282 = vld [vmem:[#allocation2 + $0x144] sm:$0xf]
        %v2283 = vld [vmem:[#allocation2 + $0x148] sm:$0xf]
        %v2284 = vld [vmem:[#allocation2 + $0x14c] sm:$0xf]
        %v2285 = vld [vmem:[#allocation2 + $0x150] sm:$0xf]
        %v2286 = vld [vmem:[#allocation2 + $0x154] sm:$0xf]
        %v2287 = vld [vmem:[#allocation2 + $0x158] sm:$0xf]
        %v2288 = vld [vmem:[#allocation2 + $0x15c] sm:$0xf]
        %v2289 = vld [vmem:[#allocation2 + $0x160] sm:$0xf]
        %v2290 = vld [vmem:[#allocation2 + $0x164] sm:$0xf]
        %v2291 = vld [vmem:[#allocation2 + $0x168] sm:$0xf]
        %v2292 = vld [vmem:[#allocation2 + $0x16c] sm:$0xf]
        %v2293 = vld [vmem:[#allocation2 + $0x170] sm:$0xf]
        %v2294 = vld [vmem:[#allocation2 + $0x174] sm:$0xf]
        %v2295 = vld [vmem:[#allocation2 + $0x178] sm:$0xf]
        %v2296 = vld [vmem:[#allocation2 + $0x17c] sm:$0xf]
        %v2297 = vld [vmem:[#allocation2 + $0x180] sm:$0xf]
        %v2298 = vld [vmem:[#allocation2 + $0x184] sm:$0xf]
        %v2299 = vld [vmem:[#allocation2 + $0x188] sm:$0xf]
        %v2300 = vld [vmem:[#allocation2 + $0x18c] sm:$0xf]
        %v2301 = vld [vmem:[#allocation2 + $0x190] sm:$0xf]
        %v2302 = vld [vmem:[#allocation2 + $0x194] sm:$0xf]
        %v2303 = vld [vmem:[#allocation2 + $0x198] sm:$0xf]
        %v2304 = vld [vmem:[#allocation2 + $0x19c] sm:$0xf]
        %v2305 = vld [vmem:[#allocation2 + $0x1a0] sm:$0xf]
        %v2306 = vld [vmem:[#allocation2 + $0x1a4] sm:$0xf]
        %v2307 = vld [vmem:[#allocation2 + $0x1a8] sm:$0xf]
        %v2308 = vld [vmem:[#allocation2 + $0x1ac] sm:$0xf]
        %v2309 = vld [vmem:[#allocation2 + $0x1b0] sm:$0xf]
        %v2310 = vld [vmem:[#allocation2 + $0x1b4] sm:$0xf]
        %v2311 = vld [vmem:[#allocation2 + $0x1b8] sm:$0xf]
        %v2312 = vld [vmem:[#allocation2 + $0x1bc] sm:$0xf]
        %v2317 = vrot.slane %v2260, 1
        %v2318 = vrot.slane %v2262, 1
        %v2319 = vsel %vm805, %v2317, %v2318
        %v2320 = vrot.slane %v2274, 1
        %v2321 = vrot.slane %v2276, 1
        %v2322 = vsel %vm805, %v2320, %v2321
        %v2323 = vrot.slane %v2246, 1
        %v2324 = vrot.slane %v2248, 1
        %v2325 = vsel %vm805, %v2323, %v2324
        %v2366 = vunpack.c.l.b16 %v2277
        %v2367 = vunpack.c.l.b16 %v2278
        %v2368 = vunpack.c.l.b16 %v2279
        %v2369 = vunpack.c.l.b16 %v2280
        %v2370 = vunpack.c.l.b16 %v2281
        %v2371 = vunpack.c.l.b16 %v2282
        %v2372 = vunpack.c.l.b16 %v2283
        %v2373 = vunpack.c.l.b16 %v2284
        %v2374 = vunpack.c.l.b16 %v2285
        %v2375 = vunpack.c.l.b16 %v2286
        %v2376 = vunpack.c.l.b16 %v2287
        %v2377 = vunpack.c.l.b16 %v2288
        %v2378 = vunpack.c.l.b16 %v2289
        %v2379 = vunpack.c.l.b16 %v2290
        %v2380 = vunpack.c.l.b16 %v2291
        %v2381 = vunpack.c.l.b16 %v2292
        %v2382 = vunpack.c.l.b16 %v2293
        %v2383 = vunpack.c.l.b16 %v2294
        %v2384 = vunpack.c.l.b16 %v2295
        %v2385 = vunpack.c.l.b16 %v2296
        %v2386 = vunpack.c.l.b16 %v2297
        %v2387 = vunpack.c.l.b16 %v2298
        %v2388 = vunpack.c.l.b16 %v2299
        %v2389 = vunpack.c.l.b16 %v2300
        %v2390 = vunpack.c.l.b16 %v2301
        %v2391 = vunpack.c.l.b16 %v2302
        %v2392 = vunpack.c.l.b16 %v2303
        %v2393 = vunpack.c.l.b16 %v2304
        %v2394 = vunpack.c.l.b16 %v2305
        %v2395 = vunpack.c.l.b16 %v2306
        %v2396 = vunpack.c.l.b16 %v2307
        %v2397 = vunpack.c.l.b16 %v2308
        %v2398 = vunpack.c.l.b16 %v2309
        %v2399 = vunpack.c.l.b16 %v2310
        %v2400 = vunpack.c.l.b16 %v2311
        %v2401 = vunpack.c.l.b16 %v2312
        %v2402 = vpack.c.b16 %v2367, %v2366
        %v2403 = vpack.c.b16 %v2369, %v2368
        %v2404 = vpack.c.b16 %v2371, %v2370
        %v2405 = vpack.c.b16 %v2373, %v2372
        %v2406 = vpack.c.b16 %v2375, %v2374
        %v2407 = vpack.c.b16 %v2377, %v2376
        %v2408 = vpack.c.b16 %v2379, %v2378
        %v2409 = vpack.c.b16 %v2381, %v2380
        %v2410 = vpack.c.b16 %v2383, %v2382
        %v2411 = vpack.c.b16 %v2385, %v2384
        %v2412 = vpack.c.b16 %v2387, %v2386
        %v2413 = vpack.c.b16 %v2389, %v2388
        %v2414 = vpack.c.b16 %v2391, %v2390
        %v2415 = vpack.c.b16 %v2393, %v2392
        %v2416 = vpack.c.b16 %v2395, %v2394
        %v2417 = vpack.c.b16 %v2397, %v2396
        %v2418 = vpack.c.b16 %v2399, %v2398
        %v2419 = vpack.c.b16 %v2401, %v2400
        %v2439 = vsel %vm1274, %v2325, 0
        %v2442 = vsel %vm1274, %v2324, 0
        %2444 = vmatprep.subr.bf16.mxu0 0
        %2445 = vmatpush1.bf16.msra.mxu0 %v2402
        %2446 = vmatprep.subr.bf16.mxu0 0
        %2447 = vmatpush1.bf16.msra.mxu0 %v2403
        %2448 = vmatprep.subr.bf16.mxu0 0
        %2449 = vmatpush1.bf16.msra.mxu0 %v2404
        %2450 = vmatprep.subr.bf16.mxu0 0
        %2451 = vmatpush1.bf16.msra.mxu0 %v2405
        %2452 = vmatprep.subr.bf16.mxu0 0
        %2453 = vmatpush1.bf16.msra.mxu0 %v2406
        %2454 = vmatprep.subr.bf16.mxu0 0
        %2455 = vmatpush1.bf16.msra.mxu0 %v2407
        %2456 = vmatprep.subr.bf16.mxu0 0
        %2457 = vmatpush1.bf16.msra.mxu0 %v2408
        %2458 = vmatprep.subr.bf16.mxu0 0
        %2459 = vmatpush1.bf16.msra.mxu0 %v2409
        %2460 = vmatprep.subr.bf16.mxu0 0
        %2461 = vmatpush1.bf16.msra.mxu0 %v2410
        %2462 = vmatprep.subr.bf16.mxu0 0
        %2463 = vmatpush1.bf16.msra.mxu0 %v2411
        %2464 = vmatprep.subr.bf16.mxu0 0
        %2465 = vmatpush1.bf16.msra.mxu0 %v2412
        %2466 = vmatprep.subr.bf16.mxu0 0
        %2467 = vmatpush1.bf16.msra.mxu0 %v2413
        %2468 = vmatprep.subr.bf16.mxu0 0
        %2469 = vmatpush1.bf16.msra.mxu0 %v2414
        %2470 = vmatprep.subr.bf16.mxu0 0
        %2471 = vmatpush1.bf16.msra.mxu0 %v2415
        %2472 = vmatprep.subr.bf16.mxu0 0
        %2473 = vmatpush1.bf16.msra.mxu0 %v2416
        %2474 = vmatprep.subr.bf16.mxu0 0
        %2475 = vmatpush1.bf16.msra.mxu0 %v2417
        %2476 = vmatprep.mubr.bf16.mxu0 %v2322
        %2477 = vmatmul.mubr.bf16.gmra.mrb[0].mxu0 %v2319
        %v2478 = vpop.f32.mrb[0].mxu0
        %v2479 = vadd.f32 0.0, %v2478
        %v2480 = vpop.f32.mrb[0].mxu0
        %v2481 = vpop.f32.mrb[0].mxu0
        %v2482 = vadd.f32 0.0, %v2481
        %v2483 = vpop.f32.mrb[0].mxu0
        %2484 = vmatprep.mubr.bf16.mxu0 %v2321
        %2485 = vmatmul.mubr.bf16.gmra.mrb[0].mxu0 %v2318
        %v2486 = vpop.f32.mrb[0].mxu0
        %v2487 = vadd.f32 0.0, %v2486
        %v2488 = vpop.f32.mrb[0].mxu0
        %v2489 = vpop.f32.mrb[0].mxu0
        %v2490 = vadd.f32 0.0, %v2489
        %v2491 = vpop.f32.mrb[0].mxu0
        %2492 = vdwg.mxu0
        %2493 = vmatprep.subr.bf16.mxu0 0
        %2494 = vmatpush1.bf16.msra.mxu0 %v2418
        %2495 = vmatprep.subr.bf16.mxu0 0
        %2496 = vmatpush1.bf16.msra.mxu0 %v2419
        %2497 = vmatprep.subr.bf16.mxu0 0
        %2498 = vmatpush1.bf16.msra.mxu0 0
        %2499 = vmatprep.subr.bf16.mxu0 0
        %2500 = vmatpush1.bf16.msra.mxu0 0
        %2501 = vmatprep.subr.bf16.mxu0 0
        %2502 = vmatpush1.bf16.msra.mxu0 0
        %2503 = vmatprep.subr.bf16.mxu0 0
        %2504 = vmatpush1.bf16.msra.mxu0 0
        %2505 = vmatprep.subr.bf16.mxu0 0
        %2506 = vmatpush1.bf16.msra.mxu0 0
        %2507 = vmatprep.subr.bf16.mxu0 0
        %2508 = vmatpush1.bf16.msra.mxu0 0
        %2509 = vmatprep.subr.bf16.mxu0 0
        %2510 = vmatpush1.bf16.msra.mxu0 0
        %2511 = vmatprep.subr.bf16.mxu0 0
        %2512 = vmatpush1.bf16.msra.mxu0 0
        %2513 = vmatprep.subr.bf16.mxu0 0
        %2514 = vmatpush1.bf16.msra.mxu0 0
        %2515 = vmatprep.subr.bf16.mxu0 0
        %2516 = vmatpush1.bf16.msra.mxu0 0
        %2517 = vmatprep.subr.bf16.mxu0 0
        %2518 = vmatpush1.bf16.msra.mxu0 0
        %2519 = vmatprep.subr.bf16.mxu0 0
        %2520 = vmatpush1.bf16.msra.mxu0 0
        %2521 = vmatprep.subr.bf16.mxu0 0
        %2522 = vmatpush1.bf16.msra.mxu0 0
        %2523 = vmatprep.subr.bf16.mxu0 0
        %2524 = vmatpush1.bf16.msra.mxu0 0
        %2525 = vmatprep.mubr.bf16.mxu0 0
        %2526 = vmatmul.mubr.bf16.gmra.mrb[0].mxu0 %v2439
        %v2527 = vpop.f32.mrb[0].mxu0
        %v2528 = vadd.f32 %v2479, %v2527
        %v2529 = vpop.f32.mrb[0].mxu0
        %v2530 = vpop.f32.mrb[0].mxu0
        %v2531 = vadd.f32 %v2482, %v2530
        %v2532 = vpop.f32.mrb[0].mxu0
        %2533 = vmatprep.mubr.bf16.mxu0 0
        %2534 = vmatmul.mubr.bf16.gmra.mrb[0].mxu0 %v2442
        %v2535 = vpop.f32.mrb[0].mxu0
        %v2536 = vadd.f32 %v2487, %v2535
        %v2537 = vpop.f32.mrb[0].mxu0
        %v2538 = vpop.f32.mrb[0].mxu0
        %v2539 = vadd.f32 %v2490, %v2538
        %v2540 = vpop.f32.mrb[0].mxu0
        %2541 = vdwg.mxu0
        %v2542 = vld [vmem:[#allocation4 + $0x30] sm:$0x1]
        %v2543 = vlaneseq
        %v2544 = vshrl.u32 %v2543, 7
        %v2545 = vsub.s32 0, %v2544
        %v2546 = vrot.slane %v2542, %v2545
        %v2547 = vmul.f32 %v2528, %v2546
        %v2548 = vmul.f32 %v2531, %v2546
        %v2549 = vmul.f32 %v2536, %v2546
        %v2550 = vmul.f32 %v2539, %v2546
        %v2551 = vld [vmem:[#allocation4 + $0x38] sm:$0x1]
        %v2552 = vlaneseq
        %v2553 = vshrl.u32 %v2552, 7
        %v2554 = vsub.s32 0, %v2553
        %v2555 = vrot.slane %v2551, %v2554
        %v2556 = vadd.f32 %v2547, %v2555
        %v2557 = vadd.f32 %v2548, %v2555
        %v2558 = vadd.f32 %v2549, %v2555
        %v2559 = vadd.f32 %v2550, %v2555
        %v2560 = vmax.f32 %v2556, 0.0
        %v2561 = vmax.f32 %v2557, 0.0
        %v2562 = vmax.f32 %v2558, 0.0
        %v2563 = vmax.f32 %v2559, 0.0
        %v2564 = vpack.c.bf16 %v2561, %v2560
        %v2565 = vpack.c.bf16 %v2563, %v2562
        %v2568 = vrot.slane %v2564, 4
        %v2569 = vrot.slane %v2565, 4
        %v2570 = vsel %vm237, %v2568, %v2569
        %v2574 = vsel %vm243, 0, %v2568
        %v2576 = vsel %vm250, %v2569, 0
        %v2577 = vmul.bf16 %v2574, %v310
        %v2578 = vmul.bf16 %v2570, %v312
        %v2579 = vmul.bf16 %v2574, %v379
        %v2580 = vmul.bf16 %v2570, %v388
        %v2581 = vmul.bf16 %v2574, %v448
        %v2582 = vmul.bf16 %v2570, %v450
        %v2583 = vmul.bf16 %v2574, %v517
        %v2584 = vmul.bf16 %v2570, %v526
        %v2585 = vmul.bf16 %v2574, %v593
        %v2586 = vmul.bf16 %v2570, %v602
        %v2587 = vmul.bf16 %v2576, %v601
        %v2588 = vmul.bf16 %v2574, %v664
        %v2589 = vmul.bf16 %v2570, %v666
        %v2590 = vmul.bf16 %v2576, %v665
        %v2591 = vmul.bf16 %v2574, %v735
        %v2592 = vmul.bf16 %v2570, %v744
        %v2593 = vmul.bf16 %v2576, %v743
        %v2594 = vmul.bf16 %v2574, %v806
        %v2595 = vmul.bf16 %v2570, %v808
        %v2596 = vmul.bf16 %v2576, %v807
        %v2598 = vshrl.u32 %v2579, 16
        %v2600 = vshll.u32 %v2579, 16
        %v2602 = vrot.slane %v2600, 1
        %v2603 = vor.u32 %v2598, %v2602
        %v2605 = vshll.u32 %v2580, 16
        %v2607 = vrot.slane %v2605, 1
        %v2608 = vsel %vm815, %v2603, %v2607
        %v2609 = vshrl.u32 %v2580, 16
        %v2611 = vor.u32 %v2609, %v2607
        %2612 = vrot.lane.b32.xlu0 %v2608, 32
        %v2613 = vpop.permute.xlu0 %2612
        %2614 = vrot.lane.b32.xlu0 %v2611, 32
        %v2615 = vpop.permute.xlu0 %2614
        %v2618 = vrot.slane %v2581, 1
        %v2619 = vrot.slane %v2582, 1
        %v2620 = vsel %vm805, %v2618, %v2619
        %2621 = vrot.lane.b32.xlu0 %v2620, 64
        %v2622 = vpop.permute.xlu0 %2621
        %2623 = vrot.lane.b32.xlu0 %v2619, 64
        %v2624 = vpop.permute.xlu0 %2623
        %v2626 = vshrl.u32 %v2583, 16
        %v2628 = vrot.slane %v2626, 2
        %v2629 = vshll.u32 %v2583, 16
        %v2631 = vrot.slane %v2629, 3
        %v2632 = vor.u32 %v2628, %v2631
        %v2634 = vshrl.u32 %v2584, 16
        %v2636 = vrot.slane %v2634, 2
        %v2637 = vshll.u32 %v2584, 16
        %v2639 = vrot.slane %v2637, 3
        %v2640 = vor.u32 %v2636, %v2639
        %v2641 = vsel %vm844, %v2632, %v2640
        %2642 = vrot.lane.b32.xlu0 %v2641, 96
        %v2643 = vpop.permute.xlu0 %2642
        %2644 = vrot.lane.b32.xlu0 %v2640, 96
        %v2645 = vpop.permute.xlu0 %2644
        %v2648 = vrot.slane %v2574, 3
        %v2649 = vrot.slane %v2570, 3
        %v2650 = vsel %vm868, %v2648, %v2649
        %v2651 = vrot.slane %v2576, 3
        %v2652 = vsel %vm868, %v2649, %v2651
        %v2654 = vshrl.u32 %v2585, 16
        %v2656 = vrot.slane %v2654, 3
        %v2657 = vshll.u32 %v2585, 16
        %v2659 = vrot.slane %v2657, 4
        %v2660 = vor.u32 %v2656, %v2659
        %v2662 = vshrl.u32 %v2586, 16
        %v2664 = vrot.slane %v2662, 3
        %v2665 = vshll.u32 %v2586, 16
        %v2667 = vrot.slane %v2665, 4
        %v2668 = vor.u32 %v2664, %v2667
        %v2669 = vsel %vm585, %v2660, %v2668
        %v2671 = vshrl.u32 %v2587, 16
        %v2673 = vrot.slane %v2671, 3
        %v2674 = vshll.u32 %v2587, 16
        %v2676 = vrot.slane %v2674, 4
        %v2677 = vor.u32 %v2673, %v2676
        %v2678 = vsel %vm585, %v2668, %v2677
        %2679 = vrot.lane.b32.xlu0 %v2669, 32
        %v2680 = vpop.permute.xlu0 %2679
        %2681 = vrot.lane.b32.xlu0 %v2678, 32
        %v2682 = vpop.permute.xlu0 %2681
        %v2686 = vrot.slane %v2588, 5
        %v2687 = vrot.slane %v2589, 5
        %v2688 = vsel %vm911, %v2686, %v2687
        %v2689 = vrot.slane %v2590, 5
        %v2690 = vsel %vm911, %v2687, %v2689
        %2691 = vrot.lane.b32.xlu0 %v2688, 64
        %v2692 = vpop.permute.xlu0 %2691
        %2693 = vrot.lane.b32.xlu0 %v2690, 64
        %v2694 = vpop.permute.xlu0 %2693
        %v2696 = vshrl.u32 %v2591, 16
        %v2698 = vrot.slane %v2696, 5
        %v2699 = vshll.u32 %v2591, 16
        %v2701 = vrot.slane %v2699, 6
        %v2702 = vor.u32 %v2698, %v2701
        %v2704 = vshrl.u32 %v2592, 16
        %v2706 = vrot.slane %v2704, 5
        %v2707 = vshll.u32 %v2592, 16
        %v2709 = vrot.slane %v2707, 6
        %v2710 = vor.u32 %v2706, %v2709
        %v2711 = vsel %vm921, %v2702, %v2710
        %v2713 = vshrl.u32 %v2593, 16
        %v2715 = vrot.slane %v2713, 5
        %v2716 = vshll.u32 %v2593, 16
        %v2718 = vrot.slane %v2716, 6
        %v2719 = vor.u32 %v2715, %v2718
        %v2720 = vsel %vm921, %v2710, %v2719
        %2721 = vrot.lane.b32.xlu0 %v2711, 96
        %v2722 = vpop.permute.xlu0 %2721
        %2723 = vrot.lane.b32.xlu0 %v2720, 96
        %v2724 = vpop.permute.xlu0 %2723
        %v2728 = vrot.slane %v2594, 6
        %v2729 = vrot.slane %v2595, 6
        %v2730 = vsel %vm447, %v2728, %v2729
        %v2731 = vrot.slane %v2596, 6
        %v2732 = vsel %vm447, %v2729, %v2731
        %v2735 = vsel %vm1274, %v2577, %v2613
        %v2738 = vsel %vm1274, %v2578, %v2615
        %v2740 = vsel %vm1281, %v2735, %v2622
        %v2742 = vsel %vm1281, %v2738, %v2624
        %v2744 = vsel %vm1286, %v2740, %v2643
        %v2746 = vsel %vm1286, %v2742, %v2645
        %v2749 = vsel %vm1274, %v2650, %v2680
        %v2752 = vsel %vm1274, %v2652, %v2682
        %v2754 = vsel %vm1281, %v2749, %v2692
        %v2756 = vsel %vm1281, %v2752, %v2694
        %v2758 = vsel %vm1286, %v2754, %v2722
        %v2760 = vsel %vm1286, %v2756, %v2724
        %v2761 = vld [vmem:[#allocation2 + $0x1c0] sm:$0xf]
        %v2762 = vld [vmem:[#allocation2 + $0x1c4] sm:$0xf]
        %v2763 = vld [vmem:[#allocation2 + $0x1c8] sm:$0xf]
        %v2764 = vld [vmem:[#allocation2 + $0x1cc] sm:$0xf]
        %v2765 = vld [vmem:[#allocation2 + $0x1d0] sm:$0xf]
        %v2766 = vld [vmem:[#allocation2 + $0x1d4] sm:$0xf]
        %v2767 = vld [vmem:[#allocation2 + $0x1d8] sm:$0xf]
        %v2768 = vld [vmem:[#allocation2 + $0x1dc] sm:$0xf]
        %v2769 = vld [vmem:[#allocation2 + $0x1e0] sm:$0xf]
        %v2770 = vld [vmem:[#allocation2 + $0x1e4] sm:$0xf]
        %v2771 = vld [vmem:[#allocation2 + $0x1e8] sm:$0xf]
        %v2772 = vld [vmem:[#allocation2 + $0x1ec] sm:$0xf]
        %v2773 = vld [vmem:[#allocation2 + $0x1f0] sm:$0xf]
        %v2774 = vld [vmem:[#allocation2 + $0x1f4] sm:$0xf]
        %v2775 = vld [vmem:[#allocation2 + $0x1f8] sm:$0xf]
        %v2776 = vld [vmem:[#allocation2 + $0x1fc] sm:$0xf]
        %v2777 = vld [vmem:[#allocation2 + $0x200] sm:$0xf]
        %v2778 = vld [vmem:[#allocation2 + $0x204] sm:$0xf]
        %v2779 = vld [vmem:[#allocation2 + $0x208] sm:$0xf]
        %v2780 = vld [vmem:[#allocation2 + $0x20c] sm:$0xf]
        %v2781 = vld [vmem:[#allocation2 + $0x210] sm:$0xf]
        %v2782 = vld [vmem:[#allocation2 + $0x214] sm:$0xf]
        %v2783 = vld [vmem:[#allocation2 + $0x218] sm:$0xf]
        %v2784 = vld [vmem:[#allocation2 + $0x21c] sm:$0xf]
        %v2785 = vld [vmem:[#allocation2 + $0x220] sm:$0xf]
        %v2786 = vld [vmem:[#allocation2 + $0x224] sm:$0xf]
        %v2787 = vld [vmem:[#allocation2 + $0x228] sm:$0xf]
        %v2788 = vld [vmem:[#allocation2 + $0x22c] sm:$0xf]
        %v2789 = vld [vmem:[#allocation2 + $0x230] sm:$0xf]
        %v2790 = vld [vmem:[#allocation2 + $0x234] sm:$0xf]
        %v2791 = vld [vmem:[#allocation2 + $0x238] sm:$0xf]
        %v2792 = vld [vmem:[#allocation2 + $0x23c] sm:$0xf]
        %v2793 = vld [vmem:[#allocation2 + $0x240] sm:$0xf]
        %v2794 = vld [vmem:[#allocation2 + $0x244] sm:$0xf]
        %v2795 = vld [vmem:[#allocation2 + $0x248] sm:$0xf]
        %v2796 = vld [vmem:[#allocation2 + $0x24c] sm:$0xf]
        %v2801 = vrot.slane %v2744, 1
        %v2802 = vrot.slane %v2746, 1
        %v2803 = vsel %vm805, %v2801, %v2802
        %v2804 = vrot.slane %v2758, 1
        %v2805 = vrot.slane %v2760, 1
        %v2806 = vsel %vm805, %v2804, %v2805
        %v2807 = vrot.slane %v2730, 1
        %v2808 = vrot.slane %v2732, 1
        %v2809 = vsel %vm805, %v2807, %v2808
        %v2850 = vunpack.c.l.b16 %v2761
        %v2851 = vunpack.c.l.b16 %v2762
        %v2852 = vunpack.c.l.b16 %v2763
        %v2853 = vunpack.c.l.b16 %v2764
        %v2854 = vunpack.c.l.b16 %v2765
        %v2855 = vunpack.c.l.b16 %v2766
        %v2856 = vunpack.c.l.b16 %v2767
        %v2857 = vunpack.c.l.b16 %v2768
        %v2858 = vunpack.c.l.b16 %v2769
        %v2859 = vunpack.c.l.b16 %v2770
        %v2860 = vunpack.c.l.b16 %v2771
        %v2861 = vunpack.c.l.b16 %v2772
        %v2862 = vunpack.c.l.b16 %v2773
        %v2863 = vunpack.c.l.b16 %v2774
        %v2864 = vunpack.c.l.b16 %v2775
        %v2865 = vunpack.c.l.b16 %v2776
        %v2866 = vunpack.c.l.b16 %v2777
        %v2867 = vunpack.c.l.b16 %v2778
        %v2868 = vunpack.c.l.b16 %v2779
        %v2869 = vunpack.c.l.b16 %v2780
        %v2870 = vunpack.c.l.b16 %v2781
        %v2871 = vunpack.c.l.b16 %v2782
        %v2872 = vunpack.c.l.b16 %v2783
        %v2873 = vunpack.c.l.b16 %v2784
        %v2874 = vunpack.c.l.b16 %v2785
        %v2875 = vunpack.c.l.b16 %v2786
        %v2876 = vunpack.c.l.b16 %v2787
        %v2877 = vunpack.c.l.b16 %v2788
        %v2878 = vunpack.c.l.b16 %v2789
        %v2879 = vunpack.c.l.b16 %v2790
        %v2880 = vunpack.c.l.b16 %v2791
        %v2881 = vunpack.c.l.b16 %v2792
        %v2882 = vunpack.c.l.b16 %v2793
        %v2883 = vunpack.c.l.b16 %v2794
        %v2884 = vunpack.c.l.b16 %v2795
        %v2885 = vunpack.c.l.b16 %v2796
        %v2886 = vpack.c.b16 %v2851, %v2850
        %v2887 = vpack.c.b16 %v2853, %v2852
        %v2888 = vpack.c.b16 %v2855, %v2854
        %v2889 = vpack.c.b16 %v2857, %v2856
        %v2890 = vpack.c.b16 %v2859, %v2858
        %v2891 = vpack.c.b16 %v2861, %v2860
        %v2892 = vpack.c.b16 %v2863, %v2862
        %v2893 = vpack.c.b16 %v2865, %v2864
        %v2894 = vpack.c.b16 %v2867, %v2866
        %v2895 = vpack.c.b16 %v2869, %v2868
        %v2896 = vpack.c.b16 %v2871, %v2870
        %v2897 = vpack.c.b16 %v2873, %v2872
        %v2898 = vpack.c.b16 %v2875, %v2874
        %v2899 = vpack.c.b16 %v2877, %v2876
        %v2900 = vpack.c.b16 %v2879, %v2878
        %v2901 = vpack.c.b16 %v2881, %v2880
        %v2902 = vpack.c.b16 %v2883, %v2882
        %v2903 = vpack.c.b16 %v2885, %v2884
        %v2923 = vsel %vm1274, %v2809, 0
        %v2926 = vsel %vm1274, %v2808, 0
        %2928 = vmatprep.subr.bf16.mxu0 0
        %2929 = vmatpush1.bf16.msra.mxu0 %v2886
        %2930 = vmatprep.subr.bf16.mxu0 0
        %2931 = vmatpush1.bf16.msra.mxu0 %v2887
        %2932 = vmatprep.subr.bf16.mxu0 0
        %2933 = vmatpush1.bf16.msra.mxu0 %v2888
        %2934 = vmatprep.subr.bf16.mxu0 0
        %2935 = vmatpush1.bf16.msra.mxu0 %v2889
        %2936 = vmatprep.subr.bf16.mxu0 0
        %2937 = vmatpush1.bf16.msra.mxu0 %v2890
        %2938 = vmatprep.subr.bf16.mxu0 0
        %2939 = vmatpush1.bf16.msra.mxu0 %v2891
        %2940 = vmatprep.subr.bf16.mxu0 0
        %2941 = vmatpush1.bf16.msra.mxu0 %v2892
        %2942 = vmatprep.subr.bf16.mxu0 0
        %2943 = vmatpush1.bf16.msra.mxu0 %v2893
        %2944 = vmatprep.subr.bf16.mxu0 0
        %2945 = vmatpush1.bf16.msra.mxu0 %v2894
        %2946 = vmatprep.subr.bf16.mxu0 0
        %2947 = vmatpush1.bf16.msra.mxu0 %v2895
        %2948 = vmatprep.subr.bf16.mxu0 0
        %2949 = vmatpush1.bf16.msra.mxu0 %v2896
        %2950 = vmatprep.subr.bf16.mxu0 0
        %2951 = vmatpush1.bf16.msra.mxu0 %v2897
        %2952 = vmatprep.subr.bf16.mxu0 0
        %2953 = vmatpush1.bf16.msra.mxu0 %v2898
        %2954 = vmatprep.subr.bf16.mxu0 0
        %2955 = vmatpush1.bf16.msra.mxu0 %v2899
        %2956 = vmatprep.subr.bf16.mxu0 0
        %2957 = vmatpush1.bf16.msra.mxu0 %v2900
        %2958 = vmatprep.subr.bf16.mxu0 0
        %2959 = vmatpush1.bf16.msra.mxu0 %v2901
        %2960 = vmatprep.mubr.bf16.mxu0 %v2806
        %2961 = vmatmul.mubr.bf16.gmra.mrb[0].mxu0 %v2803
        %v2962 = vpop.f32.mrb[0].mxu0
        %v2963 = vadd.f32 0.0, %v2962
        %v2964 = vpop.f32.mrb[0].mxu0
        %v2965 = vpop.f32.mrb[0].mxu0
        %v2966 = vadd.f32 0.0, %v2965
        %v2967 = vpop.f32.mrb[0].mxu0
        %2968 = vmatprep.mubr.bf16.mxu0 %v2805
        %2969 = vmatmul.mubr.bf16.gmra.mrb[0].mxu0 %v2802
        %v2970 = vpop.f32.mrb[0].mxu0
        %v2971 = vadd.f32 0.0, %v2970
        %v2972 = vpop.f32.mrb[0].mxu0
        %v2973 = vpop.f32.mrb[0].mxu0
        %v2974 = vadd.f32 0.0, %v2973
        %v2975 = vpop.f32.mrb[0].mxu0
        %2976 = vdwg.mxu0
        %2977 = vmatprep.subr.bf16.mxu0 0
        %2978 = vmatpush1.bf16.msra.mxu0 %v2902
        %2979 = vmatprep.subr.bf16.mxu0 0
        %2980 = vmatpush1.bf16.msra.mxu0 %v2903
        %2981 = vmatprep.subr.bf16.mxu0 0
        %2982 = vmatpush1.bf16.msra.mxu0 0
        %2983 = vmatprep.subr.bf16.mxu0 0
        %2984 = vmatpush1.bf16.msra.mxu0 0
        %2985 = vmatprep.subr.bf16.mxu0 0
        %2986 = vmatpush1.bf16.msra.mxu0 0
        %2987 = vmatprep.subr.bf16.mxu0 0
        %2988 = vmatpush1.bf16.msra.mxu0 0
        %2989 = vmatprep.subr.bf16.mxu0 0
        %2990 = vmatpush1.bf16.msra.mxu0 0
        %2991 = vmatprep.subr.bf16.mxu0 0
        %2992 = vmatpush1.bf16.msra.mxu0 0
        %2993 = vmatprep.subr.bf16.mxu0 0
        %2994 = vmatpush1.bf16.msra.mxu0 0
        %2995 = vmatprep.subr.bf16.mxu0 0
        %2996 = vmatpush1.bf16.msra.mxu0 0
        %2997 = vmatprep.subr.bf16.mxu0 0
        %2998 = vmatpush1.bf16.msra.mxu0 0
        %2999 = vmatprep.subr.bf16.mxu0 0
        %3000 = vmatpush1.bf16.msra.mxu0 0
        %3001 = vmatprep.subr.bf16.mxu0 0
        %3002 = vmatpush1.bf16.msra.mxu0 0
        %3003 = vmatprep.subr.bf16.mxu0 0
        %3004 = vmatpush1.bf16.msra.mxu0 0
        %3005 = vmatprep.subr.bf16.mxu0 0
        %3006 = vmatpush1.bf16.msra.mxu0 0
        %3007 = vmatprep.subr.bf16.mxu0 0
        %3008 = vmatpush1.bf16.msra.mxu0 0
        %3009 = vmatprep.mubr.bf16.mxu0 0
        %3010 = vmatmul.mubr.bf16.gmra.mrb[0].mxu0 %v2923
        %v3011 = vpop.f32.mrb[0].mxu0
        %v3012 = vadd.f32 %v2963, %v3011
        %v3013 = vpop.f32.mrb[0].mxu0
        %v3014 = vpop.f32.mrb[0].mxu0
        %v3015 = vadd.f32 %v2966, %v3014
        %v3016 = vpop.f32.mrb[0].mxu0
        %3017 = vmatprep.mubr.bf16.mxu0 0
        %3018 = vmatmul.mubr.bf16.gmra.mrb[0].mxu0 %v2926
        %v3019 = vpop.f32.mrb[0].mxu0
        %v3020 = vadd.f32 %v2971, %v3019
        %v3021 = vpop.f32.mrb[0].mxu0
        %v3022 = vpop.f32.mrb[0].mxu0
        %v3023 = vadd.f32 %v2974, %v3022
        %v3024 = vpop.f32.mrb[0].mxu0
        %3025 = vdwg.mxu0
        %v3026 = vld [vmem:[#allocation4 + $0x40] sm:$0x1]
        %v3027 = vlaneseq
        %v3028 = vshrl.u32 %v3027, 7
        %v3029 = vsub.s32 0, %v3028
        %v3030 = vrot.slane %v3026, %v3029
        %v3031 = vmul.f32 %v3012, %v3030
        %v3032 = vmul.f32 %v3015, %v3030
        %v3033 = vmul.f32 %v3020, %v3030
        %v3034 = vmul.f32 %v3023, %v3030
        %v3035 = vld [vmem:[#allocation4 + $0x48] sm:$0x1]
        %v3036 = vlaneseq
        %v3037 = vshrl.u32 %v3036, 7
        %v3038 = vsub.s32 0, %v3037
        %v3039 = vrot.slane %v3035, %v3038
        %v3040 = vadd.f32 %v3031, %v3039
        %v3041 = vadd.f32 %v3032, %v3039
        %v3042 = vadd.f32 %v3033, %v3039
        %v3043 = vadd.f32 %v3034, %v3039
        %v3044 = vadd.f32 %v3040, %v2076
        %v3045 = vadd.f32 %v3041, %v2077
        %v3046 = vadd.f32 %v3042, %v2078
        %v3047 = vadd.f32 %v3043, %v2079
        %v3048 = vmax.f32 %v3044, 0.0
        %v3049 = vmax.f32 %v3045, 0.0
        %v3050 = vmax.f32 %v3046, 0.0
        %v3051 = vmax.f32 %v3047, 0.0
        %v3052 = vpack.c.bf16 %v3049, %v3048
        %v3053 = vpack.c.bf16 %v3051, %v3050
        %v3054 = vld [vmem:[#allocation2 + $0x250] sm:$0xf]
        %v3055 = vld [vmem:[#allocation2 + $0x254] sm:$0xf]
        %v3056 = vld [vmem:[#allocation2 + $0x258] sm:$0xf]
        %v3057 = vld [vmem:[#allocation2 + $0x25c] sm:$0xf]
        %v3062 = vunpack.c.l.b16 %v3054
        %v3063 = vunpack.c.l.b16 %v3055
        %v3064 = vunpack.c.l.b16 %v3056
        %v3065 = vunpack.c.l.b16 %v3057
        %v3066 = vpack.c.b16 %v3063, %v3062
        %v3067 = vpack.c.b16 %v3065, %v3064
        %v3071 = vsel %vm1274, %v3052, 0
        %v3074 = vsel %vm1274, %v3053, 0
        %3076 = vmatprep.subr.bf16.mxu0 0
        %3077 = vmatpush1.bf16.msra.mxu0 %v3066
        %3078 = vmatprep.subr.bf16.mxu0 0
        %3079 = vmatpush1.bf16.msra.mxu0 %v3067
        %3080 = vmatprep.subr.bf16.mxu0 0
        %3081 = vmatpush1.bf16.msra.mxu0 0
        %3082 = vmatprep.subr.bf16.mxu0 0
        %3083 = vmatpush1.bf16.msra.mxu0 0
        %3084 = vmatprep.subr.bf16.mxu0 0
        %3085 = vmatpush1.bf16.msra.mxu0 0
        %3086 = vmatprep.subr.bf16.mxu0 0
        %3087 = vmatpush1.bf16.msra.mxu0 0
        %3088 = vmatprep.subr.bf16.mxu0 0
        %3089 = vmatpush1.bf16.msra.mxu0 0
        %3090 = vmatprep.subr.bf16.mxu0 0
        %3091 = vmatpush1.bf16.msra.mxu0 0
        %3092 = vmatprep.subr.bf16.mxu0 0
        %3093 = vmatpush1.bf16.msra.mxu0 0
        %3094 = vmatprep.subr.bf16.mxu0 0
        %3095 = vmatpush1.bf16.msra.mxu0 0
        %3096 = vmatprep.subr.bf16.mxu0 0
        %3097 = vmatpush1.bf16.msra.mxu0 0
        %3098 = vmatprep.subr.bf16.mxu0 0
        %3099 = vmatpush1.bf16.msra.mxu0 0
        %3100 = vmatprep.subr.bf16.mxu0 0
        %3101 = vmatpush1.bf16.msra.mxu0 0
        %3102 = vmatprep.subr.bf16.mxu0 0
        %3103 = vmatpush1.bf16.msra.mxu0 0
        %3104 = vmatprep.subr.bf16.mxu0 0
        %3105 = vmatpush1.bf16.msra.mxu0 0
        %3106 = vmatprep.subr.bf16.mxu0 0
        %3107 = vmatpush1.bf16.msra.mxu0 0
        %3108 = vmatprep.mubr.bf16.mxu0 0
        %3109 = vmatmul.mubr.bf16.gmra.mrb[0].mxu0 %v3071
        %v3110 = vpop.f32.mrb[0].mxu0
        %v3111 = vadd.f32 0.0, %v3110
        %v3112 = vpop.f32.mrb[0].mxu0
        %v3113 = vpop.f32.mrb[0].mxu0
        %v3114 = vadd.f32 0.0, %v3113
        %v3115 = vpop.f32.mrb[0].mxu0
        %3116 = vmatprep.mubr.bf16.mxu0 0
        %3117 = vmatmul.mubr.bf16.gmra.mrb[0].mxu0 %v3074
        %v3118 = vpop.f32.mrb[0].mxu0
        %v3119 = vadd.f32 0.0, %v3118
        %v3120 = vpop.f32.mrb[0].mxu0
        %v3121 = vpop.f32.mrb[0].mxu0
        %v3122 = vadd.f32 0.0, %v3121
        %v3123 = vpop.f32.mrb[0].mxu0
        %3124 = vdwg.mxu0
        %v3125 = vld [vmem:[#allocation4 + $0x50] sm:$0x1]
        %v3126 = vlaneseq
        %v3127 = vshrl.u32 %v3126, 7
        %v3128 = vsub.s32 0, %v3127
        %v3129 = vrot.slane %v3125, %v3128
        %v3130 = vmul.f32 %v3111, %v3129
        %v3131 = vmul.f32 %v3114, %v3129
        %v3132 = vmul.f32 %v3119, %v3129
        %v3133 = vmul.f32 %v3122, %v3129
        %v3134 = vld [vmem:[#allocation4 + $0x58] sm:$0x1]
        %v3135 = vlaneseq
        %v3136 = vshrl.u32 %v3135, 7
        %v3137 = vsub.s32 0, %v3136
        %v3138 = vrot.slane %v3134, %v3137
        %v3139 = vadd.f32 %v3130, %v3138
        %v3140 = vadd.f32 %v3131, %v3138
        %v3141 = vadd.f32 %v3132, %v3138
        %v3142 = vadd.f32 %v3133, %v3138
        %v3143 = vmax.f32 %v3139, 0.0
        %v3144 = vmax.f32 %v3140, 0.0
        %v3145 = vmax.f32 %v3141, 0.0
        %v3146 = vmax.f32 %v3142, 0.0
        %v3147 = vld [vmem:[#allocation4 + $0x78] sm:$0xff]
        %v3148 = vld [vmem:[#allocation4 + $0x80] sm:$0xff]
        %v3149 = vld [vmem:[#allocation4 + $0x88] sm:$0xff]
        %v3150 = vld [vmem:[#allocation4 + $0x90] sm:$0x1]
        %3152 = vset.pattern.permute.xlu0 0
        %3153 = vperm.xlu0 %3152, %v3143
        %v3154 = vpop.permute.xlu0 %3153
        %3157 = vset.pattern.permute.xlu0 0
        %3158 = vperm.xlu0 %3157, %v3144
        %v3159 = vpop.permute.xlu0 %3158
        %3162 = vset.pattern.permute.xlu0 0
        %3163 = vperm.xlu0 %3162, %v3145
        %v3164 = vpop.permute.xlu0 %3163
        %3167 = vset.pattern.permute.xlu0 0
        %3168 = vperm.xlu0 %3167, %v3146
        %v3169 = vpop.permute.xlu0 %3168
        %v3171 = vmul.f32 %v3154, %v3147
        %v3172 = vmul.f32 %v3159, %v3148
        %v3173 = vmul.f32 %v3164, %v3149
        %v3174 = vmul.f32 %v3169, %v3150
        %v3175 = vld [vmem:[#allocation4 + $0x98] sm:$0xff]
        %v3176 = vld [vmem:[#allocation4 + $0xa0] sm:$0xff]
        %v3177 = vld [vmem:[#allocation4 + $0xa8] sm:$0xff]
        %v3178 = vld [vmem:[#allocation4 + $0xb0] sm:$0x1]
        %3179 = vset.pattern.permute.xlu0 1
        %3180 = vperm.xlu0 %3179, %v3143
        %v3181 = vpop.permute.xlu0 %3180
        %3183 = vset.pattern.permute.xlu0 1
        %3184 = vperm.xlu0 %3183, %v3144
        %v3185 = vpop.permute.xlu0 %3184
        %3187 = vset.pattern.permute.xlu0 1
        %3188 = vperm.xlu0 %3187, %v3145
        %v3189 = vpop.permute.xlu0 %3188
        %3191 = vset.pattern.permute.xlu0 1
        %3192 = vperm.xlu0 %3191, %v3146
        %v3193 = vpop.permute.xlu0 %3192
        %v3195 = vmul.f32 %v3181, %v3175
        %v3196 = vmul.f32 %v3185, %v3176
        %v3197 = vmul.f32 %v3189, %v3177
        %v3198 = vmul.f32 %v3193, %v3178
        %v3199 = vadd.f32 %v3171, %v3195
        %v3200 = vadd.f32 %v3172, %v3196
        %v3201 = vadd.f32 %v3173, %v3197
        %v3202 = vadd.f32 %v3174, %v3198
        %vm3203 = vcmask 203776
        %v3204 = vsel %vm3203, %v3199, 0.0
        %v3205 = vsel %vm3203, %v3200, 0.0
        %v3206 = vadd.f32 %v3204, %v3205
        %v3207 = vsel %vm3203, %v3201, 0.0
        %v3208 = vadd.f32 %v3206, %v3207
        %vm3209 = vcmask 196608
        %v3210 = vsel %vm3209, %v3202, 0.0
        %v3211 = vadd.f32 %v3208, %v3210
        %v3212 = vrot.slane %v3211, 4
        %v3213 = vadd.f32 %v3211, %v3212
        %v3214 = vrot.slane %v3213, 2
        %v3215 = vadd.f32 %v3213, %v3214
        %v3216 = vrot.slane %v3215, 1
        %v3217 = vadd.f32 %v3215, %v3216
        %v3218 = vld [vmem:[#allocation4 + $0x60] sm:$0x1]
        %v3219 = vadd.f32 %v3217, %v3218
        %v3220 = vld [vmem:[#allocation4 + $0xb8] sm:$0xff]
        %v3221 = vld [vmem:[#allocation4 + $0xc0] sm:$0xff]
        %v3222 = vld [vmem:[#allocation4 + $0xc8] sm:$0xff]
        %v3223 = vld [vmem:[#allocation4 + $0xd0] sm:$0x1]
        %3224 = vset.pattern.permute.xlu0 2
        %3225 = vperm.xlu0 %3224, %v3143
        %v3226 = vpop.permute.xlu0 %3225
        %3228 = vset.pattern.permute.xlu0 2
        %3229 = vperm.xlu0 %3228, %v3144
        %v3230 = vpop.permute.xlu0 %3229
        %3232 = vset.pattern.permute.xlu0 2
        %3233 = vperm.xlu0 %3232, %v3145
        %v3234 = vpop.permute.xlu0 %3233
        %3236 = vset.pattern.permute.xlu0 2
        %3237 = vperm.xlu0 %3236, %v3146
        %v3238 = vpop.permute.xlu0 %3237
        %v3240 = vmul.f32 %v3226, %v3220
        %v3241 = vmul.f32 %v3230, %v3221
        %v3242 = vmul.f32 %v3234, %v3222
        %v3243 = vmul.f32 %v3238, %v3223
        %v3244 = vadd.f32 %v3240, %v3241
        %v3245 = vadd.f32 %v3244, %v3242
        %v3246 = vsel %vm1030, %v3243, 0.0
        %v3247 = vadd.f32 %v3245, %v3246
        %v3248 = vrot.slane %v3247, 4
        %v3249 = vadd.f32 %v3247, %v3248
        %v3250 = vrot.slane %v3249, 2
        %v3251 = vadd.f32 %v3249, %v3250
        %v3252 = vrot.slane %v3251, 1
        %v3253 = vadd.f32 %v3251, %v3252
        %v3254 = vld [vmem:[#allocation4 + $0x68] sm:$0x1]
        %v3255 = vadd.f32 %v3253, %v3254
        %v3256 = vmax.f32 %v3255, 0.0
        %v3257 = vld [vmem:[#allocation4 + $0xd8] sm:$0x1]
        %v3258 = vmul.f32 %v3256, %v3257
        %v3259 = vsel %vm1030, %v3258, 0.0
        %3260 = vadd.xlane.f32.xlu0 %v3259
        %v3261 = vpop.xlane.xlu0 %3260
        %v3262 = vld [vmem:[#allocation4 + $0x70] sm:$0x1]
        %v3263 = vadd.f32 %v3261, %v3262
        %v3264 = vtanh.pop %v3263
        %3266 = vrot.lane.b32.xlu0 %v3264, 127
        %v3267 = vpop.permute.xlu0 %3266
        %v3269 = vsel %vm3203, %v3219, 0.0
        %vm3270 = vcmask 1039360
        %v3271 = vsel %vm3270, %v3269, %v3267
        %3272 = vst [vmem:[%s223] sm:$0x1] %v3271
        %p3273 = scmp.lt.s32.totalorder %s17, 1
        %s3274 = scalar_select %p3273, %s17, 1
        %s3275 = scalar_lea.vmem %s4, %s3274
        // Predicated region
        $region45: #{forward.1} parent=35 // pred_check
          %p3276 = pneg %p124
        $region46: #{forward.1} parent=35 // pred_check_branch
          %3278 = sbr.rel (%p3276) target = $region48
        $region47: #{forward.1} parent=35 // pred_region
          _
        $region48: #{forward.1} parent=35 // pred_fallthru
          _
      $region36: #{forward.1} parent=5 // pred_fallthru
        _
      %p3279 = scmp.le.s32.totalorder 2, %s12
      // Predicated region
      $region49: #{forward.1} parent=5 // pred_check
        %p3280 = pneg %p3279
      $region50: #{forward.1} parent=5 // pred_check_branch
        %3282 = sbr.rel (%p3280) target = $region52
      $region51: #{forward.1} parent=5 // pred_region
        %s3283 = ssub.s32 %s12, 2
        // Predicated region
        $region53: #{forward.1} parent=51 // pred_check
          %p3284 = pneg %p130
        $region54: #{forward.1} parent=51 // pred_check_branch
          %3286 = sbr.rel (%p3284) target = $region56
        $region55: #{forward.1} parent=51 // pred_region
          %p3287 = scmp.lt.s32.totalorder %s18, 1
          %s3288 = scalar_select %p3287, %s18, 1
          %s3289 = scalar_lea.vmem %s4, %s3288
        $region56: #{forward.1} parent=51 // pred_fallthru
          _
      $region52: #{forward.1} parent=5 // pred_fallthru
        _
    $region6: #{forward.1} parent=1 // loop_footer
      %s16 = sadd.s32 1, %s12
    $region7: #{forward.1} parent=1 // loop_footer_branch
      %11 = sbr.rel target = $region3
    $region8: #{forward.1} parent=1 // loop_exit
      _
    %3290 = vsyncpa [#allocation3], 1
    %s3291 = scalar_lea.sflag [#allocation3], 1
    %3292 = vsyncpa %s3291, 1
    %3293 = vsyncpa [#allocation5], 1

</llo_original>
